<compile_context>
chip_gen: v7x
topology: tpu7x:2x2x1
jax: 0.10.0
libtpu: 0.0.40
codegen_flags: <defaults>
</compile_context>

<pallas_src>
import functools

import jax
import jax.numpy as jnp
from jax import lax
from jax.experimental import pallas as pl
from jax.experimental.pallas import tpu as pltpu

# ---- model hyperparameters (match the PyTorch module) ----
D_MODEL = 32
N_HEAD = 4            # numerically irrelevant for seq_len == 1
NUM_LAYERS = 2
NUM_EXPERTS = 4
DIM_FF = 2048         # nn.TransformerEncoderLayer default dim_feedforward
NUM_USERS = 50
NUM_ITEMS = 60
LN_EPS = 1e-5

VOCAB_PAD = 128       # merged (user + item) embedding rows padded to one full lane width
OUT_PAD = 128         # lane-dense output slab width; wrapper slices column 0
MAX_ROW_TILE = 256    # rows per grid step (one MXU pass on v6e/v7x, two on v5e)

# row indices inside the packed per-layer small-f32 slab (shape [L+1, SMALL_ROWS, D_MODEL])
ROW_B_ATTN = 32       # rows 0..31 hold the folded [D,D] attention matrix (or the MoE weights)
ROW_LN1G = 33
ROW_LN1B = 34
ROW_B2 = 35
ROW_LN2G = 36
ROW_LN2B = 37
SMALL_ROWS = 40       # padded to a multiple of 8 sublanes


def _layernorm(h, gamma, beta):
    mu = jnp.mean(h, axis=-1, keepdims=True)
    var = jnp.mean((h - mu) ** 2, axis=-1, keepdims=True)
    return (h - mu) * lax.rsqrt(var + LN_EPS) * gamma + beta


# ---------------- single fused Pallas kernel ----------------

def fused_forward_kernel(ids_ref, table_ref, w1_ref, w2_ref, b1_ref, small_ref, out_ref):
    rows = ids_ref.shape[0]

    # ---- merged user+item embedding gather: one two-hot [rows,128] @ table [128,32] ----
    # (table is pre-multiplied by layer-0's folded attention matrix I + Wv0@Wo0)
    lane = lax.broadcasted_iota(jnp.int32, (rows, VOCAB_PAD), 1)
    two_hot = jnp.logical_or(ids_ref[:, 0:1] == lane,
                             ids_ref[:, 1:2] == lane).astype(jnp.float32)
    x = jnp.dot(two_hot, table_ref[...], preferred_element_type=jnp.float32)
    x = x + small_ref[0, ROW_B_ATTN:ROW_B_ATTN + 1, :]       # layer-0 folded attention bias

    # ---- transformer encoder layers (post-norm, relu FF, dropout = identity) ----
    for l in range(NUM_LAYERS):
        if l > 0:
            # degenerate single-token attention + residual, folded: x @ (I + Wv@Wo) + b
            x = (jnp.dot(x, small_ref[l, 0:D_MODEL, :],
                         preferred_element_type=jnp.float32)
                 + small_ref[l, ROW_B_ATTN:ROW_B_ATTN + 1, :])
        h = _layernorm(x,
                       small_ref[l, ROW_LN1G:ROW_LN1G + 1, :],
                       small_ref[l, ROW_LN1B:ROW_LN1B + 1, :])
        # feed-forward: bf16 weights on the MXU, f32 accumulation & elementwise (v5e-safe)
        # TODO(synk): optional v6e/v7x-only bf16 [rows,2048] intermediate not applied (keeps
        # one portable kernel; v5e has no bf16 VPU so it would gain nothing there).
        ff = jnp.dot(h.astype(jnp.bfloat16), w1_ref[l, :, :],
                     preferred_element_type=jnp.float32) + b1_ref[l:l + 1, :]
        ff = jnp.maximum(ff, 0.0)
        ff = (jnp.dot(ff.astype(jnp.bfloat16), w2_ref[l, :, :],
                      preferred_element_type=jnp.float32)
              + small_ref[l, ROW_B2:ROW_B2 + 1, :])
        x = _layernorm(h + ff,
                       small_ref[l, ROW_LN2G:ROW_LN2G + 1, :],
                       small_ref[l, ROW_LN2B:ROW_LN2B + 1, :])

    # ---- MoE head: gate + experts in one padded [D,32] matmul, softmax micro-folded ----
    ge = (jnp.dot(x, small_ref[NUM_LAYERS, 0:D_MODEL, :],
                  preferred_element_type=jnp.float32)
          + small_ref[NUM_LAYERS, ROW_B_ATTN:ROW_B_ATTN + 1, :])
    gate = ge[:, :NUM_EXPERTS]                       # gate logits   [rows, E]
    expert = ge[:, NUM_EXPERTS:2 * NUM_EXPERTS]      # expert scores [rows, E]
    e = jnp.exp(gate - jnp.max(gate, axis=-1, keepdims=True))
    num = jnp.sum(e * expert, axis=-1, keepdims=True)
    den = jnp.sum(e, axis=-1, keepdims=True)
    mixed = num * pl.reciprocal(den, approx=True)    # == sum(softmax(gate) * expert)
    score = jax.nn.sigmoid(mixed)
    out_ref[...] = jnp.broadcast_to(score, (rows, OUT_PAD))   # lane-dense unmasked store


# ---------------- params (packed for the kernel + raw for the reference) ----------------

def make_params(key):
    kit = iter(jax.random.split(key, 64))

    def rnd(shape, scale=0.05):
        return (scale * jax.random.normal(next(kit), shape)).astype(jnp.float32)

    eye = jnp.eye(D_MODEL, dtype=jnp.float32)
    raw_layers, w_attn, b_attn = [], [], []
    w1s, b1s, w2s, b2s = [], [], [], []
    for _ in range(NUM_LAYERS):
        wv, bv = rnd((D_MODEL, D_MODEL)), rnd((1, D_MODEL))
        wo, bo = rnd((D_MODEL, D_MODEL)), rnd((1, D_MODEL))
        w1, b1 = rnd((D_MODEL, DIM_FF)), rnd((1, DIM_FF))
        w2, b2 = rnd((DIM_FF, D_MODEL)), rnd((1, D_MODEL))
        raw_layers.append(dict(wv=wv, bv=bv, wo=wo, bo=bo, w1=w1, b1=b1, w2=w2, b2=b2))
        w_attn.append(eye + wv @ wo)        # seq-len-1 attention + residual folded
        b_attn.append(bv @ wo + bo)
        w1s.append(w1); b1s.append(b1); w2s.append(w2); b2s.append(b2)

    user_emb = rnd((NUM_USERS, D_MODEL), 0.1)
    item_emb = rnd((NUM_ITEMS, D_MODEL), 0.1)
    table = jnp.zeros((VOCAB_PAD, D_MODEL), jnp.float32)
    table = table.at[:NUM_USERS].set(user_emb)
    table = table.at[NUM_USERS:NUM_USERS + NUM_ITEMS].set(item_emb)
    table = table @ w_attn[0]               # fold layer-0's attention matmul into the gather

    gate_w, gate_b = rnd((D_MODEL, NUM_EXPERTS)), rnd((1, NUM_EXPERTS))
    exp_w, exp_b = rnd((D_MODEL, NUM_EXPERTS)), rnd((1, NUM_EXPERTS))

    ones = jnp.ones((D_MODEL,), jnp.float32)
    small = jnp.zeros((NUM_LAYERS + 1, SMALL_ROWS, D_MODEL), jnp.float32)
    for l in range(NUM_LAYERS):
        small = small.at[l, 0:D_MODEL, :].set(w_attn[l])
        small = small.at[l, ROW_B_ATTN, :].set(b_attn[l][0])
        small = small.at[l, ROW_LN1G, :].set(ones)
        small = small.at[l, ROW_B2, :].set(b2s[l][0])
        small = small.at[l, ROW_LN2G, :].set(ones)
        # LN betas (rows ROW_LN1B / ROW_LN2B) stay zero — fresh nn.LayerNorm init
    small = small.at[NUM_LAYERS, 0:D_MODEL, 0:NUM_EXPERTS].set(gate_w)
    small = small.at[NUM_LAYERS, 0:D_MODEL, NUM_EXPERTS:2 * NUM_EXPERTS].set(exp_w)
    small = small.at[NUM_LAYERS, ROW_B_ATTN, 0:NUM_EXPERTS].set(gate_b[0])
    small = small.at[NUM_LAYERS, ROW_B_ATTN, NUM_EXPERTS:2 * NUM_EXPERTS].set(exp_b[0])

    packed = {
        "table": table,                                     # [128, 32]     f32
        "w1": jnp.stack(w1s).astype(jnp.bfloat16),          # [L, 32, 2048] bf16
        "w2": jnp.stack(w2s).astype(jnp.bfloat16),          # [L, 2048, 32] bf16
        "b1": jnp.concatenate(b1s, axis=0),                 # [L, 2048]     f32
        "small": small,                                     # [L+1, 40, 32] f32
    }
    raw = dict(user_emb=user_emb, item_emb=item_emb, layers=raw_layers,
               gate_w=gate_w, gate_b=gate_b, exp_w=exp_w, exp_b=exp_b)
    return packed, raw


# ---------------- wrapper ----------------

def _round_up(x, m):
    return (x + m - 1) // m * m


@jax.jit
def forward(user_ids, item_ids, params):
    batch = user_ids.shape[0]
    b_pad = _round_up(max(batch, 8), 8)
    if b_pad > MAX_ROW_TILE:
        row_tile = MAX_ROW_TILE
        b_pad = _round_up(b_pad, row_tile)
    else:
        row_tile = b_pad

    # note: out-of-range ids would yield a zero embedding row (not a PyTorch-style error).
    ids = jnp.concatenate(
        [user_ids.reshape(batch, 1).astype(jnp.int32),
         item_ids.reshape(batch, 1).astype(jnp.int32) + NUM_USERS], axis=1)
    ids = jnp.pad(ids, ((0, b_pad - batch), (0, 0)))

    out = pl.pallas_call(
        fused_forward_kernel,
        out_shape=jax.ShapeDtypeStruct((b_pad, OUT_PAD), jnp.float32),
        grid=(b_pad // row_tile,),
        in_specs=[
            pl.BlockSpec((row_tile, 2), lambda i: (i, 0)),
            pl.BlockSpec((VOCAB_PAD, D_MODEL), lambda i: (0, 0)),
            pl.BlockSpec((NUM_LAYERS, D_MODEL, DIM_FF), lambda i: (0, 0, 0)),
            pl.BlockSpec((NUM_LAYERS, DIM_FF, D_MODEL), lambda i: (0, 0, 0)),
            pl.BlockSpec((NUM_LAYERS, DIM_FF), lambda i: (0, 0)),
            pl.BlockSpec((NUM_LAYERS + 1, SMALL_ROWS, D_MODEL), lambda i: (0, 0, 0)),
        ],
        out_specs=pl.BlockSpec((row_tile, OUT_PAD), lambda i: (i, 0)),
        compiler_params=pltpu.CompilerParams(
            dimension_semantics=("parallel",)),   # v7x: row tiles split across both TCs
    )(ids, params["table"], params["w1"], params["w2"], params["b1"], params["small"])
    return out[:batch, 0]        # .squeeze() of the original module -> [batch]


# ---------------- pure-JAX reference (mirrors the PyTorch module) ----------------

def reference_forward(user_ids, item_ids, raw):
    mm = functools.partial(jnp.dot, precision=lax.Precision.HIGHEST)

    def ln(h):  # LayerNorm with fresh (gamma=1, beta=0) affine params
        mu = jnp.mean(h, axis=-1, keepdims=True)
        var = jnp.mean((h - mu) ** 2, axis=-1, keepdims=True)
        return (h - mu) * lax.rsqrt(var + LN_EPS)

    x = raw["user_emb"][user_ids] + raw["item_emb"][item_ids]
    for p in raw["layers"]:
        attn = mm(mm(x, p["wv"]) + p["bv"], p["wo"]) + p["bo"]   # out_proj(v_proj(x)), seq=1
        h = ln(x + attn)
        ff = mm(jnp.maximum(mm(h, p["w1"]) + p["b1"], 0.0), p["w2"]) + p["b2"]
        x = ln(h + ff)
    gate = jax.nn.softmax(mm(x, raw["gate_w"]) + raw["gate_b"], axis=-1)
    expert = mm(x, raw["exp_w"]) + raw["exp_b"]
    return jax.nn.sigmoid(jnp.sum(gate * expert, axis=-1))


if __name__ == "__main__":
    key = jax.random.PRNGKey(0)
    k_param, k_u, k_i = jax.random.split(key, 3)
    params, raw = make_params(k_param)

    batch = 64   # batch is now a parameter; larger batches tile through the same kernel
    user_ids = jax.random.randint(k_u, (batch,), 0, NUM_USERS)
    item_ids = jax.random.randint(k_i, (batch,), 0, NUM_ITEMS)

    scores = forward(user_ids, item_ids, params)
    jax.block_until_ready(scores)

    ref = reference_forward(user_ids, item_ids, raw)
    assert scores.shape == (batch,)
    assert bool(jnp.all(jnp.isfinite(scores)))
    err = float(jnp.max(jnp.abs(scores - ref)))
    assert err < 2e-2, f"max abs error vs reference: {err}"
    print("KERNEL_OK")
</pallas_src>

<mosaic_0001>
module attributes {stable_mosaic.version = 11 : i64} {
  func.func @fused_forward_kernel(%arg0: i32, %arg1: memref<64x2xi32, #tpu.memory_space<vmem>>, %arg2: memref<128x32xf32, #tpu.memory_space<vmem>>, %arg3: memref<2x32x2048xbf16, #tpu.memory_space<vmem>>, %arg4: memref<2x2048x32xbf16, #tpu.memory_space<vmem>>, %arg5: memref<2x2048xf32, #tpu.memory_space<vmem>>, %arg6: memref<3x40x32xf32, #tpu.memory_space<vmem>>, %arg7: memref<64x128xf32, #tpu.memory_space<vmem>>) attributes {dimension_semantics = [#tpu.dimension_semantics<parallel>], iteration_bounds = array<i64: 1>, scalar_prefetch = 0 : i64, scratch_operands = 0 : i64, tpu.core_type = #tpu.core_type<tc>, window_params = [{transform_indices = @transform_0, window_bounds = array<i64: 64, 2>}, {pipeline_mode = #tpu.pipeline_mode<synchronous>, transform_indices = @transform_1, window_bounds = array<i64: 128, 32>}, {pipeline_mode = #tpu.pipeline_mode<synchronous>, transform_indices = @transform_2, window_bounds = array<i64: 2, 32, 2048>}, {pipeline_mode = #tpu.pipeline_mode<synchronous>, transform_indices = @transform_3, window_bounds = array<i64: 2, 2048, 32>}, {pipeline_mode = #tpu.pipeline_mode<synchronous>, transform_indices = @transform_4, window_bounds = array<i64: 2, 2048>}, {pipeline_mode = #tpu.pipeline_mode<synchronous>, transform_indices = @transform_5, window_bounds = array<i64: 3, 40, 32>}, {transform_indices = @transform_6, window_bounds = array<i64: 64, 128>}]} {
    %0 = tpu.iota {dimensions = array<i32: 1>} : vector<64x128xi32>
    %c0 = arith.constant 0 : index
    %c0_0 = arith.constant 0 : index
    %1 = vector.load %arg1[%c0, %c0_0] : memref<64x2xi32, #tpu.memory_space<vmem>>, vector<64x1xi32>
    %2 = vector.broadcast %1 : vector<64x1xi32> to vector<64x128xi32>
    %3 = arith.cmpi eq, %2, %0 : vector<64x128xi32>
    %c0_1 = arith.constant 0 : index
    %c1 = arith.constant 1 : index
    %4 = vector.load %arg1[%c0_1, %c1] : memref<64x2xi32, #tpu.memory_space<vmem>>, vector<64x1xi32>
    %5 = vector.broadcast %4 : vector<64x1xi32> to vector<64x128xi32>
    %6 = arith.cmpi eq, %5, %0 : vector<64x128xi32>
    %7 = arith.ori %3, %6 : vector<64x128xi1>
    %8 = arith.extui %7 : vector<64x128xi1> to vector<64x128xi32>
    %9 = arith.sitofp %8 : vector<64x128xi32> to vector<64x128xf32>
    %c0_2 = arith.constant 0 : index
    %c0_3 = arith.constant 0 : index
    %10 = vector.load %arg2[%c0_2, %c0_3] : memref<128x32xf32, #tpu.memory_space<vmem>>, vector<128x32xf32>
    %cst = arith.constant dense<0.000000e+00> : vector<64x32xf32>
    %11 = tpu.matmul %9, %10, %cst {dimension_numbers = #tpu.dot_dimension_numbers<[1], [0], [0], [1], [0, 0, 1, 1], [], []>} : vector<64x128xf32>, vector<128x32xf32>, vector<64x32xf32> -> vector<64x32xf32>
    %c0_4 = arith.constant 0 : index
    %c32 = arith.constant 32 : index
    %c0_5 = arith.constant 0 : index
    %12 = vector.load %arg6[%c0_4, %c32, %c0_5] : memref<3x40x32xf32, #tpu.memory_space<vmem>>, vector<1x1x32xf32>
    %13 = vector.shape_cast %12 : vector<1x1x32xf32> to vector<1x32xf32>
    %14 = vector.broadcast %13 : vector<1x32xf32> to vector<64x32xf32>
    %15 = arith.addf %11, %14 : vector<64x32xf32>
    %c0_6 = arith.constant 0 : index
    %c33 = arith.constant 33 : index
    %c0_7 = arith.constant 0 : index
    %16 = vector.load %arg6[%c0_6, %c33, %c0_7] : memref<3x40x32xf32, #tpu.memory_space<vmem>>, vector<1x1x32xf32>
    %17 = vector.shape_cast %16 : vector<1x1x32xf32> to vector<1x32xf32>
    %c0_8 = arith.constant 0 : index
    %c34 = arith.constant 34 : index
    %c0_9 = arith.constant 0 : index
    %18 = vector.load %arg6[%c0_8, %c34, %c0_9] : memref<3x40x32xf32, #tpu.memory_space<vmem>>, vector<1x1x32xf32>
    %19 = vector.shape_cast %18 : vector<1x1x32xf32> to vector<1x32xf32>
    %cst_10 = arith.constant dense<0.000000e+00> : vector<64xf32>
    %20 = vector.multi_reduction <add>, %15, %cst_10 [1] : vector<64x32xf32> to vector<64xf32>
    %21 = vector.shape_cast %20 : vector<64xf32> to vector<64x1xf32>
    %cst_11 = arith.constant 3.200000e+01 : f32
    %22 = vector.broadcast %cst_11 : f32 to vector<64x1xf32>
    %23 = arith.divf %21, %22 : vector<64x1xf32>
    %24 = vector.broadcast %23 : vector<64x1xf32> to vector<64x32xf32>
    %25 = arith.subf %15, %24 : vector<64x32xf32>
    %26 = arith.mulf %25, %25 : vector<64x32xf32>
    %cst_12 = arith.constant dense<0.000000e+00> : vector<64xf32>
    %27 = vector.multi_reduction <add>, %26, %cst_12 [1] : vector<64x32xf32> to vector<64xf32>
    %28 = vector.shape_cast %27 : vector<64xf32> to vector<64x1xf32>
    %cst_13 = arith.constant 3.200000e+01 : f32
    %29 = vector.broadcast %cst_13 : f32 to vector<64x1xf32>
    %30 = arith.divf %28, %29 : vector<64x1xf32>
    %31 = vector.broadcast %23 : vector<64x1xf32> to vector<64x32xf32>
    %32 = arith.subf %15, %31 : vector<64x32xf32>
    %cst_14 = arith.constant 9.99999974E-6 : f32
    %33 = vector.broadcast %cst_14 : f32 to vector<64x1xf32>
    %34 = arith.addf %30, %33 : vector<64x1xf32>
    %35 = math.rsqrt %34 : vector<64x1xf32>
    %36 = vector.broadcast %35 : vector<64x1xf32> to vector<64x32xf32>
    %37 = arith.mulf %32, %36 : vector<64x32xf32>
    %38 = vector.broadcast %17 : vector<1x32xf32> to vector<64x32xf32>
    %39 = arith.mulf %37, %38 : vector<64x32xf32>
    %40 = vector.broadcast %19 : vector<1x32xf32> to vector<64x32xf32>
    %41 = arith.addf %39, %40 : vector<64x32xf32>
    %42 = arith.truncf %41 : vector<64x32xf32> to vector<64x32xbf16>
    %c0_15 = arith.constant 0 : index
    %c0_16 = arith.constant 0 : index
    %c0_17 = arith.constant 0 : index
    %43 = vector.load %arg3[%c0_15, %c0_16, %c0_17] : memref<2x32x2048xbf16, #tpu.memory_space<vmem>>, vector<1x32x2048xbf16>
    %44 = vector.shape_cast %43 : vector<1x32x2048xbf16> to vector<32x2048xbf16>
    %cst_18 = arith.constant dense<0.000000e+00> : vector<64x2048xf32>
    %45 = tpu.matmul %42, %44, %cst_18 {dimension_numbers = #tpu.dot_dimension_numbers<[1], [0], [0], [1], [0, 0, 1, 1], [], []>} : vector<64x32xbf16>, vector<32x2048xbf16>, vector<64x2048xf32> -> vector<64x2048xf32>
    %c0_19 = arith.constant 0 : index
    %c0_20 = arith.constant 0 : index
    %46 = vector.load %arg5[%c0_19, %c0_20] : memref<2x2048xf32, #tpu.memory_space<vmem>>, vector<1x2048xf32>
    %47 = vector.broadcast %46 : vector<1x2048xf32> to vector<64x2048xf32>
    %48 = arith.addf %45, %47 : vector<64x2048xf32>
    %cst_21 = arith.constant 0.000000e+00 : f32
    %49 = vector.broadcast %cst_21 : f32 to vector<64x2048xf32>
    %50 = arith.maximumf %48, %49 : vector<64x2048xf32>
    %51 = arith.truncf %50 : vector<64x2048xf32> to vector<64x2048xbf16>
    %c0_22 = arith.constant 0 : index
    %c0_23 = arith.constant 0 : index
    %c0_24 = arith.constant 0 : index
    %52 = vector.load %arg4[%c0_22, %c0_23, %c0_24] : memref<2x2048x32xbf16, #tpu.memory_space<vmem>>, vector<1x2048x32xbf16>
    %53 = vector.shape_cast %52 : vector<1x2048x32xbf16> to vector<2048x32xbf16>
    %cst_25 = arith.constant dense<0.000000e+00> : vector<64x32xf32>
    %54 = tpu.matmul %51, %53, %cst_25 {dimension_numbers = #tpu.dot_dimension_numbers<[1], [0], [0], [1], [0, 0, 1, 1], [], []>} : vector<64x2048xbf16>, vector<2048x32xbf16>, vector<64x32xf32> -> vector<64x32xf32>
    %c0_26 = arith.constant 0 : index
    %c35 = arith.constant 35 : index
    %c0_27 = arith.constant 0 : index
    %55 = vector.load %arg6[%c0_26, %c35, %c0_27] : memref<3x40x32xf32, #tpu.memory_space<vmem>>, vector<1x1x32xf32>
    %56 = vector.shape_cast %55 : vector<1x1x32xf32> to vector<1x32xf32>
    %57 = vector.broadcast %56 : vector<1x32xf32> to vector<64x32xf32>
    %58 = arith.addf %54, %57 : vector<64x32xf32>
    %59 = arith.addf %41, %58 : vector<64x32xf32>
    %c0_28 = arith.constant 0 : index
    %c36 = arith.constant 36 : index
    %c0_29 = arith.constant 0 : index
    %60 = vector.load %arg6[%c0_28, %c36, %c0_29] : memref<3x40x32xf32, #tpu.memory_space<vmem>>, vector<1x1x32xf32>
    %61 = vector.shape_cast %60 : vector<1x1x32xf32> to vector<1x32xf32>
    %c0_30 = arith.constant 0 : index
    %c37 = arith.constant 37 : index
    %c0_31 = arith.constant 0 : index
    %62 = vector.load %arg6[%c0_30, %c37, %c0_31] : memref<3x40x32xf32, #tpu.memory_space<vmem>>, vector<1x1x32xf32>
    %63 = vector.shape_cast %62 : vector<1x1x32xf32> to vector<1x32xf32>
    %cst_32 = arith.constant dense<0.000000e+00> : vector<64xf32>
    %64 = vector.multi_reduction <add>, %59, %cst_32 [1] : vector<64x32xf32> to vector<64xf32>
    %65 = vector.shape_cast %64 : vector<64xf32> to vector<64x1xf32>
    %cst_33 = arith.constant 3.200000e+01 : f32
    %66 = vector.broadcast %cst_33 : f32 to vector<64x1xf32>
    %67 = arith.divf %65, %66 : vector<64x1xf32>
    %68 = vector.broadcast %67 : vector<64x1xf32> to vector<64x32xf32>
    %69 = arith.subf %59, %68 : vector<64x32xf32>
    %70 = arith.mulf %69, %69 : vector<64x32xf32>
    %cst_34 = arith.constant dense<0.000000e+00> : vector<64xf32>
    %71 = vector.multi_reduction <add>, %70, %cst_34 [1] : vector<64x32xf32> to vector<64xf32>
    %72 = vector.shape_cast %71 : vector<64xf32> to vector<64x1xf32>
    %cst_35 = arith.constant 3.200000e+01 : f32
    %73 = vector.broadcast %cst_35 : f32 to vector<64x1xf32>
    %74 = arith.divf %72, %73 : vector<64x1xf32>
    %75 = vector.broadcast %67 : vector<64x1xf32> to vector<64x32xf32>
    %76 = arith.subf %59, %75 : vector<64x32xf32>
    %cst_36 = arith.constant 9.99999974E-6 : f32
    %77 = vector.broadcast %cst_36 : f32 to vector<64x1xf32>
    %78 = arith.addf %74, %77 : vector<64x1xf32>
    %79 = math.rsqrt %78 : vector<64x1xf32>
    %80 = vector.broadcast %79 : vector<64x1xf32> to vector<64x32xf32>
    %81 = arith.mulf %76, %80 : vector<64x32xf32>
    %82 = vector.broadcast %61 : vector<1x32xf32> to vector<64x32xf32>
    %83 = arith.mulf %81, %82 : vector<64x32xf32>
    %84 = vector.broadcast %63 : vector<1x32xf32> to vector<64x32xf32>
    %85 = arith.addf %83, %84 : vector<64x32xf32>
    %c1_37 = arith.constant 1 : index
    %c0_38 = arith.constant 0 : index
    %c0_39 = arith.constant 0 : index
    %86 = vector.load %arg6[%c1_37, %c0_38, %c0_39] : memref<3x40x32xf32, #tpu.memory_space<vmem>>, vector<1x32x32xf32>
    %87 = vector.shape_cast %86 : vector<1x32x32xf32> to vector<32x32xf32>
    %cst_40 = arith.constant dense<0.000000e+00> : vector<64x32xf32>
    %88 = tpu.matmul %85, %87, %cst_40 {dimension_numbers = #tpu.dot_dimension_numbers<[1], [0], [0], [1], [0, 0, 1, 1], [], []>} : vector<64x32xf32>, vector<32x32xf32>, vector<64x32xf32> -> vector<64x32xf32>
    %c1_41 = arith.constant 1 : index
    %c32_42 = arith.constant 32 : index
    %c0_43 = arith.constant 0 : index
    %89 = vector.load %arg6[%c1_41, %c32_42, %c0_43] : memref<3x40x32xf32, #tpu.memory_space<vmem>>, vector<1x1x32xf32>
    %90 = vector.shape_cast %89 : vector<1x1x32xf32> to vector<1x32xf32>
    %91 = vector.broadcast %90 : vector<1x32xf32> to vector<64x32xf32>
    %92 = arith.addf %88, %91 : vector<64x32xf32>
    %c1_44 = arith.constant 1 : index
    %c33_45 = arith.constant 33 : index
    %c0_46 = arith.constant 0 : index
    %93 = vector.load %arg6[%c1_44, %c33_45, %c0_46] : memref<3x40x32xf32, #tpu.memory_space<vmem>>, vector<1x1x32xf32>
    %94 = vector.shape_cast %93 : vector<1x1x32xf32> to vector<1x32xf32>
    %c1_47 = arith.constant 1 : index
    %c34_48 = arith.constant 34 : index
    %c0_49 = arith.constant 0 : index
    %95 = vector.load %arg6[%c1_47, %c34_48, %c0_49] : memref<3x40x32xf32, #tpu.memory_space<vmem>>, vector<1x1x32xf32>
    %96 = vector.shape_cast %95 : vector<1x1x32xf32> to vector<1x32xf32>
    %cst_50 = arith.constant dense<0.000000e+00> : vector<64xf32>
    %97 = vector.multi_reduction <add>, %92, %cst_50 [1] : vector<64x32xf32> to vector<64xf32>
    %98 = vector.shape_cast %97 : vector<64xf32> to vector<64x1xf32>
    %cst_51 = arith.constant 3.200000e+01 : f32
    %99 = vector.broadcast %cst_51 : f32 to vector<64x1xf32>
    %100 = arith.divf %98, %99 : vector<64x1xf32>
    %101 = vector.broadcast %100 : vector<64x1xf32> to vector<64x32xf32>
    %102 = arith.subf %92, %101 : vector<64x32xf32>
    %103 = arith.mulf %102, %102 : vector<64x32xf32>
    %cst_52 = arith.constant dense<0.000000e+00> : vector<64xf32>
    %104 = vector.multi_reduction <add>, %103, %cst_52 [1] : vector<64x32xf32> to vector<64xf32>
    %105 = vector.shape_cast %104 : vector<64xf32> to vector<64x1xf32>
    %cst_53 = arith.constant 3.200000e+01 : f32
    %106 = vector.broadcast %cst_53 : f32 to vector<64x1xf32>
    %107 = arith.divf %105, %106 : vector<64x1xf32>
    %108 = vector.broadcast %100 : vector<64x1xf32> to vector<64x32xf32>
    %109 = arith.subf %92, %108 : vector<64x32xf32>
    %cst_54 = arith.constant 9.99999974E-6 : f32
    %110 = vector.broadcast %cst_54 : f32 to vector<64x1xf32>
    %111 = arith.addf %107, %110 : vector<64x1xf32>
    %112 = math.rsqrt %111 : vector<64x1xf32>
    %113 = vector.broadcast %112 : vector<64x1xf32> to vector<64x32xf32>
    %114 = arith.mulf %109, %113 : vector<64x32xf32>
    %115 = vector.broadcast %94 : vector<1x32xf32> to vector<64x32xf32>
    %116 = arith.mulf %114, %115 : vector<64x32xf32>
    %117 = vector.broadcast %96 : vector<1x32xf32> to vector<64x32xf32>
    %118 = arith.addf %116, %117 : vector<64x32xf32>
    %119 = arith.truncf %118 : vector<64x32xf32> to vector<64x32xbf16>
    %c1_55 = arith.constant 1 : index
    %c0_56 = arith.constant 0 : index
    %c0_57 = arith.constant 0 : index
    %120 = vector.load %arg3[%c1_55, %c0_56, %c0_57] : memref<2x32x2048xbf16, #tpu.memory_space<vmem>>, vector<1x32x2048xbf16>
    %121 = vector.shape_cast %120 : vector<1x32x2048xbf16> to vector<32x2048xbf16>
    %cst_58 = arith.constant dense<0.000000e+00> : vector<64x2048xf32>
    %122 = tpu.matmul %119, %121, %cst_58 {dimension_numbers = #tpu.dot_dimension_numbers<[1], [0], [0], [1], [0, 0, 1, 1], [], []>} : vector<64x32xbf16>, vector<32x2048xbf16>, vector<64x2048xf32> -> vector<64x2048xf32>
    %c1_59 = arith.constant 1 : index
    %c0_60 = arith.constant 0 : index
    %123 = vector.load %arg5[%c1_59, %c0_60] : memref<2x2048xf32, #tpu.memory_space<vmem>>, vector<1x2048xf32>
    %124 = vector.broadcast %123 : vector<1x2048xf32> to vector<64x2048xf32>
    %125 = arith.addf %122, %124 : vector<64x2048xf32>
    %cst_61 = arith.constant 0.000000e+00 : f32
    %126 = vector.broadcast %cst_61 : f32 to vector<64x2048xf32>
    %127 = arith.maximumf %125, %126 : vector<64x2048xf32>
    %128 = arith.truncf %127 : vector<64x2048xf32> to vector<64x2048xbf16>
    %c1_62 = arith.constant 1 : index
    %c0_63 = arith.constant 0 : index
    %c0_64 = arith.constant 0 : index
    %129 = vector.load %arg4[%c1_62, %c0_63, %c0_64] : memref<2x2048x32xbf16, #tpu.memory_space<vmem>>, vector<1x2048x32xbf16>
    %130 = vector.shape_cast %129 : vector<1x2048x32xbf16> to vector<2048x32xbf16>
    %cst_65 = arith.constant dense<0.000000e+00> : vector<64x32xf32>
    %131 = tpu.matmul %128, %130, %cst_65 {dimension_numbers = #tpu.dot_dimension_numbers<[1], [0], [0], [1], [0, 0, 1, 1], [], []>} : vector<64x2048xbf16>, vector<2048x32xbf16>, vector<64x32xf32> -> vector<64x32xf32>
    %c1_66 = arith.constant 1 : index
    %c35_67 = arith.constant 35 : index
    %c0_68 = arith.constant 0 : index
    %132 = vector.load %arg6[%c1_66, %c35_67, %c0_68] : memref<3x40x32xf32, #tpu.memory_space<vmem>>, vector<1x1x32xf32>
    %133 = vector.shape_cast %132 : vector<1x1x32xf32> to vector<1x32xf32>
    %134 = vector.broadcast %133 : vector<1x32xf32> to vector<64x32xf32>
    %135 = arith.addf %131, %134 : vector<64x32xf32>
    %136 = arith.addf %118, %135 : vector<64x32xf32>
    %c1_69 = arith.constant 1 : index
    %c36_70 = arith.constant 36 : index
    %c0_71 = arith.constant 0 : index
    %137 = vector.load %arg6[%c1_69, %c36_70, %c0_71] : memref<3x40x32xf32, #tpu.memory_space<vmem>>, vector<1x1x32xf32>
    %138 = vector.shape_cast %137 : vector<1x1x32xf32> to vector<1x32xf32>
    %c1_72 = arith.constant 1 : index
    %c37_73 = arith.constant 37 : index
    %c0_74 = arith.constant 0 : index
    %139 = vector.load %arg6[%c1_72, %c37_73, %c0_74] : memref<3x40x32xf32, #tpu.memory_space<vmem>>, vector<1x1x32xf32>
    %140 = vector.shape_cast %139 : vector<1x1x32xf32> to vector<1x32xf32>
    %cst_75 = arith.constant dense<0.000000e+00> : vector<64xf32>
    %141 = vector.multi_reduction <add>, %136, %cst_75 [1] : vector<64x32xf32> to vector<64xf32>
    %142 = vector.shape_cast %141 : vector<64xf32> to vector<64x1xf32>
    %cst_76 = arith.constant 3.200000e+01 : f32
    %143 = vector.broadcast %cst_76 : f32 to vector<64x1xf32>
    %144 = arith.divf %142, %143 : vector<64x1xf32>
    %145 = vector.broadcast %144 : vector<64x1xf32> to vector<64x32xf32>
    %146 = arith.subf %136, %145 : vector<64x32xf32>
    %147 = arith.mulf %146, %146 : vector<64x32xf32>
    %cst_77 = arith.constant dense<0.000000e+00> : vector<64xf32>
    %148 = vector.multi_reduction <add>, %147, %cst_77 [1] : vector<64x32xf32> to vector<64xf32>
    %149 = vector.shape_cast %148 : vector<64xf32> to vector<64x1xf32>
    %cst_78 = arith.constant 3.200000e+01 : f32
    %150 = vector.broadcast %cst_78 : f32 to vector<64x1xf32>
    %151 = arith.divf %149, %150 : vector<64x1xf32>
    %152 = vector.broadcast %144 : vector<64x1xf32> to vector<64x32xf32>
    %153 = arith.subf %136, %152 : vector<64x32xf32>
    %cst_79 = arith.constant 9.99999974E-6 : f32
    %154 = vector.broadcast %cst_79 : f32 to vector<64x1xf32>
    %155 = arith.addf %151, %154 : vector<64x1xf32>
    %156 = math.rsqrt %155 : vector<64x1xf32>
    %157 = vector.broadcast %156 : vector<64x1xf32> to vector<64x32xf32>
    %158 = arith.mulf %153, %157 : vector<64x32xf32>
    %159 = vector.broadcast %138 : vector<1x32xf32> to vector<64x32xf32>
    %160 = arith.mulf %158, %159 : vector<64x32xf32>
    %161 = vector.broadcast %140 : vector<1x32xf32> to vector<64x32xf32>
    %162 = arith.addf %160, %161 : vector<64x32xf32>
    %c2 = arith.constant 2 : index
    %c0_80 = arith.constant 0 : index
    %c0_81 = arith.constant 0 : index
    %163 = vector.load %arg6[%c2, %c0_80, %c0_81] : memref<3x40x32xf32, #tpu.memory_space<vmem>>, vector<1x32x32xf32>
    %164 = vector.shape_cast %163 : vector<1x32x32xf32> to vector<32x32xf32>
    %cst_82 = arith.constant dense<0.000000e+00> : vector<64x32xf32>
    %165 = tpu.matmul %162, %164, %cst_82 {dimension_numbers = #tpu.dot_dimension_numbers<[1], [0], [0], [1], [0, 0, 1, 1], [], []>} : vector<64x32xf32>, vector<32x32xf32>, vector<64x32xf32> -> vector<64x32xf32>
    %c2_83 = arith.constant 2 : index
    %c32_84 = arith.constant 32 : index
    %c0_85 = arith.constant 0 : index
    %166 = vector.load %arg6[%c2_83, %c32_84, %c0_85] : memref<3x40x32xf32, #tpu.memory_space<vmem>>, vector<1x1x32xf32>
    %167 = vector.shape_cast %166 : vector<1x1x32xf32> to vector<1x32xf32>
    %168 = vector.broadcast %167 : vector<1x32xf32> to vector<64x32xf32>
    %169 = arith.addf %165, %168 : vector<64x32xf32>
    %170 = vector.extract_strided_slice %169 {offsets = [0, 0], sizes = [64, 4], strides = [1, 1]} : vector<64x32xf32> to vector<64x4xf32>
    %171 = vector.extract_strided_slice %169 {offsets = [0, 4], sizes = [64, 4], strides = [1, 1]} : vector<64x32xf32> to vector<64x4xf32>
    %cst_86 = arith.constant dense<0xFF800000> : vector<64xf32>
    %172 = vector.multi_reduction <maximumf>, %170, %cst_86 [1] : vector<64x4xf32> to vector<64xf32>
    %173 = vector.shape_cast %172 : vector<64xf32> to vector<64x1xf32>
    %174 = vector.broadcast %173 : vector<64x1xf32> to vector<64x4xf32>
    %175 = arith.subf %170, %174 : vector<64x4xf32>
    %176 = math.exp %175 : vector<64x4xf32>
    %177 = arith.mulf %176, %171 : vector<64x4xf32>
    %cst_87 = arith.constant dense<0.000000e+00> : vector<64xf32>
    %178 = vector.multi_reduction <add>, %177, %cst_87 [1] : vector<64x4xf32> to vector<64xf32>
    %179 = vector.shape_cast %178 : vector<64xf32> to vector<64x1xf32>
    %cst_88 = arith.constant dense<0.000000e+00> : vector<64xf32>
    %180 = vector.multi_reduction <add>, %176, %cst_88 [1] : vector<64x4xf32> to vector<64xf32>
    %181 = vector.shape_cast %180 : vector<64xf32> to vector<64x1xf32>
    %182 = tpu.reciprocal %181 {approx = true} : vector<64x1xf32> -> vector<64x1xf32>
    %183 = arith.mulf %179, %182 : vector<64x1xf32>
    %184 = arith.negf %183 : vector<64x1xf32>
    %185 = math.exp %184 : vector<64x1xf32>
    %cst_89 = arith.constant 1.000000e+00 : f32
    %186 = vector.broadcast %cst_89 : f32 to vector<64x1xf32>
    %187 = arith.addf %186, %185 : vector<64x1xf32>
    %188 = arith.divf %186, %187 : vector<64x1xf32>
    %189 = vector.shape_cast %188 : vector<64x1xf32> to vector<64x1xf32>
    %190 = vector.broadcast %189 : vector<64x1xf32> to vector<64x128xf32>
    %c0_90 = arith.constant 0 : index
    %c0_91 = arith.constant 0 : index
    %191 = vector.load %arg7[%c0_90, %c0_91] : memref<64x128xf32, #tpu.memory_space<vmem>>, vector<64x128xf32>
    tpu.vector_store %arg7[%c0_90, %c0_91], %190 {strides = array<i32>} : memref<64x128xf32, #tpu.memory_space<vmem>>, vector<64x128xf32>,
    return
  }
  func.func @transform_0(%arg0: i32) -> (i32, i32) {
    %c0_i32 = arith.constant 0 : i32
    %c0_i32_0 = arith.constant 0 : i32
    return %arg0, %c0_i32 : i32, i32
  }
  func.func @transform_1(%arg0: i32) -> (i32, i32) {
    %c0_i32 = arith.constant 0 : i32
    %c0_i32_0 = arith.constant 0 : i32
    %c0_i32_1 = arith.constant 0 : i32
    return %c0_i32, %c0_i32_0 : i32, i32
  }
  func.func @transform_2(%arg0: i32) -> (i32, i32, i32) {
    %c0_i32 = arith.constant 0 : i32
    %c0_i32_0 = arith.constant 0 : i32
    %c0_i32_1 = arith.constant 0 : i32
    %c0_i32_2 = arith.constant 0 : i32
    return %c0_i32, %c0_i32_0, %c0_i32_1 : i32, i32, i32
  }
  func.func @transform_3(%arg0: i32) -> (i32, i32, i32) {
    %c0_i32 = arith.constant 0 : i32
    %c0_i32_0 = arith.constant 0 : i32
    %c0_i32_1 = arith.constant 0 : i32
    %c0_i32_2 = arith.constant 0 : i32
    return %c0_i32, %c0_i32_0, %c0_i32_1 : i32, i32, i32
  }
  func.func @transform_4(%arg0: i32) -> (i32, i32) {
    %c0_i32 = arith.constant 0 : i32
    %c0_i32_0 = arith.constant 0 : i32
    %c0_i32_1 = arith.constant 0 : i32
    return %c0_i32, %c0_i32_0 : i32, i32
  }
  func.func @transform_5(%arg0: i32) -> (i32, i32, i32) {
    %c0_i32 = arith.constant 0 : i32
    %c0_i32_0 = arith.constant 0 : i32
    %c0_i32_1 = arith.constant 0 : i32
    %c0_i32_2 = arith.constant 0 : i32
    return %c0_i32, %c0_i32_0, %c0_i32_1 : i32, i32, i32
  }
  func.func @transform_6(%arg0: i32) -> (i32, i32) {
    %c0_i32 = arith.constant 0 : i32
    %c0_i32_0 = arith.constant 0 : i32
    return %arg0, %c0_i32 : i32, i32
  }
}

</mosaic_0001>

<llo_original>
// kernel: forward.1
$region0: #{forward.1}
  #allocation0 [shape = 'u32[]', space=smem, size = 0x4, offset = 0x4, fixed_abs, tag = 'smem constant byte address 0x4 - core index']
  #allocation1 [shape = 'u32[144,128]{1,0:T(1,128)}', space=vmem, size = 0x12000, scoped, tag = 'internal scratch']
  %s0 = inlined_call_operand.vmem [shape: s32[64,2], index: 0, kind: input, shape index: {}]
  %s1 = inlined_call_operand.vmem [shape: f32[128,32], index: 1, kind: input, shape index: {}]
  %s2 = inlined_call_operand.vmem [shape: bf16[2,32,2048], index: 2, kind: input, shape index: {}]
  %s3 = inlined_call_operand.vmem [shape: bf16[2,2048,32], index: 3, kind: input, shape index: {}]
  %s4 = inlined_call_operand.vmem [shape: f32[2,2048], index: 4, kind: input, shape index: {}]
  %s5 = inlined_call_operand.vmem [shape: f32[3,40,32], index: 5, kind: input, shape index: {}]
  %s6 = inlined_call_operand.vmem [shape: f32[64,128], index: 6, kind: output, shape index: {}]
  %s7 = sld [smem:[#allocation0]]
  $region34: #{forward.1} parent=0
    _
  %s9 = ssub.s32 1, %s7
  %s10 = scalar_select 0, %s9, %s7
  // Predicated region
  $region2: #{forward.1} parent=0 // pred_check
    _
  $region3: #{forward.1} parent=0 // pred_check_branch
    %12 = sbr.rel (0) target = $region5
  $region4: #{forward.1} parent=0 // pred_region
    _
  $region5: #{forward.1} parent=0 // pred_fallthru
    _
  // Predicated region
  $region6: #{forward.1} parent=0 // pred_check
    _
  $region7: #{forward.1} parent=0 // pred_check_branch
    %14 = sbr.rel (0) target = $region9
  $region8: #{forward.1} parent=0 // pred_region
    _
  $region9: #{forward.1} parent=0 // pred_fallthru
    _
  // Predicated region
  $region10: #{forward.1} parent=0 // pred_check
    _
  $region11: #{forward.1} parent=0 // pred_check_branch
    %16 = sbr.rel (0) target = $region13
  $region12: #{forward.1} parent=0 // pred_region
    _
  $region13: #{forward.1} parent=0 // pred_fallthru
    _
  // Predicated region
  $region14: #{forward.1} parent=0 // pred_check
    _
  $region15: #{forward.1} parent=0 // pred_check_branch
    %18 = sbr.rel (0) target = $region17
  $region16: #{forward.1} parent=0 // pred_region
    _
  $region17: #{forward.1} parent=0 // pred_fallthru
    _
  // Predicated region
  $region18: #{forward.1} parent=0 // pred_check
    _
  $region19: #{forward.1} parent=0 // pred_check_branch
    %20 = sbr.rel (0) target = $region21
  $region20: #{forward.1} parent=0 // pred_region
    _
  $region21: #{forward.1} parent=0 // pred_fallthru
    _
  // Predicated region
  $region22: #{forward.1} parent=0 // pred_check
    _
  $region23: #{forward.1} parent=0 // pred_check_branch
    %22 = sbr.rel (0) target = $region25
  $region24: #{forward.1} parent=0 // pred_region
    _
  $region25: #{forward.1} parent=0 // pred_fallthru
    _
  %v24 = vlaneseq
  %v25 = vand.u32 %v24, 127
  %v26 = vld [vmem:[%s0] sm:$0xff]
  %v27 = vld [vmem:[%s0 + $0x8] sm:$0xff]
  %v28 = vld [vmem:[%s0 + $0x10] sm:$0xff]
  %v29 = vld [vmem:[%s0 + $0x18] sm:$0xff]
  %v30 = vld [vmem:[%s0 + $0x20] sm:$0xff]
  %v31 = vld [vmem:[%s0 + $0x28] sm:$0xff]
  %v32 = vld [vmem:[%s0 + $0x30] sm:$0xff]
  %v33 = vld [vmem:[%s0 + $0x38] sm:$0xff]
  %34 = vset.pattern.permute.xlu0 0
  %35 = vperm.xlu0 %34, %v26
  %v36 = vpop.permute.xlu0 %35
  %37 = vset.pattern.permute.xlu0 0
  %38 = vperm.xlu0 %37, %v27
  %v39 = vpop.permute.xlu0 %38
  %40 = vset.pattern.permute.xlu0 0
  %41 = vperm.xlu0 %40, %v28
  %v42 = vpop.permute.xlu0 %41
  %43 = vset.pattern.permute.xlu0 0
  %44 = vperm.xlu0 %43, %v29
  %v45 = vpop.permute.xlu0 %44
  %46 = vset.pattern.permute.xlu0 0
  %47 = vperm.xlu0 %46, %v30
  %v48 = vpop.permute.xlu0 %47
  %49 = vset.pattern.permute.xlu0 0
  %50 = vperm.xlu0 %49, %v31
  %v51 = vpop.permute.xlu0 %50
  %52 = vset.pattern.permute.xlu0 0
  %53 = vperm.xlu0 %52, %v32
  %v54 = vpop.permute.xlu0 %53
  %55 = vset.pattern.permute.xlu0 0
  %56 = vperm.xlu0 %55, %v33
  %v57 = vpop.permute.xlu0 %56
  %vm58 = vcmp.eq.s32.totalorder %v36, %v25
  %vm59 = vcmp.eq.s32.totalorder %v39, %v25
  %vm60 = vcmp.eq.s32.totalorder %v42, %v25
  %vm61 = vcmp.eq.s32.totalorder %v45, %v25
  %vm62 = vcmp.eq.s32.totalorder %v48, %v25
  %vm63 = vcmp.eq.s32.totalorder %v51, %v25
  %vm64 = vcmp.eq.s32.totalorder %v54, %v25
  %vm65 = vcmp.eq.s32.totalorder %v57, %v25
  %66 = vset.pattern.permute.xlu0 1
  %67 = vperm.xlu0 %66, %v26
  %v68 = vpop.permute.xlu0 %67
  %69 = vset.pattern.permute.xlu0 1
  %70 = vperm.xlu0 %69, %v27
  %v71 = vpop.permute.xlu0 %70
  %72 = vset.pattern.permute.xlu0 1
  %73 = vperm.xlu0 %72, %v28
  %v74 = vpop.permute.xlu0 %73
  %75 = vset.pattern.permute.xlu0 1
  %76 = vperm.xlu0 %75, %v29
  %v77 = vpop.permute.xlu0 %76
  %78 = vset.pattern.permute.xlu0 1
  %79 = vperm.xlu0 %78, %v30
  %v80 = vpop.permute.xlu0 %79
  %81 = vset.pattern.permute.xlu0 1
  %82 = vperm.xlu0 %81, %v31
  %v83 = vpop.permute.xlu0 %82
  %84 = vset.pattern.permute.xlu0 1
  %85 = vperm.xlu0 %84, %v32
  %v86 = vpop.permute.xlu0 %85
  %87 = vset.pattern.permute.xlu0 1
  %88 = vperm.xlu0 %87, %v33
  %v89 = vpop.permute.xlu0 %88
  %vm90 = vcmp.eq.s32.totalorder %v68, %v25
  %vm91 = vcmp.eq.s32.totalorder %v71, %v25
  %vm92 = vcmp.eq.s32.totalorder %v74, %v25
  %vm93 = vcmp.eq.s32.totalorder %v77, %v25
  %vm94 = vcmp.eq.s32.totalorder %v80, %v25
  %vm95 = vcmp.eq.s32.totalorder %v83, %v25
  %vm96 = vcmp.eq.s32.totalorder %v86, %v25
  %vm97 = vcmp.eq.s32.totalorder %v89, %v25
  %vm98 = vmor %vm58, %vm90
  %vm99 = vmor %vm59, %vm91
  %vm100 = vmor %vm60, %vm92
  %vm101 = vmor %vm61, %vm93
  %vm102 = vmor %vm62, %vm94
  %vm103 = vmor %vm63, %vm95
  %vm104 = vmor %vm64, %vm96
  %vm105 = vmor %vm65, %vm97
  %v106 = vsel %vm98, 1, 0
  %v107 = vsel %vm99, 1, 0
  %v108 = vsel %vm100, 1, 0
  %v109 = vsel %vm101, 1, 0
  %v110 = vsel %vm102, 1, 0
  %v111 = vsel %vm103, 1, 0
  %v112 = vsel %vm104, 1, 0
  %v113 = vsel %vm105, 1, 0
  %v114 = vcvt.s32.f32 %v106
  %v115 = vcvt.s32.f32 %v107
  %v116 = vcvt.s32.f32 %v108
  %v117 = vcvt.s32.f32 %v109
  %v118 = vcvt.s32.f32 %v110
  %v119 = vcvt.s32.f32 %v111
  %v120 = vcvt.s32.f32 %v112
  %v121 = vcvt.s32.f32 %v113
  %v122 = vld [vmem:[%s1] sm:$0xff]
  %v123 = vld [vmem:[%s1 + $0x8] sm:$0xff]
  %v124 = vld [vmem:[%s1 + $0x10] sm:$0xff]
  %v125 = vld [vmem:[%s1 + $0x18] sm:$0xff]
  %v126 = vld [vmem:[%s1 + $0x20] sm:$0xff]
  %v127 = vld [vmem:[%s1 + $0x28] sm:$0xff]
  %v128 = vld [vmem:[%s1 + $0x30] sm:$0xff]
  %v129 = vld [vmem:[%s1 + $0x38] sm:$0xff]
  %v130 = vld [vmem:[%s1 + $0x40] sm:$0xff]
  %v131 = vld [vmem:[%s1 + $0x48] sm:$0xff]
  %v132 = vld [vmem:[%s1 + $0x50] sm:$0xff]
  %v133 = vld [vmem:[%s1 + $0x58] sm:$0xff]
  %v134 = vld [vmem:[%s1 + $0x60] sm:$0xff]
  %v135 = vld [vmem:[%s1 + $0x68] sm:$0xff]
  %v136 = vld [vmem:[%s1 + $0x70] sm:$0xff]
  %v137 = vld [vmem:[%s1 + $0x78] sm:$0xff]
  %v138 = vld [vmem:[%s5 + $0x20] sm:$0x1]
  %v139 = vlaneseq
  %v140 = vshrl.u32 %v139, 7
  %v141 = vsub.s32 0, %v140
  %v142 = vrot.slane %v138, %v141
  %143 = vmatprep.subr.mxu0 0.0
  %144 = vmatpush1.msra.mxu0 %v122
  %145 = vmatprep.subr.mxu0 0.0
  %146 = vmatpush1.msra.mxu0 %v123
  %147 = vmatprep.subr.mxu0 0.0
  %148 = vmatpush1.msra.mxu0 %v124
  %149 = vmatprep.subr.mxu0 0.0
  %150 = vmatpush1.msra.mxu0 %v125
  %151 = vmatprep.subr.mxu0 0.0
  %152 = vmatpush1.msra.mxu0 %v126
  %153 = vmatprep.subr.mxu0 0.0
  %154 = vmatpush1.msra.mxu0 %v127
  %155 = vmatprep.subr.mxu0 0.0
  %156 = vmatpush1.msra.mxu0 %v128
  %157 = vmatprep.subr.mxu0 0.0
  %158 = vmatpush1.msra.mxu0 %v129
  %159 = vmatprep.subr.mxu0 0.0
  %160 = vmatpush1.msra.mxu0 %v130
  %161 = vmatprep.subr.mxu0 0.0
  %162 = vmatpush1.msra.mxu0 %v131
  %163 = vmatprep.subr.mxu0 0.0
  %164 = vmatpush1.msra.mxu0 %v132
  %165 = vmatprep.subr.mxu0 0.0
  %166 = vmatpush1.msra.mxu0 %v133
  %167 = vmatprep.subr.mxu0 0.0
  %168 = vmatpush1.msra.mxu0 %v134
  %169 = vmatprep.subr.mxu0 0.0
  %170 = vmatpush1.msra.mxu0 %v135
  %171 = vmatprep.subr.mxu0 0.0
  %172 = vmatpush1.msra.mxu0 %v136
  %173 = vmatprep.subr.mxu0 0.0
  %174 = vmatpush1.msra.mxu0 %v137
  %175 = vmatprep.subr.mxu0 0.0
  %176 = vmatpush1.msra.mxu0 0.0
  %177 = vmatprep.subr.mxu0 0.0
  %178 = vmatpush1.msra.mxu0 0.0
  %179 = vmatprep.subr.mxu0 0.0
  %180 = vmatpush1.msra.mxu0 0.0
  %181 = vmatprep.subr.mxu0 0.0
  %182 = vmatpush1.msra.mxu0 0.0
  %183 = vmatprep.subr.mxu0 0.0
  %184 = vmatpush1.msra.mxu0 0.0
  %185 = vmatprep.subr.mxu0 0.0
  %186 = vmatpush1.msra.mxu0 0.0
  %187 = vmatprep.subr.mxu0 0.0
  %188 = vmatpush1.msra.mxu0 0.0
  %189 = vmatprep.subr.mxu0 0.0
  %190 = vmatpush1.msra.mxu0 0.0
  %191 = vmatprep.subr.mxu0 0.0
  %192 = vmatpush1.msra.mxu0 0.0
  %193 = vmatprep.subr.mxu0 0.0
  %194 = vmatpush1.msra.mxu0 0.0
  %195 = vmatprep.subr.mxu0 0.0
  %196 = vmatpush1.msra.mxu0 0.0
  %197 = vmatprep.subr.mxu0 0.0
  %198 = vmatpush1.msra.mxu0 0.0
  %199 = vmatprep.subr.mxu0 0.0
  %200 = vmatpush1.msra.mxu0 0.0
  %201 = vmatprep.subr.mxu0 0.0
  %202 = vmatpush1.msra.mxu0 0.0
  %203 = vmatprep.subr.mxu0 0.0
  %204 = vmatpush1.msra.mxu0 0.0
  %205 = vmatprep.subr.mxu0 0.0
  %206 = vmatpush1.msra.mxu0 0.0
  %207 = vmatprep.mubr.f32.mxu0 0.0
  %208 = vmatmul.mubr.f32.gmra.mrb[0].mxu0 %v114
  %v209 = vpop.f32.mrb[0].mxu0
  %v210 = vadd.f32 %v142, %v209
  %v211 = vpop.f32.mrb[0].mxu0
  %212 = vmatprep.mubr.f32.mxu0 0.0
  %213 = vmatmul.mubr.f32.gmra.mrb[0].mxu0 %v115
  %v214 = vpop.f32.mrb[0].mxu0
  %v215 = vadd.f32 %v142, %v214
  %v216 = vpop.f32.mrb[0].mxu0
  %217 = vmatprep.mubr.f32.mxu0 0.0
  %218 = vmatmul.mubr.f32.gmra.mrb[0].mxu0 %v116
  %v219 = vpop.f32.mrb[0].mxu0
  %v220 = vadd.f32 %v142, %v219
  %v221 = vpop.f32.mrb[0].mxu0
  %222 = vmatprep.mubr.f32.mxu0 0.0
  %223 = vmatmul.mubr.f32.gmra.mrb[0].mxu0 %v117
  %v224 = vpop.f32.mrb[0].mxu0
  %v225 = vadd.f32 %v142, %v224
  %v226 = vpop.f32.mrb[0].mxu0
  %227 = vmatprep.mubr.f32.mxu0 0.0
  %228 = vmatmul.mubr.f32.gmra.mrb[0].mxu0 %v118
  %v229 = vpop.f32.mrb[0].mxu0
  %v230 = vadd.f32 %v142, %v229
  %v231 = vpop.f32.mrb[0].mxu0
  %232 = vmatprep.mubr.f32.mxu0 0.0
  %233 = vmatmul.mubr.f32.gmra.mrb[0].mxu0 %v119
  %v234 = vpop.f32.mrb[0].mxu0
  %v235 = vadd.f32 %v142, %v234
  %v236 = vpop.f32.mrb[0].mxu0
  %237 = vmatprep.mubr.f32.mxu0 0.0
  %238 = vmatmul.mubr.f32.gmra.mrb[0].mxu0 %v120
  %v239 = vpop.f32.mrb[0].mxu0
  %v240 = vadd.f32 %v142, %v239
  %v241 = vpop.f32.mrb[0].mxu0
  %242 = vmatprep.mubr.f32.mxu0 0.0
  %243 = vmatmul.mubr.f32.gmra.mrb[0].mxu0 %v121
  %v244 = vpop.f32.mrb[0].mxu0
  %v245 = vadd.f32 %v142, %v244
  %v246 = vpop.f32.mrb[0].mxu0
  %247 = vdwg.mxu0
  %v248 = vld [vmem:[%s5 + $0x21] sm:$0x1]
  %v249 = vld [vmem:[%s5 + $0x22] sm:$0x1]
  %vm250 = vcmask 261120
  %v251 = vsel %vm250, %v210, 0.0
  %252 = vadd.xlane.f32.xlu0 %v251
  %v253 = vpop.xlane.xlu0 %252
  %v254 = vsel %vm250, %v215, 0.0
  %255 = vadd.xlane.f32.xlu0 %v254
  %v256 = vpop.xlane.xlu0 %255
  %v257 = vsel %vm250, %v220, 0.0
  %258 = vadd.xlane.f32.xlu0 %v257
  %v259 = vpop.xlane.xlu0 %258
  %v260 = vsel %vm250, %v225, 0.0
  %261 = vadd.xlane.f32.xlu0 %v260
  %v262 = vpop.xlane.xlu0 %261
  %v263 = vsel %vm250, %v230, 0.0
  %264 = vadd.xlane.f32.xlu0 %v263
  %v265 = vpop.xlane.xlu0 %264
  %v266 = vsel %vm250, %v235, 0.0
  %267 = vadd.xlane.f32.xlu0 %v266
  %v268 = vpop.xlane.xlu0 %267
  %v269 = vsel %vm250, %v240, 0.0
  %270 = vadd.xlane.f32.xlu0 %v269
  %v271 = vpop.xlane.xlu0 %270
  %v272 = vsel %vm250, %v245, 0.0
  %273 = vadd.xlane.f32.xlu0 %v272
  %v274 = vpop.xlane.xlu0 %273
  %v275 = vrcp.pop 32.0
  %v276 = vmul.f32 %v253, %v275
  %v277 = vmul.f32 %v256, %v275
  %v278 = vmul.f32 %v259, %v275
  %v279 = vmul.f32 %v262, %v275
  %v280 = vmul.f32 %v265, %v275
  %v281 = vmul.f32 %v268, %v275
  %v282 = vmul.f32 %v271, %v275
  %v283 = vmul.f32 %v274, %v275
  %v284 = vsub.f32 %v210, %v276
  %v285 = vsub.f32 %v215, %v277
  %v286 = vsub.f32 %v220, %v278
  %v287 = vsub.f32 %v225, %v279
  %v288 = vsub.f32 %v230, %v280
  %v289 = vsub.f32 %v235, %v281
  %v290 = vsub.f32 %v240, %v282
  %v291 = vsub.f32 %v245, %v283
  %v292 = vmul.f32 %v284, %v284
  %v293 = vmul.f32 %v285, %v285
  %v294 = vmul.f32 %v286, %v286
  %v295 = vmul.f32 %v287, %v287
  %v296 = vmul.f32 %v288, %v288
  %v297 = vmul.f32 %v289, %v289
  %v298 = vmul.f32 %v290, %v290
  %v299 = vmul.f32 %v291, %v291
  %v300 = vsel %vm250, %v292, 0.0
  %301 = vadd.xlane.f32.xlu0 %v300
  %v302 = vpop.xlane.xlu0 %301
  %v303 = vsel %vm250, %v293, 0.0
  %304 = vadd.xlane.f32.xlu0 %v303
  %v305 = vpop.xlane.xlu0 %304
  %v306 = vsel %vm250, %v294, 0.0
  %307 = vadd.xlane.f32.xlu0 %v306
  %v308 = vpop.xlane.xlu0 %307
  %v309 = vsel %vm250, %v295, 0.0
  %310 = vadd.xlane.f32.xlu0 %v309
  %v311 = vpop.xlane.xlu0 %310
  %v312 = vsel %vm250, %v296, 0.0
  %313 = vadd.xlane.f32.xlu0 %v312
  %v314 = vpop.xlane.xlu0 %313
  %v315 = vsel %vm250, %v297, 0.0
  %316 = vadd.xlane.f32.xlu0 %v315
  %v317 = vpop.xlane.xlu0 %316
  %v318 = vsel %vm250, %v298, 0.0
  %319 = vadd.xlane.f32.xlu0 %v318
  %v320 = vpop.xlane.xlu0 %319
  %v321 = vsel %vm250, %v299, 0.0
  %322 = vadd.xlane.f32.xlu0 %v321
  %v323 = vpop.xlane.xlu0 %322
  %v324 = vmul.f32 %v302, %v275
  %v325 = vmul.f32 %v305, %v275
  %v326 = vmul.f32 %v308, %v275
  %v327 = vmul.f32 %v311, %v275
  %v328 = vmul.f32 %v314, %v275
  %v329 = vmul.f32 %v317, %v275
  %v330 = vmul.f32 %v320, %v275
  %v331 = vmul.f32 %v323, %v275
  %v332 = vadd.f32 %v324, 1e-05
  %v333 = vadd.f32 %v325, 1e-05
  %v334 = vadd.f32 %v326, 1e-05
  %v335 = vadd.f32 %v327, 1e-05
  %v336 = vadd.f32 %v328, 1e-05
  %v337 = vadd.f32 %v329, 1e-05
  %v338 = vadd.f32 %v330, 1e-05
  %v339 = vadd.f32 %v331, 1e-05
  %v340 = vrsqrt.pop %v332
  %v341 = vrsqrt.pop %v333
  %v342 = vrsqrt.pop %v334
  %v343 = vrsqrt.pop %v335
  %v344 = vrsqrt.pop %v336
  %v345 = vrsqrt.pop %v337
  %v346 = vrsqrt.pop %v338
  %v347 = vrsqrt.pop %v339
  %v348 = vmul.f32 %v284, %v340
  %v349 = vmul.f32 %v285, %v341
  %v350 = vmul.f32 %v286, %v342
  %v351 = vmul.f32 %v287, %v343
  %v352 = vmul.f32 %v288, %v344
  %v353 = vmul.f32 %v289, %v345
  %v354 = vmul.f32 %v290, %v346
  %v355 = vmul.f32 %v291, %v347
  %v356 = vlaneseq
  %v357 = vshrl.u32 %v356, 7
  %v358 = vsub.s32 0, %v357
  %v359 = vrot.slane %v248, %v358
  %v360 = vmul.f32 %v348, %v359
  %v361 = vmul.f32 %v349, %v359
  %v362 = vmul.f32 %v350, %v359
  %v363 = vmul.f32 %v351, %v359
  %v364 = vmul.f32 %v352, %v359
  %v365 = vmul.f32 %v353, %v359
  %v366 = vmul.f32 %v354, %v359
  %v367 = vmul.f32 %v355, %v359
  %v368 = vlaneseq
  %v369 = vshrl.u32 %v368, 7
  %v370 = vsub.s32 0, %v369
  %v371 = vrot.slane %v249, %v370
  %v372 = vadd.f32 %v360, %v371
  %v373 = vadd.f32 %v361, %v371
  %v374 = vadd.f32 %v362, %v371
  %v375 = vadd.f32 %v363, %v371
  %v376 = vadd.f32 %v364, %v371
  %v377 = vadd.f32 %v365, %v371
  %v378 = vadd.f32 %v366, %v371
  %v379 = vadd.f32 %v367, %v371
  %v380 = vpack.c.bf16 %v373, %v372
  %v381 = vpack.c.bf16 %v375, %v374
  %v382 = vpack.c.bf16 %v377, %v376
  %v383 = vpack.c.bf16 %v379, %v378
  %v384 = vld [vmem:[%s2] sm:$0xff]
  %v385 = vld [vmem:[%s2 + $0x8] sm:$0xff]
  %v386 = vld [vmem:[%s2 + $0x10] sm:$0xff]
  %v387 = vld [vmem:[%s2 + $0x18] sm:$0xff]
  %v388 = vld [vmem:[%s2 + $0x20] sm:$0xff]
  %v389 = vld [vmem:[%s2 + $0x28] sm:$0xff]
  %v390 = vld [vmem:[%s2 + $0x30] sm:$0xff]
  %v391 = vld [vmem:[%s2 + $0x38] sm:$0xff]
  %v392 = vld [vmem:[%s2 + $0x40] sm:$0xff]
  %v393 = vld [vmem:[%s2 + $0x48] sm:$0xff]
  %v394 = vld [vmem:[%s2 + $0x50] sm:$0xff]
  %v395 = vld [vmem:[%s2 + $0x58] sm:$0xff]
  %v396 = vld [vmem:[%s2 + $0x60] sm:$0xff]
  %v397 = vld [vmem:[%s2 + $0x68] sm:$0xff]
  %v398 = vld [vmem:[%s2 + $0x70] sm:$0xff]
  %v399 = vld [vmem:[%s2 + $0x78] sm:$0xff]
  %v400 = vld [vmem:[%s2 + $0x80] sm:$0xff]
  %v401 = vld [vmem:[%s2 + $0x88] sm:$0xff]
  %v402 = vld [vmem:[%s2 + $0x90] sm:$0xff]
  %v403 = vld [vmem:[%s2 + $0x98] sm:$0xff]
  %v404 = vld [vmem:[%s2 + $0xa0] sm:$0xff]
  %v405 = vld [vmem:[%s2 + $0xa8] sm:$0xff]
  %v406 = vld [vmem:[%s2 + $0xb0] sm:$0xff]
  %v407 = vld [vmem:[%s2 + $0xb8] sm:$0xff]
  %v408 = vld [vmem:[%s2 + $0xc0] sm:$0xff]
  %v409 = vld [vmem:[%s2 + $0xc8] sm:$0xff]
  %v410 = vld [vmem:[%s2 + $0xd0] sm:$0xff]
  %v411 = vld [vmem:[%s2 + $0xd8] sm:$0xff]
  %v412 = vld [vmem:[%s2 + $0xe0] sm:$0xff]
  %v413 = vld [vmem:[%s2 + $0xe8] sm:$0xff]
  %v414 = vld [vmem:[%s2 + $0xf0] sm:$0xff]
  %v415 = vld [vmem:[%s2 + $0xf8] sm:$0xff]
  %v416 = vld [vmem:[%s4] ss:$2 sm:$0xff]
  %s417 = scalar_lea.vmem %s4, 16
  %v418 = vld [vmem:[%s417] ss:$2 sm:$0xff]
  %v421 = vlaneseq
  %v422 = vshrl.u32 %v421, 7
  %v423 = vsub.s32 0, %v422
  %v424 = vrot.slane %v416, %v423
  %v425 = vlaneseq
  %v426 = vshrl.u32 %v425, 7
  %v427 = vsub.s32 1, %v426
  %v428 = vrot.slane %v416, %v427
  %v429 = vlaneseq
  %v430 = vshrl.u32 %v429, 7
  %v431 = vsub.s32 2, %v430
  %v432 = vrot.slane %v416, %v431
  %v433 = vlaneseq
  %v434 = vshrl.u32 %v433, 7
  %v435 = vsub.s32 3, %v434
  %v436 = vrot.slane %v416, %v435
  %v437 = vlaneseq
  %v438 = vshrl.u32 %v437, 7
  %v439 = vsub.s32 4, %v438
  %v440 = vrot.slane %v416, %v439
  %v441 = vlaneseq
  %v442 = vshrl.u32 %v441, 7
  %v443 = vsub.s32 5, %v442
  %v444 = vrot.slane %v416, %v443
  %v445 = vlaneseq
  %v446 = vshrl.u32 %v445, 7
  %v447 = vsub.s32 6, %v446
  %v448 = vrot.slane %v416, %v447
  %v449 = vlaneseq
  %v450 = vshrl.u32 %v449, 7
  %v451 = vsub.s32 7, %v450
  %v452 = vrot.slane %v416, %v451
  %v453 = vlaneseq
  %v454 = vshrl.u32 %v453, 7
  %v455 = vsub.s32 0, %v454
  %v456 = vrot.slane %v418, %v455
  %v457 = vlaneseq
  %v458 = vshrl.u32 %v457, 7
  %v459 = vsub.s32 1, %v458
  %v460 = vrot.slane %v418, %v459
  %v461 = vlaneseq
  %v462 = vshrl.u32 %v461, 7
  %v463 = vsub.s32 2, %v462
  %v464 = vrot.slane %v418, %v463
  %v465 = vlaneseq
  %v466 = vshrl.u32 %v465, 7
  %v467 = vsub.s32 3, %v466
  %v468 = vrot.slane %v418, %v467
  %v469 = vlaneseq
  %v470 = vshrl.u32 %v469, 7
  %v471 = vsub.s32 4, %v470
  %v472 = vrot.slane %v418, %v471
  %v473 = vlaneseq
  %v474 = vshrl.u32 %v473, 7
  %v475 = vsub.s32 5, %v474
  %v476 = vrot.slane %v418, %v475
  %v477 = vlaneseq
  %v478 = vshrl.u32 %v477, 7
  %v479 = vsub.s32 6, %v478
  %v480 = vrot.slane %v418, %v479
  %v481 = vlaneseq
  %v482 = vshrl.u32 %v481, 7
  %v483 = vsub.s32 7, %v482
  %v484 = vrot.slane %v418, %v483
  %v533 = vunpack.c.l.b16 %v384
  %v534 = vunpack.c.h.b16 %v384
  %v535 = vunpack.c.l.b16 %v385
  %v536 = vunpack.c.h.b16 %v385
  %v537 = vunpack.c.l.b16 %v386
  %v538 = vunpack.c.h.b16 %v386
  %v539 = vunpack.c.l.b16 %v387
  %v540 = vunpack.c.h.b16 %v387
  %v541 = vunpack.c.l.b16 %v388
  %v542 = vunpack.c.h.b16 %v388
  %v543 = vunpack.c.l.b16 %v389
  %v544 = vunpack.c.h.b16 %v389
  %v545 = vunpack.c.l.b16 %v390
  %v546 = vunpack.c.h.b16 %v390
  %v547 = vunpack.c.l.b16 %v391
  %v548 = vunpack.c.h.b16 %v391
  %v549 = vunpack.c.l.b16 %v392
  %v550 = vunpack.c.h.b16 %v392
  %v551 = vunpack.c.l.b16 %v393
  %v552 = vunpack.c.h.b16 %v393
  %v553 = vunpack.c.l.b16 %v394
  %v554 = vunpack.c.h.b16 %v394
  %v555 = vunpack.c.l.b16 %v395
  %v556 = vunpack.c.h.b16 %v395
  %v557 = vunpack.c.l.b16 %v396
  %v558 = vunpack.c.h.b16 %v396
  %v559 = vunpack.c.l.b16 %v397
  %v560 = vunpack.c.h.b16 %v397
  %v561 = vunpack.c.l.b16 %v398
  %v562 = vunpack.c.h.b16 %v398
  %v563 = vunpack.c.l.b16 %v399
  %v564 = vunpack.c.h.b16 %v399
  %v565 = vunpack.c.l.b16 %v400
  %v566 = vunpack.c.h.b16 %v400
  %v567 = vunpack.c.l.b16 %v401
  %v568 = vunpack.c.h.b16 %v401
  %v569 = vunpack.c.l.b16 %v402
  %v570 = vunpack.c.h.b16 %v402
  %v571 = vunpack.c.l.b16 %v403
  %v572 = vunpack.c.h.b16 %v403
  %v573 = vunpack.c.l.b16 %v404
  %v574 = vunpack.c.h.b16 %v404
  %v575 = vunpack.c.l.b16 %v405
  %v576 = vunpack.c.h.b16 %v405
  %v577 = vunpack.c.l.b16 %v406
  %v578 = vunpack.c.h.b16 %v406
  %v579 = vunpack.c.l.b16 %v407
  %v580 = vunpack.c.h.b16 %v407
  %v581 = vunpack.c.l.b16 %v408
  %v582 = vunpack.c.h.b16 %v408
  %v583 = vunpack.c.l.b16 %v409
  %v584 = vunpack.c.h.b16 %v409
  %v585 = vunpack.c.l.b16 %v410
  %v586 = vunpack.c.h.b16 %v410
  %v587 = vunpack.c.l.b16 %v411
  %v588 = vunpack.c.h.b16 %v411
  %v589 = vunpack.c.l.b16 %v412
  %v590 = vunpack.c.h.b16 %v412
  %v591 = vunpack.c.l.b16 %v413
  %v592 = vunpack.c.h.b16 %v413
  %v593 = vunpack.c.l.b16 %v414
  %v594 = vunpack.c.h.b16 %v414
  %v595 = vunpack.c.l.b16 %v415
  %v596 = vunpack.c.h.b16 %v415
  %v597 = vpack.c.b16 %v549, %v533
  %v598 = vpack.c.b16 %v550, %v534
  %v599 = vpack.c.b16 %v551, %v535
  %v600 = vpack.c.b16 %v552, %v536
  %v601 = vpack.c.b16 %v553, %v537
  %v602 = vpack.c.b16 %v554, %v538
  %v603 = vpack.c.b16 %v555, %v539
  %v604 = vpack.c.b16 %v556, %v540
  %v605 = vpack.c.b16 %v557, %v541
  %v606 = vpack.c.b16 %v558, %v542
  %v607 = vpack.c.b16 %v559, %v543
  %v608 = vpack.c.b16 %v560, %v544
  %v609 = vpack.c.b16 %v561, %v545
  %v610 = vpack.c.b16 %v562, %v546
  %v611 = vpack.c.b16 %v563, %v547
  %v612 = vpack.c.b16 %v564, %v548
  %v613 = vpack.c.b16 %v581, %v565
  %v614 = vpack.c.b16 %v582, %v566
  %v615 = vpack.c.b16 %v583, %v567
  %v616 = vpack.c.b16 %v584, %v568
  %v617 = vpack.c.b16 %v585, %v569
  %v618 = vpack.c.b16 %v586, %v570
  %v619 = vpack.c.b16 %v587, %v571
  %v620 = vpack.c.b16 %v588, %v572
  %v621 = vpack.c.b16 %v589, %v573
  %v622 = vpack.c.b16 %v590, %v574
  %v623 = vpack.c.b16 %v591, %v575
  %v624 = vpack.c.b16 %v592, %v576
  %v625 = vpack.c.b16 %v593, %v577
  %v626 = vpack.c.b16 %v594, %v578
  %v627 = vpack.c.b16 %v595, %v579
  %v628 = vpack.c.b16 %v596, %v580
  %v662 = vsel %vm250, %v380, 0
  %v665 = vsel %vm250, %v381, 0
  %v668 = vsel %vm250, %v382, 0
  %v671 = vsel %vm250, %v383, 0
  %673 = vmatprep.subr.bf16.mxu0 %v598
  %674 = vmatpush1.bf16.msra.mxu0 %v597
  %675 = vmatprep.subr.bf16.mxu0 %v614
  %676 = vmatpush1.bf16.msra.mxu0 %v613
  %677 = vmatprep.subr.bf16.mxu0 0
  %678 = vmatpush1.bf16.msra.mxu0 0
  %679 = vmatprep.subr.bf16.mxu0 0
  %680 = vmatpush1.bf16.msra.mxu0 0
  %681 = vmatprep.subr.bf16.mxu0 0
  %682 = vmatpush1.bf16.msra.mxu0 0
  %683 = vmatprep.subr.bf16.mxu0 0
  %684 = vmatpush1.bf16.msra.mxu0 0
  %685 = vmatprep.subr.bf16.mxu0 0
  %686 = vmatpush1.bf16.msra.mxu0 0
  %687 = vmatprep.subr.bf16.mxu0 0
  %688 = vmatpush1.bf16.msra.mxu0 0
  %689 = vmatprep.subr.bf16.mxu0 0
  %690 = vmatpush1.bf16.msra.mxu0 0
  %691 = vmatprep.subr.bf16.mxu0 0
  %692 = vmatpush1.bf16.msra.mxu0 0
  %693 = vmatprep.subr.bf16.mxu0 0
  %694 = vmatpush1.bf16.msra.mxu0 0
  %695 = vmatprep.subr.bf16.mxu0 0
  %696 = vmatpush1.bf16.msra.mxu0 0
  %697 = vmatprep.subr.bf16.mxu0 0
  %698 = vmatpush1.bf16.msra.mxu0 0
  %699 = vmatprep.subr.bf16.mxu0 0
  %700 = vmatpush1.bf16.msra.mxu0 0
  %701 = vmatprep.subr.bf16.mxu0 0
  %702 = vmatpush1.bf16.msra.mxu0 0
  %703 = vmatprep.subr.bf16.mxu0 0
  %704 = vmatpush1.bf16.msra.mxu0 0
  %705 = vmatprep.mubr.bf16.mxu0 0
  %706 = vmatmul.mubr.bf16.gmra.mrb[0].mxu0 %v662
  %v707 = vpop.f32.mrb[0].mxu0
  %v708 = vadd.f32 %v424, %v707
  %v709 = vpop.f32.mrb[0].mxu0
  %v710 = vadd.f32 %v428, %v709
  %v711 = vpop.f32.mrb[0].mxu0
  %v712 = vadd.f32 %v424, %v711
  %v713 = vpop.f32.mrb[0].mxu0
  %v714 = vadd.f32 %v428, %v713
  %715 = vmatprep.mubr.bf16.mxu0 0
  %716 = vmatmul.mubr.bf16.gmra.mrb[0].mxu0 %v665
  %v717 = vpop.f32.mrb[0].mxu0
  %v718 = vadd.f32 %v424, %v717
  %v719 = vpop.f32.mrb[0].mxu0
  %v720 = vadd.f32 %v428, %v719
  %v721 = vpop.f32.mrb[0].mxu0
  %v722 = vadd.f32 %v424, %v721
  %v723 = vpop.f32.mrb[0].mxu0
  %v724 = vadd.f32 %v428, %v723
  %725 = vmatprep.mubr.bf16.mxu0 0
  %726 = vmatmul.mubr.bf16.gmra.mrb[0].mxu0 %v668
  %v727 = vpop.f32.mrb[0].mxu0
  %v728 = vadd.f32 %v424, %v727
  %v729 = vpop.f32.mrb[0].mxu0
  %v730 = vadd.f32 %v428, %v729
  %v731 = vpop.f32.mrb[0].mxu0
  %v732 = vadd.f32 %v424, %v731
  %v733 = vpop.f32.mrb[0].mxu0
  %v734 = vadd.f32 %v428, %v733
  %735 = vmatprep.mubr.bf16.mxu0 0
  %736 = vmatmul.mubr.bf16.gmra.mrb[0].mxu0 %v671
  %v737 = vpop.f32.mrb[0].mxu0
  %v738 = vadd.f32 %v424, %v737
  %v739 = vpop.f32.mrb[0].mxu0
  %v740 = vadd.f32 %v428, %v739
  %v741 = vpop.f32.mrb[0].mxu0
  %v742 = vadd.f32 %v424, %v741
  %v743 = vpop.f32.mrb[0].mxu0
  %v744 = vadd.f32 %v428, %v743
  %745 = vdwg.mxu0
  %746 = vmatprep.subr.bf16.mxu0 %v600
  %747 = vmatpush1.bf16.msra.mxu0 %v599
  %748 = vmatprep.subr.bf16.mxu0 %v616
  %749 = vmatpush1.bf16.msra.mxu0 %v615
  %750 = vmatprep.subr.bf16.mxu0 0
  %751 = vmatpush1.bf16.msra.mxu0 0
  %752 = vmatprep.subr.bf16.mxu0 0
  %753 = vmatpush1.bf16.msra.mxu0 0
  %754 = vmatprep.subr.bf16.mxu0 0
  %755 = vmatpush1.bf16.msra.mxu0 0
  %756 = vmatprep.subr.bf16.mxu0 0
  %757 = vmatpush1.bf16.msra.mxu0 0
  %758 = vmatprep.subr.bf16.mxu0 0
  %759 = vmatpush1.bf16.msra.mxu0 0
  %760 = vmatprep.subr.bf16.mxu0 0
  %761 = vmatpush1.bf16.msra.mxu0 0
  %762 = vmatprep.subr.bf16.mxu0 0
  %763 = vmatpush1.bf16.msra.mxu0 0
  %764 = vmatprep.subr.bf16.mxu0 0
  %765 = vmatpush1.bf16.msra.mxu0 0
  %766 = vmatprep.subr.bf16.mxu0 0
  %767 = vmatpush1.bf16.msra.mxu0 0
  %768 = vmatprep.subr.bf16.mxu0 0
  %769 = vmatpush1.bf16.msra.mxu0 0
  %770 = vmatprep.subr.bf16.mxu0 0
  %771 = vmatpush1.bf16.msra.mxu0 0
  %772 = vmatprep.subr.bf16.mxu0 0
  %773 = vmatpush1.bf16.msra.mxu0 0
  %774 = vmatprep.subr.bf16.mxu0 0
  %775 = vmatpush1.bf16.msra.mxu0 0
  %776 = vmatprep.subr.bf16.mxu0 0
  %777 = vmatpush1.bf16.msra.mxu0 0
  %778 = vmatprep.mubr.bf16.mxu0 0
  %779 = vmatmul.mubr.bf16.gmra.mrb[0].mxu0 %v662
  %v780 = vpop.f32.mrb[0].mxu0
  %v781 = vadd.f32 %v432, %v780
  %v782 = vpop.f32.mrb[0].mxu0
  %v783 = vadd.f32 %v436, %v782
  %v784 = vpop.f32.mrb[0].mxu0
  %v785 = vadd.f32 %v432, %v784
  %v786 = vpop.f32.mrb[0].mxu0
  %v787 = vadd.f32 %v436, %v786
  %788 = vmatprep.mubr.bf16.mxu0 0
  %789 = vmatmul.mubr.bf16.gmra.mrb[0].mxu0 %v665
  %v790 = vpop.f32.mrb[0].mxu0
  %v791 = vadd.f32 %v432, %v790
  %v792 = vpop.f32.mrb[0].mxu0
  %v793 = vadd.f32 %v436, %v792
  %v794 = vpop.f32.mrb[0].mxu0
  %v795 = vadd.f32 %v432, %v794
  %v796 = vpop.f32.mrb[0].mxu0
  %v797 = vadd.f32 %v436, %v796
  %798 = vmatprep.mubr.bf16.mxu0 0
  %799 = vmatmul.mubr.bf16.gmra.mrb[0].mxu0 %v668
  %v800 = vpop.f32.mrb[0].mxu0
  %v801 = vadd.f32 %v432, %v800
  %v802 = vpop.f32.mrb[0].mxu0
  %v803 = vadd.f32 %v436, %v802
  %v804 = vpop.f32.mrb[0].mxu0
  %v805 = vadd.f32 %v432, %v804
  %v806 = vpop.f32.mrb[0].mxu0
  %v807 = vadd.f32 %v436, %v806
  %808 = vmatprep.mubr.bf16.mxu0 0
  %809 = vmatmul.mubr.bf16.gmra.mrb[0].mxu0 %v671
  %v810 = vpop.f32.mrb[0].mxu0
  %v811 = vadd.f32 %v432, %v810
  %v812 = vpop.f32.mrb[0].mxu0
  %v813 = vadd.f32 %v436, %v812
  %v814 = vpop.f32.mrb[0].mxu0
  %v815 = vadd.f32 %v432, %v814
  %v816 = vpop.f32.mrb[0].mxu0
  %v817 = vadd.f32 %v436, %v816
  %818 = vdwg.mxu0
  %819 = vmatprep.subr.bf16.mxu0 %v602
  %820 = vmatpush1.bf16.msra.mxu0 %v601
  %821 = vmatprep.subr.bf16.mxu0 %v618
  %822 = vmatpush1.bf16.msra.mxu0 %v617
  %823 = vmatprep.subr.bf16.mxu0 0
  %824 = vmatpush1.bf16.msra.mxu0 0
  %825 = vmatprep.subr.bf16.mxu0 0
  %826 = vmatpush1.bf16.msra.mxu0 0
  %827 = vmatprep.subr.bf16.mxu0 0
  %828 = vmatpush1.bf16.msra.mxu0 0
  %829 = vmatprep.subr.bf16.mxu0 0
  %830 = vmatpush1.bf16.msra.mxu0 0
  %831 = vmatprep.subr.bf16.mxu0 0
  %832 = vmatpush1.bf16.msra.mxu0 0
  %833 = vmatprep.subr.bf16.mxu0 0
  %834 = vmatpush1.bf16.msra.mxu0 0
  %835 = vmatprep.subr.bf16.mxu0 0
  %836 = vmatpush1.bf16.msra.mxu0 0
  %837 = vmatprep.subr.bf16.mxu0 0
  %838 = vmatpush1.bf16.msra.mxu0 0
  %839 = vmatprep.subr.bf16.mxu0 0
  %840 = vmatpush1.bf16.msra.mxu0 0
  %841 = vmatprep.subr.bf16.mxu0 0
  %842 = vmatpush1.bf16.msra.mxu0 0
  %843 = vmatprep.subr.bf16.mxu0 0
  %844 = vmatpush1.bf16.msra.mxu0 0
  %845 = vmatprep.subr.bf16.mxu0 0
  %846 = vmatpush1.bf16.msra.mxu0 0
  %847 = vmatprep.subr.bf16.mxu0 0
  %848 = vmatpush1.bf16.msra.mxu0 0
  %849 = vmatprep.subr.bf16.mxu0 0
  %850 = vmatpush1.bf16.msra.mxu0 0
  %851 = vmatprep.mubr.bf16.mxu0 0
  %852 = vmatmul.mubr.bf16.gmra.mrb[0].mxu0 %v662
  %v853 = vpop.f32.mrb[0].mxu0
  %v854 = vadd.f32 %v440, %v853
  %v855 = vpop.f32.mrb[0].mxu0
  %v856 = vadd.f32 %v444, %v855
  %v857 = vpop.f32.mrb[0].mxu0
  %v858 = vadd.f32 %v440, %v857
  %v859 = vpop.f32.mrb[0].mxu0
  %v860 = vadd.f32 %v444, %v859
  %861 = vmatprep.mubr.bf16.mxu0 0
  %862 = vmatmul.mubr.bf16.gmra.mrb[0].mxu0 %v665
  %v863 = vpop.f32.mrb[0].mxu0
  %v864 = vadd.f32 %v440, %v863
  %v865 = vpop.f32.mrb[0].mxu0
  %v866 = vadd.f32 %v444, %v865
  %v867 = vpop.f32.mrb[0].mxu0
  %v868 = vadd.f32 %v440, %v867
  %v869 = vpop.f32.mrb[0].mxu0
  %v870 = vadd.f32 %v444, %v869
  %871 = vmatprep.mubr.bf16.mxu0 0
  %872 = vmatmul.mubr.bf16.gmra.mrb[0].mxu0 %v668
  %v873 = vpop.f32.mrb[0].mxu0
  %v874 = vadd.f32 %v440, %v873
  %v875 = vpop.f32.mrb[0].mxu0
  %v876 = vadd.f32 %v444, %v875
  %v877 = vpop.f32.mrb[0].mxu0
  %v878 = vadd.f32 %v440, %v877
  %v879 = vpop.f32.mrb[0].mxu0
  %v880 = vadd.f32 %v444, %v879
  %881 = vmatprep.mubr.bf16.mxu0 0
  %882 = vmatmul.mubr.bf16.gmra.mrb[0].mxu0 %v671
  %v883 = vpop.f32.mrb[0].mxu0
  %v884 = vadd.f32 %v440, %v883
  %v885 = vpop.f32.mrb[0].mxu0
  %v886 = vadd.f32 %v444, %v885
  %v887 = vpop.f32.mrb[0].mxu0
  %v888 = vadd.f32 %v440, %v887
  %v889 = vpop.f32.mrb[0].mxu0
  %v890 = vadd.f32 %v444, %v889
  %891 = vdwg.mxu0
  %892 = vmatprep.subr.bf16.mxu0 %v604
  %893 = vmatpush1.bf16.msra.mxu0 %v603
  %894 = vmatprep.subr.bf16.mxu0 %v620
  %895 = vmatpush1.bf16.msra.mxu0 %v619
  %896 = vmatprep.subr.bf16.mxu0 0
  %897 = vmatpush1.bf16.msra.mxu0 0
  %898 = vmatprep.subr.bf16.mxu0 0
  %899 = vmatpush1.bf16.msra.mxu0 0
  %900 = vmatprep.subr.bf16.mxu0 0
  %901 = vmatpush1.bf16.msra.mxu0 0
  %902 = vmatprep.subr.bf16.mxu0 0
  %903 = vmatpush1.bf16.msra.mxu0 0
  %904 = vmatprep.subr.bf16.mxu0 0
  %905 = vmatpush1.bf16.msra.mxu0 0
  %906 = vmatprep.subr.bf16.mxu0 0
  %907 = vmatpush1.bf16.msra.mxu0 0
  %908 = vmatprep.subr.bf16.mxu0 0
  %909 = vmatpush1.bf16.msra.mxu0 0
  %910 = vmatprep.subr.bf16.mxu0 0
  %911 = vmatpush1.bf16.msra.mxu0 0
  %912 = vmatprep.subr.bf16.mxu0 0
  %913 = vmatpush1.bf16.msra.mxu0 0
  %914 = vmatprep.subr.bf16.mxu0 0
  %915 = vmatpush1.bf16.msra.mxu0 0
  %916 = vmatprep.subr.bf16.mxu0 0
  %917 = vmatpush1.bf16.msra.mxu0 0
  %918 = vmatprep.subr.bf16.mxu0 0
  %919 = vmatpush1.bf16.msra.mxu0 0
  %920 = vmatprep.subr.bf16.mxu0 0
  %921 = vmatpush1.bf16.msra.mxu0 0
  %922 = vmatprep.subr.bf16.mxu0 0
  %923 = vmatpush1.bf16.msra.mxu0 0
  %924 = vmatprep.mubr.bf16.mxu0 0
  %925 = vmatmul.mubr.bf16.gmra.mrb[0].mxu0 %v662
  %v926 = vpop.f32.mrb[0].mxu0
  %v927 = vadd.f32 %v448, %v926
  %v928 = vpop.f32.mrb[0].mxu0
  %v929 = vadd.f32 %v452, %v928
  %v930 = vpop.f32.mrb[0].mxu0
  %v931 = vadd.f32 %v448, %v930
  %v932 = vpop.f32.mrb[0].mxu0
  %v933 = vadd.f32 %v452, %v932
  %934 = vmatprep.mubr.bf16.mxu0 0
  %935 = vmatmul.mubr.bf16.gmra.mrb[0].mxu0 %v665
  %v936 = vpop.f32.mrb[0].mxu0
  %v937 = vadd.f32 %v448, %v936
  %v938 = vpop.f32.mrb[0].mxu0
  %v939 = vadd.f32 %v452, %v938
  %v940 = vpop.f32.mrb[0].mxu0
  %v941 = vadd.f32 %v448, %v940
  %v942 = vpop.f32.mrb[0].mxu0
  %v943 = vadd.f32 %v452, %v942
  %944 = vmatprep.mubr.bf16.mxu0 0
  %945 = vmatmul.mubr.bf16.gmra.mrb[0].mxu0 %v668
  %v946 = vpop.f32.mrb[0].mxu0
  %v947 = vadd.f32 %v448, %v946
  %v948 = vpop.f32.mrb[0].mxu0
  %v949 = vadd.f32 %v452, %v948
  %v950 = vpop.f32.mrb[0].mxu0
  %v951 = vadd.f32 %v448, %v950
  %v952 = vpop.f32.mrb[0].mxu0
  %v953 = vadd.f32 %v452, %v952
  %954 = vmatprep.mubr.bf16.mxu0 0
  %955 = vmatmul.mubr.bf16.gmra.mrb[0].mxu0 %v671
  %v956 = vpop.f32.mrb[0].mxu0
  %v957 = vadd.f32 %v448, %v956
  %v958 = vpop.f32.mrb[0].mxu0
  %v959 = vadd.f32 %v452, %v958
  %v960 = vpop.f32.mrb[0].mxu0
  %v961 = vadd.f32 %v448, %v960
  %v962 = vpop.f32.mrb[0].mxu0
  %v963 = vadd.f32 %v452, %v962
  %964 = vdwg.mxu0
  %965 = vmatprep.subr.bf16.mxu0 %v606
  %966 = vmatpush1.bf16.msra.mxu0 %v605
  %967 = vmatprep.subr.bf16.mxu0 %v622
  %968 = vmatpush1.bf16.msra.mxu0 %v621
  %969 = vmatprep.subr.bf16.mxu0 0
  %970 = vmatpush1.bf16.msra.mxu0 0
  %971 = vmatprep.subr.bf16.mxu0 0
  %972 = vmatpush1.bf16.msra.mxu0 0
  %973 = vmatprep.subr.bf16.mxu0 0
  %974 = vmatpush1.bf16.msra.mxu0 0
  %975 = vmatprep.subr.bf16.mxu0 0
  %976 = vmatpush1.bf16.msra.mxu0 0
  %977 = vmatprep.subr.bf16.mxu0 0
  %978 = vmatpush1.bf16.msra.mxu0 0
  %979 = vmatprep.subr.bf16.mxu0 0
  %980 = vmatpush1.bf16.msra.mxu0 0
  %981 = vmatprep.subr.bf16.mxu0 0
  %982 = vmatpush1.bf16.msra.mxu0 0
  %983 = vmatprep.subr.bf16.mxu0 0
  %984 = vmatpush1.bf16.msra.mxu0 0
  %985 = vmatprep.subr.bf16.mxu0 0
  %986 = vmatpush1.bf16.msra.mxu0 0
  %987 = vmatprep.subr.bf16.mxu0 0
  %988 = vmatpush1.bf16.msra.mxu0 0
  %989 = vmatprep.subr.bf16.mxu0 0
  %990 = vmatpush1.bf16.msra.mxu0 0
  %991 = vmatprep.subr.bf16.mxu0 0
  %992 = vmatpush1.bf16.msra.mxu0 0
  %993 = vmatprep.subr.bf16.mxu0 0
  %994 = vmatpush1.bf16.msra.mxu0 0
  %995 = vmatprep.subr.bf16.mxu0 0
  %996 = vmatpush1.bf16.msra.mxu0 0
  %997 = vmatprep.mubr.bf16.mxu0 0
  %998 = vmatmul.mubr.bf16.gmra.mrb[0].mxu0 %v662
  %v999 = vpop.f32.mrb[0].mxu0
  %v1000 = vadd.f32 %v456, %v999
  %v1001 = vpop.f32.mrb[0].mxu0
  %v1002 = vadd.f32 %v460, %v1001
  %v1003 = vpop.f32.mrb[0].mxu0
  %v1004 = vadd.f32 %v456, %v1003
  %v1005 = vpop.f32.mrb[0].mxu0
  %v1006 = vadd.f32 %v460, %v1005
  %1007 = vmatprep.mubr.bf16.mxu0 0
  %1008 = vmatmul.mubr.bf16.gmra.mrb[0].mxu0 %v665
  %v1009 = vpop.f32.mrb[0].mxu0
  %v1010 = vadd.f32 %v456, %v1009
  %v1011 = vpop.f32.mrb[0].mxu0
  %v1012 = vadd.f32 %v460, %v1011
  %v1013 = vpop.f32.mrb[0].mxu0
  %v1014 = vadd.f32 %v456, %v1013
  %v1015 = vpop.f32.mrb[0].mxu0
  %v1016 = vadd.f32 %v460, %v1015
  %1017 = vmatprep.mubr.bf16.mxu0 0
  %1018 = vmatmul.mubr.bf16.gmra.mrb[0].mxu0 %v668
  %v1019 = vpop.f32.mrb[0].mxu0
  %v1020 = vadd.f32 %v456, %v1019
  %v1021 = vpop.f32.mrb[0].mxu0
  %v1022 = vadd.f32 %v460, %v1021
  %v1023 = vpop.f32.mrb[0].mxu0
  %v1024 = vadd.f32 %v456, %v1023
  %v1025 = vpop.f32.mrb[0].mxu0
  %v1026 = vadd.f32 %v460, %v1025
  %1027 = vmatprep.mubr.bf16.mxu0 0
  %1028 = vmatmul.mubr.bf16.gmra.mrb[0].mxu0 %v671
  %v1029 = vpop.f32.mrb[0].mxu0
  %v1030 = vadd.f32 %v456, %v1029
  %v1031 = vpop.f32.mrb[0].mxu0
  %v1032 = vadd.f32 %v460, %v1031
  %v1033 = vpop.f32.mrb[0].mxu0
  %v1034 = vadd.f32 %v456, %v1033
  %v1035 = vpop.f32.mrb[0].mxu0
  %v1036 = vadd.f32 %v460, %v1035
  %1037 = vdwg.mxu0
  %1038 = vmatprep.subr.bf16.mxu0 %v608
  %1039 = vmatpush1.bf16.msra.mxu0 %v607
  %1040 = vmatprep.subr.bf16.mxu0 %v624
  %1041 = vmatpush1.bf16.msra.mxu0 %v623
  %1042 = vmatprep.subr.bf16.mxu0 0
  %1043 = vmatpush1.bf16.msra.mxu0 0
  %1044 = vmatprep.subr.bf16.mxu0 0
  %1045 = vmatpush1.bf16.msra.mxu0 0
  %1046 = vmatprep.subr.bf16.mxu0 0
  %1047 = vmatpush1.bf16.msra.mxu0 0
  %1048 = vmatprep.subr.bf16.mxu0 0
  %1049 = vmatpush1.bf16.msra.mxu0 0
  %1050 = vmatprep.subr.bf16.mxu0 0
  %1051 = vmatpush1.bf16.msra.mxu0 0
  %1052 = vmatprep.subr.bf16.mxu0 0
  %1053 = vmatpush1.bf16.msra.mxu0 0
  %1054 = vmatprep.subr.bf16.mxu0 0
  %1055 = vmatpush1.bf16.msra.mxu0 0
  %1056 = vmatprep.subr.bf16.mxu0 0
  %1057 = vmatpush1.bf16.msra.mxu0 0
  %1058 = vmatprep.subr.bf16.mxu0 0
  %1059 = vmatpush1.bf16.msra.mxu0 0
  %1060 = vmatprep.subr.bf16.mxu0 0
  %1061 = vmatpush1.bf16.msra.mxu0 0
  %1062 = vmatprep.subr.bf16.mxu0 0
  %1063 = vmatpush1.bf16.msra.mxu0 0
  %1064 = vmatprep.subr.bf16.mxu0 0
  %1065 = vmatpush1.bf16.msra.mxu0 0
  %1066 = vmatprep.subr.bf16.mxu0 0
  %1067 = vmatpush1.bf16.msra.mxu0 0
  %1068 = vmatprep.subr.bf16.mxu0 0
  %1069 = vmatpush1.bf16.msra.mxu0 0
  %1070 = vmatprep.mubr.bf16.mxu0 0
  %1071 = vmatmul.mubr.bf16.gmra.mrb[0].mxu0 %v662
  %v1072 = vpop.f32.mrb[0].mxu0
  %v1073 = vadd.f32 %v464, %v1072
  %v1074 = vpop.f32.mrb[0].mxu0
  %v1075 = vadd.f32 %v468, %v1074
  %v1076 = vpop.f32.mrb[0].mxu0
  %v1077 = vadd.f32 %v464, %v1076
  %v1078 = vpop.f32.mrb[0].mxu0
  %v1079 = vadd.f32 %v468, %v1078
  %1080 = vmatprep.mubr.bf16.mxu0 0
  %1081 = vmatmul.mubr.bf16.gmra.mrb[0].mxu0 %v665
  %v1082 = vpop.f32.mrb[0].mxu0
  %v1083 = vadd.f32 %v464, %v1082
  %v1084 = vpop.f32.mrb[0].mxu0
  %v1085 = vadd.f32 %v468, %v1084
  %v1086 = vpop.f32.mrb[0].mxu0
  %v1087 = vadd.f32 %v464, %v1086
  %v1088 = vpop.f32.mrb[0].mxu0
  %v1089 = vadd.f32 %v468, %v1088
  %1090 = vmatprep.mubr.bf16.mxu0 0
  %1091 = vmatmul.mubr.bf16.gmra.mrb[0].mxu0 %v668
  %v1092 = vpop.f32.mrb[0].mxu0
  %v1093 = vadd.f32 %v464, %v1092
  %v1094 = vpop.f32.mrb[0].mxu0
  %v1095 = vadd.f32 %v468, %v1094
  %v1096 = vpop.f32.mrb[0].mxu0
  %v1097 = vadd.f32 %v464, %v1096
  %v1098 = vpop.f32.mrb[0].mxu0
  %v1099 = vadd.f32 %v468, %v1098
  %1100 = vmatprep.mubr.bf16.mxu0 0
  %1101 = vmatmul.mubr.bf16.gmra.mrb[0].mxu0 %v671
  %v1102 = vpop.f32.mrb[0].mxu0
  %v1103 = vadd.f32 %v464, %v1102
  %v1104 = vpop.f32.mrb[0].mxu0
  %v1105 = vadd.f32 %v468, %v1104
  %v1106 = vpop.f32.mrb[0].mxu0
  %v1107 = vadd.f32 %v464, %v1106
  %v1108 = vpop.f32.mrb[0].mxu0
  %v1109 = vadd.f32 %v468, %v1108
  %1110 = vdwg.mxu0
  %1111 = vmatprep.subr.bf16.mxu0 %v610
  %1112 = vmatpush1.bf16.msra.mxu0 %v609
  %1113 = vmatprep.subr.bf16.mxu0 %v626
  %1114 = vmatpush1.bf16.msra.mxu0 %v625
  %1115 = vmatprep.subr.bf16.mxu0 0
  %1116 = vmatpush1.bf16.msra.mxu0 0
  %1117 = vmatprep.subr.bf16.mxu0 0
  %1118 = vmatpush1.bf16.msra.mxu0 0
  %1119 = vmatprep.subr.bf16.mxu0 0
  %1120 = vmatpush1.bf16.msra.mxu0 0
  %1121 = vmatprep.subr.bf16.mxu0 0
  %1122 = vmatpush1.bf16.msra.mxu0 0
  %1123 = vmatprep.subr.bf16.mxu0 0
  %1124 = vmatpush1.bf16.msra.mxu0 0
  %1125 = vmatprep.subr.bf16.mxu0 0
  %1126 = vmatpush1.bf16.msra.mxu0 0
  %1127 = vmatprep.subr.bf16.mxu0 0
  %1128 = vmatpush1.bf16.msra.mxu0 0
  %1129 = vmatprep.subr.bf16.mxu0 0
  %1130 = vmatpush1.bf16.msra.mxu0 0
  %1131 = vmatprep.subr.bf16.mxu0 0
  %1132 = vmatpush1.bf16.msra.mxu0 0
  %1133 = vmatprep.subr.bf16.mxu0 0
  %1134 = vmatpush1.bf16.msra.mxu0 0
  %1135 = vmatprep.subr.bf16.mxu0 0
  %1136 = vmatpush1.bf16.msra.mxu0 0
  %1137 = vmatprep.subr.bf16.mxu0 0
  %1138 = vmatpush1.bf16.msra.mxu0 0
  %1139 = vmatprep.subr.bf16.mxu0 0
  %1140 = vmatpush1.bf16.msra.mxu0 0
  %1141 = vmatprep.subr.bf16.mxu0 0
  %1142 = vmatpush1.bf16.msra.mxu0 0
  %1143 = vmatprep.mubr.bf16.mxu0 0
  %1144 = vmatmul.mubr.bf16.gmra.mrb[0].mxu0 %v662
  %v1145 = vpop.f32.mrb[0].mxu0
  %v1146 = vadd.f32 %v472, %v1145
  %v1147 = vpop.f32.mrb[0].mxu0
  %v1148 = vadd.f32 %v476, %v1147
  %v1149 = vpop.f32.mrb[0].mxu0
  %v1150 = vadd.f32 %v472, %v1149
  %v1151 = vpop.f32.mrb[0].mxu0
  %v1152 = vadd.f32 %v476, %v1151
  %1153 = vmatprep.mubr.bf16.mxu0 0
  %1154 = vmatmul.mubr.bf16.gmra.mrb[0].mxu0 %v665
  %v1155 = vpop.f32.mrb[0].mxu0
  %v1156 = vadd.f32 %v472, %v1155
  %v1157 = vpop.f32.mrb[0].mxu0
  %v1158 = vadd.f32 %v476, %v1157
  %v1159 = vpop.f32.mrb[0].mxu0
  %v1160 = vadd.f32 %v472, %v1159
  %v1161 = vpop.f32.mrb[0].mxu0
  %v1162 = vadd.f32 %v476, %v1161
  %1163 = vmatprep.mubr.bf16.mxu0 0
  %1164 = vmatmul.mubr.bf16.gmra.mrb[0].mxu0 %v668
  %v1165 = vpop.f32.mrb[0].mxu0
  %v1166 = vadd.f32 %v472, %v1165
  %v1167 = vpop.f32.mrb[0].mxu0
  %v1168 = vadd.f32 %v476, %v1167
  %v1169 = vpop.f32.mrb[0].mxu0
  %v1170 = vadd.f32 %v472, %v1169
  %v1171 = vpop.f32.mrb[0].mxu0
  %v1172 = vadd.f32 %v476, %v1171
  %1173 = vmatprep.mubr.bf16.mxu0 0
  %1174 = vmatmul.mubr.bf16.gmra.mrb[0].mxu0 %v671
  %v1175 = vpop.f32.mrb[0].mxu0
  %v1176 = vadd.f32 %v472, %v1175
  %v1177 = vpop.f32.mrb[0].mxu0
  %v1178 = vadd.f32 %v476, %v1177
  %v1179 = vpop.f32.mrb[0].mxu0
  %v1180 = vadd.f32 %v472, %v1179
  %v1181 = vpop.f32.mrb[0].mxu0
  %v1182 = vadd.f32 %v476, %v1181
  %1183 = vdwg.mxu0
  %1184 = vmatprep.subr.bf16.mxu0 %v612
  %1185 = vmatpush1.bf16.msra.mxu0 %v611
  %1186 = vmatprep.subr.bf16.mxu0 %v628
  %1187 = vmatpush1.bf16.msra.mxu0 %v627
  %1188 = vmatprep.subr.bf16.mxu0 0
  %1189 = vmatpush1.bf16.msra.mxu0 0
  %1190 = vmatprep.subr.bf16.mxu0 0
  %1191 = vmatpush1.bf16.msra.mxu0 0
  %1192 = vmatprep.subr.bf16.mxu0 0
  %1193 = vmatpush1.bf16.msra.mxu0 0
  %1194 = vmatprep.subr.bf16.mxu0 0
  %1195 = vmatpush1.bf16.msra.mxu0 0
  %1196 = vmatprep.subr.bf16.mxu0 0
  %1197 = vmatpush1.bf16.msra.mxu0 0
  %1198 = vmatprep.subr.bf16.mxu0 0
  %1199 = vmatpush1.bf16.msra.mxu0 0
  %1200 = vmatprep.subr.bf16.mxu0 0
  %1201 = vmatpush1.bf16.msra.mxu0 0
  %1202 = vmatprep.subr.bf16.mxu0 0
  %1203 = vmatpush1.bf16.msra.mxu0 0
  %1204 = vmatprep.subr.bf16.mxu0 0
  %1205 = vmatpush1.bf16.msra.mxu0 0
  %1206 = vmatprep.subr.bf16.mxu0 0
  %1207 = vmatpush1.bf16.msra.mxu0 0
  %1208 = vmatprep.subr.bf16.mxu0 0
  %1209 = vmatpush1.bf16.msra.mxu0 0
  %1210 = vmatprep.subr.bf16.mxu0 0
  %1211 = vmatpush1.bf16.msra.mxu0 0
  %1212 = vmatprep.subr.bf16.mxu0 0
  %1213 = vmatpush1.bf16.msra.mxu0 0
  %1214 = vmatprep.subr.bf16.mxu0 0
  %1215 = vmatpush1.bf16.msra.mxu0 0
  %1216 = vmatprep.mubr.bf16.mxu0 0
  %1217 = vmatmul.mubr.bf16.gmra.mrb[0].mxu0 %v662
  %v1218 = vpop.f32.mrb[0].mxu0
  %v1219 = vadd.f32 %v480, %v1218
  %v1220 = vpop.f32.mrb[0].mxu0
  %v1221 = vadd.f32 %v484, %v1220
  %v1222 = vpop.f32.mrb[0].mxu0
  %v1223 = vadd.f32 %v480, %v1222
  %v1224 = vpop.f32.mrb[0].mxu0
  %v1225 = vadd.f32 %v484, %v1224
  %1226 = vmatprep.mubr.bf16.mxu0 0
  %1227 = vmatmul.mubr.bf16.gmra.mrb[0].mxu0 %v665
  %v1228 = vpop.f32.mrb[0].mxu0
  %v1229 = vadd.f32 %v480, %v1228
  %v1230 = vpop.f32.mrb[0].mxu0
  %v1231 = vadd.f32 %v484, %v1230
  %v1232 = vpop.f32.mrb[0].mxu0
  %v1233 = vadd.f32 %v480, %v1232
  %v1234 = vpop.f32.mrb[0].mxu0
  %v1235 = vadd.f32 %v484, %v1234
  %1236 = vmatprep.mubr.bf16.mxu0 0
  %1237 = vmatmul.mubr.bf16.gmra.mrb[0].mxu0 %v668
  %v1238 = vpop.f32.mrb[0].mxu0
  %v1239 = vadd.f32 %v480, %v1238
  %v1240 = vpop.f32.mrb[0].mxu0
  %v1241 = vadd.f32 %v484, %v1240
  %v1242 = vpop.f32.mrb[0].mxu0
  %v1243 = vadd.f32 %v480, %v1242
  %v1244 = vpop.f32.mrb[0].mxu0
  %v1245 = vadd.f32 %v484, %v1244
  %1246 = vmatprep.mubr.bf16.mxu0 0
  %1247 = vmatmul.mubr.bf16.gmra.mrb[0].mxu0 %v671
  %v1248 = vpop.f32.mrb[0].mxu0
  %v1249 = vadd.f32 %v480, %v1248
  %v1250 = vpop.f32.mrb[0].mxu0
  %v1251 = vadd.f32 %v484, %v1250
  %v1252 = vpop.f32.mrb[0].mxu0
  %v1253 = vadd.f32 %v480, %v1252
  %v1254 = vpop.f32.mrb[0].mxu0
  %v1255 = vadd.f32 %v484, %v1254
  %1256 = vdwg.mxu0
  %v1257 = vmax.f32 %v708, 0.0
  %v1258 = vmax.f32 %v710, 0.0
  %v1259 = vmax.f32 %v781, 0.0
  %v1260 = vmax.f32 %v783, 0.0
  %v1261 = vmax.f32 %v854, 0.0
  %v1262 = vmax.f32 %v856, 0.0
  %v1263 = vmax.f32 %v927, 0.0
  %v1264 = vmax.f32 %v929, 0.0
  %v1265 = vmax.f32 %v1000, 0.0
  %v1266 = vmax.f32 %v1002, 0.0
  %v1267 = vmax.f32 %v1073, 0.0
  %v1268 = vmax.f32 %v1075, 0.0
  %v1269 = vmax.f32 %v1146, 0.0
  %v1270 = vmax.f32 %v1148, 0.0
  %v1271 = vmax.f32 %v1219, 0.0
  %v1272 = vmax.f32 %v1221, 0.0
  %v1273 = vmax.f32 %v712, 0.0
  %v1274 = vmax.f32 %v714, 0.0
  %v1275 = vmax.f32 %v785, 0.0
  %v1276 = vmax.f32 %v787, 0.0
  %v1277 = vmax.f32 %v858, 0.0
  %v1278 = vmax.f32 %v860, 0.0
  %v1279 = vmax.f32 %v931, 0.0
  %v1280 = vmax.f32 %v933, 0.0
  %v1281 = vmax.f32 %v1004, 0.0
  %v1282 = vmax.f32 %v1006, 0.0
  %v1283 = vmax.f32 %v1077, 0.0
  %v1284 = vmax.f32 %v1079, 0.0
  %v1285 = vmax.f32 %v1150, 0.0
  %v1286 = vmax.f32 %v1152, 0.0
  %v1287 = vmax.f32 %v1223, 0.0
  %v1288 = vmax.f32 %v1225, 0.0
  %v1289 = vmax.f32 %v718, 0.0
  %v1290 = vmax.f32 %v720, 0.0
  %v1291 = vmax.f32 %v791, 0.0
  %v1292 = vmax.f32 %v793, 0.0
  %v1293 = vmax.f32 %v864, 0.0
  %v1294 = vmax.f32 %v866, 0.0
  %v1295 = vmax.f32 %v937, 0.0
  %v1296 = vmax.f32 %v939, 0.0
  %v1297 = vmax.f32 %v1010, 0.0
  %v1298 = vmax.f32 %v1012, 0.0
  %v1299 = vmax.f32 %v1083, 0.0
  %v1300 = vmax.f32 %v1085, 0.0
  %v1301 = vmax.f32 %v1156, 0.0
  %v1302 = vmax.f32 %v1158, 0.0
  %v1303 = vmax.f32 %v1229, 0.0
  %v1304 = vmax.f32 %v1231, 0.0
  %v1305 = vmax.f32 %v722, 0.0
  %v1306 = vmax.f32 %v724, 0.0
  %v1307 = vmax.f32 %v795, 0.0
  %v1308 = vmax.f32 %v797, 0.0
  %v1309 = vmax.f32 %v868, 0.0
  %v1310 = vmax.f32 %v870, 0.0
  %v1311 = vmax.f32 %v941, 0.0
  %v1312 = vmax.f32 %v943, 0.0
  %v1313 = vmax.f32 %v1014, 0.0
  %v1314 = vmax.f32 %v1016, 0.0
  %v1315 = vmax.f32 %v1087, 0.0
  %v1316 = vmax.f32 %v1089, 0.0
  %v1317 = vmax.f32 %v1160, 0.0
  %v1318 = vmax.f32 %v1162, 0.0
  %v1319 = vmax.f32 %v1233, 0.0
  %v1320 = vmax.f32 %v1235, 0.0
  %v1321 = vmax.f32 %v728, 0.0
  %v1322 = vmax.f32 %v730, 0.0
  %v1323 = vmax.f32 %v801, 0.0
  %v1324 = vmax.f32 %v803, 0.0
  %v1325 = vmax.f32 %v874, 0.0
  %v1326 = vmax.f32 %v876, 0.0
  %v1327 = vmax.f32 %v947, 0.0
  %v1328 = vmax.f32 %v949, 0.0
  %v1329 = vmax.f32 %v1020, 0.0
  %v1330 = vmax.f32 %v1022, 0.0
  %v1331 = vmax.f32 %v1093, 0.0
  %v1332 = vmax.f32 %v1095, 0.0
  %v1333 = vmax.f32 %v1166, 0.0
  %v1334 = vmax.f32 %v1168, 0.0
  %v1335 = vmax.f32 %v1239, 0.0
  %v1336 = vmax.f32 %v1241, 0.0
  %v1337 = vmax.f32 %v732, 0.0
  %v1338 = vmax.f32 %v734, 0.0
  %v1339 = vmax.f32 %v805, 0.0
  %v1340 = vmax.f32 %v807, 0.0
  %v1341 = vmax.f32 %v878, 0.0
  %v1342 = vmax.f32 %v880, 0.0
  %v1343 = vmax.f32 %v951, 0.0
  %v1344 = vmax.f32 %v953, 0.0
  %v1345 = vmax.f32 %v1024, 0.0
  %v1346 = vmax.f32 %v1026, 0.0
  %v1347 = vmax.f32 %v1097, 0.0
  %v1348 = vmax.f32 %v1099, 0.0
  %v1349 = vmax.f32 %v1170, 0.0
  %v1350 = vmax.f32 %v1172, 0.0
  %v1351 = vmax.f32 %v1243, 0.0
  %v1352 = vmax.f32 %v1245, 0.0
  %v1353 = vmax.f32 %v738, 0.0
  %v1354 = vmax.f32 %v740, 0.0
  %v1355 = vmax.f32 %v811, 0.0
  %v1356 = vmax.f32 %v813, 0.0
  %v1357 = vmax.f32 %v884, 0.0
  %v1358 = vmax.f32 %v886, 0.0
  %v1359 = vmax.f32 %v957, 0.0
  %v1360 = vmax.f32 %v959, 0.0
  %v1361 = vmax.f32 %v1030, 0.0
  %v1362 = vmax.f32 %v1032, 0.0
  %v1363 = vmax.f32 %v1103, 0.0
  %v1364 = vmax.f32 %v1105, 0.0
  %v1365 = vmax.f32 %v1176, 0.0
  %v1366 = vmax.f32 %v1178, 0.0
  %v1367 = vmax.f32 %v1249, 0.0
  %v1368 = vmax.f32 %v1251, 0.0
  %v1369 = vmax.f32 %v742, 0.0
  %v1370 = vmax.f32 %v744, 0.0
  %v1371 = vmax.f32 %v815, 0.0
  %v1372 = vmax.f32 %v817, 0.0
  %v1373 = vmax.f32 %v888, 0.0
  %v1374 = vmax.f32 %v890, 0.0
  %v1375 = vmax.f32 %v961, 0.0
  %v1376 = vmax.f32 %v963, 0.0
  %v1377 = vmax.f32 %v1034, 0.0
  %v1378 = vmax.f32 %v1036, 0.0
  %v1379 = vmax.f32 %v1107, 0.0
  %v1380 = vmax.f32 %v1109, 0.0
  %v1381 = vmax.f32 %v1180, 0.0
  %v1382 = vmax.f32 %v1182, 0.0
  %v1383 = vmax.f32 %v1253, 0.0
  %v1384 = vmax.f32 %v1255, 0.0
  %v1385 = vpack.c.bf16 %v1273, %v1257
  %v1386 = vpack.c.bf16 %v1274, %v1258
  %v1387 = vpack.c.bf16 %v1275, %v1259
  %v1388 = vpack.c.bf16 %v1276, %v1260
  %v1389 = vpack.c.bf16 %v1277, %v1261
  %v1390 = vpack.c.bf16 %v1278, %v1262
  %v1391 = vpack.c.bf16 %v1279, %v1263
  %v1392 = vpack.c.bf16 %v1280, %v1264
  %v1393 = vpack.c.bf16 %v1281, %v1265
  %v1394 = vpack.c.bf16 %v1282, %v1266
  %v1395 = vpack.c.bf16 %v1283, %v1267
  %v1396 = vpack.c.bf16 %v1284, %v1268
  %v1397 = vpack.c.bf16 %v1285, %v1269
  %v1398 = vpack.c.bf16 %v1286, %v1270
  %v1399 = vpack.c.bf16 %v1287, %v1271
  %v1400 = vpack.c.bf16 %v1288, %v1272
  %v1401 = vpack.c.bf16 %v1305, %v1289
  %v1402 = vpack.c.bf16 %v1306, %v1290
  %v1403 = vpack.c.bf16 %v1307, %v1291
  %v1404 = vpack.c.bf16 %v1308, %v1292
  %v1405 = vpack.c.bf16 %v1309, %v1293
  %v1406 = vpack.c.bf16 %v1310, %v1294
  %v1407 = vpack.c.bf16 %v1311, %v1295
  %v1408 = vpack.c.bf16 %v1312, %v1296
  %v1409 = vpack.c.bf16 %v1313, %v1297
  %v1410 = vpack.c.bf16 %v1314, %v1298
  %v1411 = vpack.c.bf16 %v1315, %v1299
  %v1412 = vpack.c.bf16 %v1316, %v1300
  %v1413 = vpack.c.bf16 %v1317, %v1301
  %v1414 = vpack.c.bf16 %v1318, %v1302
  %v1415 = vpack.c.bf16 %v1319, %v1303
  %v1416 = vpack.c.bf16 %v1320, %v1304
  %v1417 = vpack.c.bf16 %v1337, %v1321
  %v1418 = vpack.c.bf16 %v1338, %v1322
  %v1419 = vpack.c.bf16 %v1339, %v1323
  %v1420 = vpack.c.bf16 %v1340, %v1324
  %v1421 = vpack.c.bf16 %v1341, %v1325
  %v1422 = vpack.c.bf16 %v1342, %v1326
  %v1423 = vpack.c.bf16 %v1343, %v1327
  %v1424 = vpack.c.bf16 %v1344, %v1328
  %v1425 = vpack.c.bf16 %v1345, %v1329
  %v1426 = vpack.c.bf16 %v1346, %v1330
  %v1427 = vpack.c.bf16 %v1347, %v1331
  %v1428 = vpack.c.bf16 %v1348, %v1332
  %v1429 = vpack.c.bf16 %v1349, %v1333
  %v1430 = vpack.c.bf16 %v1350, %v1334
  %v1431 = vpack.c.bf16 %v1351, %v1335
  %v1432 = vpack.c.bf16 %v1352, %v1336
  %v1433 = vpack.c.bf16 %v1369, %v1353
  %v1434 = vpack.c.bf16 %v1370, %v1354
  %v1435 = vpack.c.bf16 %v1371, %v1355
  %v1436 = vpack.c.bf16 %v1372, %v1356
  %v1437 = vpack.c.bf16 %v1373, %v1357
  %v1438 = vpack.c.bf16 %v1374, %v1358
  %v1439 = vpack.c.bf16 %v1375, %v1359
  %v1440 = vpack.c.bf16 %v1376, %v1360
  %v1441 = vpack.c.bf16 %v1377, %v1361
  %v1442 = vpack.c.bf16 %v1378, %v1362
  %v1443 = vpack.c.bf16 %v1379, %v1363
  %v1444 = vpack.c.bf16 %v1380, %v1364
  %v1445 = vpack.c.bf16 %v1381, %v1365
  %v1446 = vpack.c.bf16 %v1382, %v1366
  %v1447 = vpack.c.bf16 %v1383, %v1367
  %v1448 = vpack.c.bf16 %v1384, %v1368
  %v1449 = vld [vmem:[%s3] sm:$0xf]
  %v1450 = vld [vmem:[%s3 + $0x4] sm:$0xf]
  %v1451 = vld [vmem:[%s3 + $0x8] sm:$0xf]
  %v1452 = vld [vmem:[%s3 + $0xc] sm:$0xf]
  %v1453 = vld [vmem:[%s3 + $0x10] sm:$0xf]
  %v1454 = vld [vmem:[%s3 + $0x14] sm:$0xf]
  %v1455 = vld [vmem:[%s3 + $0x18] sm:$0xf]
  %v1456 = vld [vmem:[%s3 + $0x1c] sm:$0xf]
  %v1457 = vld [vmem:[%s3 + $0x20] sm:$0xf]
  %v1458 = vld [vmem:[%s3 + $0x24] sm:$0xf]
  %v1459 = vld [vmem:[%s3 + $0x28] sm:$0xf]
  %v1460 = vld [vmem:[%s3 + $0x2c] sm:$0xf]
  %v1461 = vld [vmem:[%s3 + $0x30] sm:$0xf]
  %v1462 = vld [vmem:[%s3 + $0x34] sm:$0xf]
  %v1463 = vld [vmem:[%s3 + $0x38] sm:$0xf]
  %v1464 = vld [vmem:[%s3 + $0x3c] sm:$0xf]
  %v1465 = vld [vmem:[%s3 + $0x40] sm:$0xf]
  %v1466 = vld [vmem:[%s3 + $0x44] sm:$0xf]
  %v1467 = vld [vmem:[%s3 + $0x48] sm:$0xf]
  %v1468 = vld [vmem:[%s3 + $0x4c] sm:$0xf]
  %v1469 = vld [vmem:[%s3 + $0x50] sm:$0xf]
  %v1470 = vld [vmem:[%s3 + $0x54] sm:$0xf]
  %v1471 = vld [vmem:[%s3 + $0x58] sm:$0xf]
  %v1472 = vld [vmem:[%s3 + $0x5c] sm:$0xf]
  %v1473 = vld [vmem:[%s3 + $0x60] sm:$0xf]
  %v1474 = vld [vmem:[%s3 + $0x64] sm:$0xf]
  %v1475 = vld [vmem:[%s3 + $0x68] sm:$0xf]
  %v1476 = vld [vmem:[%s3 + $0x6c] sm:$0xf]
  %v1477 = vld [vmem:[%s3 + $0x70] sm:$0xf]
  %v1478 = vld [vmem:[%s3 + $0x74] sm:$0xf]
  %v1479 = vld [vmem:[%s3 + $0x78] sm:$0xf]
  %v1480 = vld [vmem:[%s3 + $0x7c] sm:$0xf]
  %v1481 = vld [vmem:[%s3 + $0x80] sm:$0xf]
  %v1482 = vld [vmem:[%s3 + $0x84] sm:$0xf]
  %v1483 = vld [vmem:[%s3 + $0x88] sm:$0xf]
  %v1484 = vld [vmem:[%s3 + $0x8c] sm:$0xf]
  %v1485 = vld [vmem:[%s3 + $0x90] sm:$0xf]
  %v1486 = vld [vmem:[%s3 + $0x94] sm:$0xf]
  %v1487 = vld [vmem:[%s3 + $0x98] sm:$0xf]
  %v1488 = vld [vmem:[%s3 + $0x9c] sm:$0xf]
  %v1489 = vld [vmem:[%s3 + $0xa0] sm:$0xf]
  %v1490 = vld [vmem:[%s3 + $0xa4] sm:$0xf]
  %v1491 = vld [vmem:[%s3 + $0xa8] sm:$0xf]
  %v1492 = vld [vmem:[%s3 + $0xac] sm:$0xf]
  %v1493 = vld [vmem:[%s3 + $0xb0] sm:$0xf]
  %v1494 = vld [vmem:[%s3 + $0xb4] sm:$0xf]
  %v1495 = vld [vmem:[%s3 + $0xb8] sm:$0xf]
  %v1496 = vld [vmem:[%s3 + $0xbc] sm:$0xf]
  %v1497 = vld [vmem:[%s3 + $0xc0] sm:$0xf]
  %v1498 = vld [vmem:[%s3 + $0xc4] sm:$0xf]
  %v1499 = vld [vmem:[%s3 + $0xc8] sm:$0xf]
  %v1500 = vld [vmem:[%s3 + $0xcc] sm:$0xf]
  %v1501 = vld [vmem:[%s3 + $0xd0] sm:$0xf]
  %v1502 = vld [vmem:[%s3 + $0xd4] sm:$0xf]
  %v1503 = vld [vmem:[%s3 + $0xd8] sm:$0xf]
  %v1504 = vld [vmem:[%s3 + $0xdc] sm:$0xf]
  %v1505 = vld [vmem:[%s3 + $0xe0] sm:$0xf]
  %v1506 = vld [vmem:[%s3 + $0xe4] sm:$0xf]
  %v1507 = vld [vmem:[%s3 + $0xe8] sm:$0xf]
  %v1508 = vld [vmem:[%s3 + $0xec] sm:$0xf]
  %v1509 = vld [vmem:[%s3 + $0xf0] sm:$0xf]
  %v1510 = vld [vmem:[%s3 + $0xf4] sm:$0xf]
  %v1511 = vld [vmem:[%s3 + $0xf8] sm:$0xf]
  %v1512 = vld [vmem:[%s3 + $0xfc] sm:$0xf]
  %v1513 = vld [vmem:[%s3 + $0x100] sm:$0xf]
  %v1514 = vld [vmem:[%s3 + $0x104] sm:$0xf]
  %v1515 = vld [vmem:[%s3 + $0x108] sm:$0xf]
  %v1516 = vld [vmem:[%s3 + $0x10c] sm:$0xf]
  %v1517 = vld [vmem:[%s3 + $0x110] sm:$0xf]
  %v1518 = vld [vmem:[%s3 + $0x114] sm:$0xf]
  %v1519 = vld [vmem:[%s3 + $0x118] sm:$0xf]
  %v1520 = vld [vmem:[%s3 + $0x11c] sm:$0xf]
  %v1521 = vld [vmem:[%s3 + $0x120] sm:$0xf]
  %v1522 = vld [vmem:[%s3 + $0x124] sm:$0xf]
  %v1523 = vld [vmem:[%s3 + $0x128] sm:$0xf]
  %v1524 = vld [vmem:[%s3 + $0x12c] sm:$0xf]
  %v1525 = vld [vmem:[%s3 + $0x130] sm:$0xf]
  %v1526 = vld [vmem:[%s3 + $0x134] sm:$0xf]
  %v1527 = vld [vmem:[%s3 + $0x138] sm:$0xf]
  %v1528 = vld [vmem:[%s3 + $0x13c] sm:$0xf]
  %v1529 = vld [vmem:[%s3 + $0x140] sm:$0xf]
  %v1530 = vld [vmem:[%s3 + $0x144] sm:$0xf]
  %v1531 = vld [vmem:[%s3 + $0x148] sm:$0xf]
  %v1532 = vld [vmem:[%s3 + $0x14c] sm:$0xf]
  %v1533 = vld [vmem:[%s3 + $0x150] sm:$0xf]
  %v1534 = vld [vmem:[%s3 + $0x154] sm:$0xf]
  %v1535 = vld [vmem:[%s3 + $0x158] sm:$0xf]
  %v1536 = vld [vmem:[%s3 + $0x15c] sm:$0xf]
  %v1537 = vld [vmem:[%s3 + $0x160] sm:$0xf]
  %v1538 = vld [vmem:[%s3 + $0x164] sm:$0xf]
  %v1539 = vld [vmem:[%s3 + $0x168] sm:$0xf]
  %v1540 = vld [vmem:[%s3 + $0x16c] sm:$0xf]
  %v1541 = vld [vmem:[%s3 + $0x170] sm:$0xf]
  %v1542 = vld [vmem:[%s3 + $0x174] sm:$0xf]
  %v1543 = vld [vmem:[%s3 + $0x178] sm:$0xf]
  %v1544 = vld [vmem:[%s3 + $0x17c] sm:$0xf]
  %v1545 = vld [vmem:[%s3 + $0x180] sm:$0xf]
  %v1546 = vld [vmem:[%s3 + $0x184] sm:$0xf]
  %v1547 = vld [vmem:[%s3 + $0x188] sm:$0xf]
  %v1548 = vld [vmem:[%s3 + $0x18c] sm:$0xf]
  %v1549 = vld [vmem:[%s3 + $0x190] sm:$0xf]
  %v1550 = vld [vmem:[%s3 + $0x194] sm:$0xf]
  %v1551 = vld [vmem:[%s3 + $0x198] sm:$0xf]
  %v1552 = vld [vmem:[%s3 + $0x19c] sm:$0xf]
  %v1553 = vld [vmem:[%s3 + $0x1a0] sm:$0xf]
  %v1554 = vld [vmem:[%s3 + $0x1a4] sm:$0xf]
  %v1555 = vld [vmem:[%s3 + $0x1a8] sm:$0xf]
  %v1556 = vld [vmem:[%s3 + $0x1ac] sm:$0xf]
  %v1557 = vld [vmem:[%s3 + $0x1b0] sm:$0xf]
  %v1558 = vld [vmem:[%s3 + $0x1b4] sm:$0xf]
  %v1559 = vld [vmem:[%s3 + $0x1b8] sm:$0xf]
  %v1560 = vld [vmem:[%s3 + $0x1bc] sm:$0xf]
  %v1561 = vld [vmem:[%s3 + $0x1c0] sm:$0xf]
  %v1562 = vld [vmem:[%s3 + $0x1c4] sm:$0xf]
  %v1563 = vld [vmem:[%s3 + $0x1c8] sm:$0xf]
  %v1564 = vld [vmem:[%s3 + $0x1cc] sm:$0xf]
  %v1565 = vld [vmem:[%s3 + $0x1d0] sm:$0xf]
  %v1566 = vld [vmem:[%s3 + $0x1d4] sm:$0xf]
  %v1567 = vld [vmem:[%s3 + $0x1d8] sm:$0xf]
  %v1568 = vld [vmem:[%s3 + $0x1dc] sm:$0xf]
  %v1569 = vld [vmem:[%s3 + $0x1e0] sm:$0xf]
  %v1570 = vld [vmem:[%s3 + $0x1e4] sm:$0xf]
  %v1571 = vld [vmem:[%s3 + $0x1e8] sm:$0xf]
  %v1572 = vld [vmem:[%s3 + $0x1ec] sm:$0xf]
  %v1573 = vld [vmem:[%s3 + $0x1f0] sm:$0xf]
  %v1574 = vld [vmem:[%s3 + $0x1f4] sm:$0xf]
  %v1575 = vld [vmem:[%s3 + $0x1f8] sm:$0xf]
  %v1576 = vld [vmem:[%s3 + $0x1fc] sm:$0xf]
  %v1577 = vld [vmem:[%s3 + $0x200] sm:$0xf]
  %v1578 = vld [vmem:[%s3 + $0x204] sm:$0xf]
  %v1579 = vld [vmem:[%s3 + $0x208] sm:$0xf]
  %v1580 = vld [vmem:[%s3 + $0x20c] sm:$0xf]
  %v1581 = vld [vmem:[%s3 + $0x210] sm:$0xf]
  %v1582 = vld [vmem:[%s3 + $0x214] sm:$0xf]
  %v1583 = vld [vmem:[%s3 + $0x218] sm:$0xf]
  %v1584 = vld [vmem:[%s3 + $0x21c] sm:$0xf]
  %v1585 = vld [vmem:[%s3 + $0x220] sm:$0xf]
  %v1586 = vld [vmem:[%s3 + $0x224] sm:$0xf]
  %v1587 = vld [vmem:[%s3 + $0x228] sm:$0xf]
  %v1588 = vld [vmem:[%s3 + $0x22c] sm:$0xf]
  %v1589 = vld [vmem:[%s3 + $0x230] sm:$0xf]
  %v1590 = vld [vmem:[%s3 + $0x234] sm:$0xf]
  %v1591 = vld [vmem:[%s3 + $0x238] sm:$0xf]
  %v1592 = vld [vmem:[%s3 + $0x23c] sm:$0xf]
  %v1593 = vld [vmem:[%s3 + $0x240] sm:$0xf]
  %v1594 = vld [vmem:[%s3 + $0x244] sm:$0xf]
  %v1595 = vld [vmem:[%s3 + $0x248] sm:$0xf]
  %v1596 = vld [vmem:[%s3 + $0x24c] sm:$0xf]
  %v1597 = vld [vmem:[%s3 + $0x250] sm:$0xf]
  %v1598 = vld [vmem:[%s3 + $0x254] sm:$0xf]
  %v1599 = vld [vmem:[%s3 + $0x258] sm:$0xf]
  %v1600 = vld [vmem:[%s3 + $0x25c] sm:$0xf]
  %v1601 = vld [vmem:[%s3 + $0x260] sm:$0xf]
  %v1602 = vld [vmem:[%s3 + $0x264] sm:$0xf]
  %v1603 = vld [vmem:[%s3 + $0x268] sm:$0xf]
  %v1604 = vld [vmem:[%s3 + $0x26c] sm:$0xf]
  %v1605 = vld [vmem:[%s3 + $0x270] sm:$0xf]
  %v1606 = vld [vmem:[%s3 + $0x274] sm:$0xf]
  %v1607 = vld [vmem:[%s3 + $0x278] sm:$0xf]
  %v1608 = vld [vmem:[%s3 + $0x27c] sm:$0xf]
  %v1609 = vld [vmem:[%s3 + $0x280] sm:$0xf]
  %v1610 = vld [vmem:[%s3 + $0x284] sm:$0xf]
  %v1611 = vld [vmem:[%s3 + $0x288] sm:$0xf]
  %v1612 = vld [vmem:[%s3 + $0x28c] sm:$0xf]
  %v1613 = vld [vmem:[%s3 + $0x290] sm:$0xf]
  %v1614 = vld [vmem:[%s3 + $0x294] sm:$0xf]
  %v1615 = vld [vmem:[%s3 + $0x298] sm:$0xf]
  %v1616 = vld [vmem:[%s3 + $0x29c] sm:$0xf]
  %v1617 = vld [vmem:[%s3 + $0x2a0] sm:$0xf]
  %v1618 = vld [vmem:[%s3 + $0x2a4] sm:$0xf]
  %v1619 = vld [vmem:[%s3 + $0x2a8] sm:$0xf]
  %v1620 = vld [vmem:[%s3 + $0x2ac] sm:$0xf]
  %v1621 = vld [vmem:[%s3 + $0x2b0] sm:$0xf]
  %v1622 = vld [vmem:[%s3 + $0x2b4] sm:$0xf]
  %v1623 = vld [vmem:[%s3 + $0x2b8] sm:$0xf]
  %v1624 = vld [vmem:[%s3 + $0x2bc] sm:$0xf]
  %v1625 = vld [vmem:[%s3 + $0x2c0] sm:$0xf]
  %v1626 = vld [vmem:[%s3 + $0x2c4] sm:$0xf]
  %v1627 = vld [vmem:[%s3 + $0x2c8] sm:$0xf]
  %v1628 = vld [vmem:[%s3 + $0x2cc] sm:$0xf]
  %v1629 = vld [vmem:[%s3 + $0x2d0] sm:$0xf]
  %v1630 = vld [vmem:[%s3 + $0x2d4] sm:$0xf]
  %v1631 = vld [vmem:[%s3 + $0x2d8] sm:$0xf]
  %v1632 = vld [vmem:[%s3 + $0x2dc] sm:$0xf]
  %v1633 = vld [vmem:[%s3 + $0x2e0] sm:$0xf]
  %v1634 = vld [vmem:[%s3 + $0x2e4] sm:$0xf]
  %v1635 = vld [vmem:[%s3 + $0x2e8] sm:$0xf]
  %v1636 = vld [vmem:[%s3 + $0x2ec] sm:$0xf]
  %v1637 = vld [vmem:[%s3 + $0x2f0] sm:$0xf]
  %v1638 = vld [vmem:[%s3 + $0x2f4] sm:$0xf]
  %v1639 = vld [vmem:[%s3 + $0x2f8] sm:$0xf]
  %v1640 = vld [vmem:[%s3 + $0x2fc] sm:$0xf]
  %v1641 = vld [vmem:[%s3 + $0x300] sm:$0xf]
  %v1642 = vld [vmem:[%s3 + $0x304] sm:$0xf]
  %v1643 = vld [vmem:[%s3 + $0x308] sm:$0xf]
  %v1644 = vld [vmem:[%s3 + $0x30c] sm:$0xf]
  %v1645 = vld [vmem:[%s3 + $0x310] sm:$0xf]
  %v1646 = vld [vmem:[%s3 + $0x314] sm:$0xf]
  %v1647 = vld [vmem:[%s3 + $0x318] sm:$0xf]
  %v1648 = vld [vmem:[%s3 + $0x31c] sm:$0xf]
  %v1649 = vld [vmem:[%s3 + $0x320] sm:$0xf]
  %v1650 = vld [vmem:[%s3 + $0x324] sm:$0xf]
  %v1651 = vld [vmem:[%s3 + $0x328] sm:$0xf]
  %v1652 = vld [vmem:[%s3 + $0x32c] sm:$0xf]
  %v1653 = vld [vmem:[%s3 + $0x330] sm:$0xf]
  %v1654 = vld [vmem:[%s3 + $0x334] sm:$0xf]
  %v1655 = vld [vmem:[%s3 + $0x338] sm:$0xf]
  %v1656 = vld [vmem:[%s3 + $0x33c] sm:$0xf]
  %v1657 = vld [vmem:[%s3 + $0x340] sm:$0xf]
  %v1658 = vld [vmem:[%s3 + $0x344] sm:$0xf]
  %v1659 = vld [vmem:[%s3 + $0x348] sm:$0xf]
  %v1660 = vld [vmem:[%s3 + $0x34c] sm:$0xf]
  %v1661 = vld [vmem:[%s3 + $0x350] sm:$0xf]
  %v1662 = vld [vmem:[%s3 + $0x354] sm:$0xf]
  %v1663 = vld [vmem:[%s3 + $0x358] sm:$0xf]
  %v1664 = vld [vmem:[%s3 + $0x35c] sm:$0xf]
  %v1665 = vld [vmem:[%s3 + $0x360] sm:$0xf]
  %v1666 = vld [vmem:[%s3 + $0x364] sm:$0xf]
  %v1667 = vld [vmem:[%s3 + $0x368] sm:$0xf]
  %v1668 = vld [vmem:[%s3 + $0x36c] sm:$0xf]
  %v1669 = vld [vmem:[%s3 + $0x370] sm:$0xf]
  %v1670 = vld [vmem:[%s3 + $0x374] sm:$0xf]
  %v1671 = vld [vmem:[%s3 + $0x378] sm:$0xf]
  %v1672 = vld [vmem:[%s3 + $0x37c] sm:$0xf]
  %v1673 = vld [vmem:[%s3 + $0x380] sm:$0xf]
  %v1674 = vld [vmem:[%s3 + $0x384] sm:$0xf]
  %v1675 = vld [vmem:[%s3 + $0x388] sm:$0xf]
  %v1676 = vld [vmem:[%s3 + $0x38c] sm:$0xf]
  %v1677 = vld [vmem:[%s3 + $0x390] sm:$0xf]
  %v1678 = vld [vmem:[%s3 + $0x394] sm:$0xf]
  %v1679 = vld [vmem:[%s3 + $0x398] sm:$0xf]
  %v1680 = vld [vmem:[%s3 + $0x39c] sm:$0xf]
  %v1681 = vld [vmem:[%s3 + $0x3a0] sm:$0xf]
  %v1682 = vld [vmem:[%s3 + $0x3a4] sm:$0xf]
  %v1683 = vld [vmem:[%s3 + $0x3a8] sm:$0xf]
  %v1684 = vld [vmem:[%s3 + $0x3ac] sm:$0xf]
  %v1685 = vld [vmem:[%s3 + $0x3b0] sm:$0xf]
  %v1686 = vld [vmem:[%s3 + $0x3b4] sm:$0xf]
  %v1687 = vld [vmem:[%s3 + $0x3b8] sm:$0xf]
  %v1688 = vld [vmem:[%s3 + $0x3bc] sm:$0xf]
  %v1689 = vld [vmem:[%s3 + $0x3c0] sm:$0xf]
  %v1690 = vld [vmem:[%s3 + $0x3c4] sm:$0xf]
  %v1691 = vld [vmem:[%s3 + $0x3c8] sm:$0xf]
  %v1692 = vld [vmem:[%s3 + $0x3cc] sm:$0xf]
  %v1693 = vld [vmem:[%s3 + $0x3d0] sm:$0xf]
  %v1694 = vld [vmem:[%s3 + $0x3d4] sm:$0xf]
  %v1695 = vld [vmem:[%s3 + $0x3d8] sm:$0xf]
  %v1696 = vld [vmem:[%s3 + $0x3dc] sm:$0xf]
  %v1697 = vld [vmem:[%s3 + $0x3e0] sm:$0xf]
  %v1698 = vld [vmem:[%s3 + $0x3e4] sm:$0xf]
  %v1699 = vld [vmem:[%s3 + $0x3e8] sm:$0xf]
  %v1700 = vld [vmem:[%s3 + $0x3ec] sm:$0xf]
  %v1701 = vld [vmem:[%s3 + $0x3f0] sm:$0xf]
  %v1702 = vld [vmem:[%s3 + $0x3f4] sm:$0xf]
  %v1703 = vld [vmem:[%s3 + $0x3f8] sm:$0xf]
  %v1704 = vld [vmem:[%s3 + $0x3fc] sm:$0xf]
  %v1705 = vld [vmem:[%s5 + $0x23] sm:$0x1]
  %v1706 = vlaneseq
  %v1707 = vshrl.u32 %v1706, 7
  %v1708 = vsub.s32 0, %v1707
  %v1709 = vrot.slane %v1705, %v1708
  %v1966 = vunpack.c.l.b16 %v1449
  %v1967 = vunpack.c.l.b16 %v1450
  %v1968 = vunpack.c.l.b16 %v1451
  %v1969 = vunpack.c.l.b16 %v1452
  %v1970 = vunpack.c.l.b16 %v1453
  %v1971 = vunpack.c.l.b16 %v1454
  %v1972 = vunpack.c.l.b16 %v1455
  %v1973 = vunpack.c.l.b16 %v1456
  %v1974 = vunpack.c.l.b16 %v1457
  %v1975 = vunpack.c.l.b16 %v1458
  %v1976 = vunpack.c.l.b16 %v1459
  %v1977 = vunpack.c.l.b16 %v1460
  %v1978 = vunpack.c.l.b16 %v1461
  %v1979 = vunpack.c.l.b16 %v1462
  %v1980 = vunpack.c.l.b16 %v1463
  %v1981 = vunpack.c.l.b16 %v1464
  %v1982 = vunpack.c.l.b16 %v1465
  %v1983 = vunpack.c.l.b16 %v1466
  %v1984 = vunpack.c.l.b16 %v1467
  %v1985 = vunpack.c.l.b16 %v1468
  %v1986 = vunpack.c.l.b16 %v1469
  %v1987 = vunpack.c.l.b16 %v1470
  %v1988 = vunpack.c.l.b16 %v1471
  %v1989 = vunpack.c.l.b16 %v1472
  %v1990 = vunpack.c.l.b16 %v1473
  %v1991 = vunpack.c.l.b16 %v1474
  %v1992 = vunpack.c.l.b16 %v1475
  %v1993 = vunpack.c.l.b16 %v1476
  %v1994 = vunpack.c.l.b16 %v1477
  %v1995 = vunpack.c.l.b16 %v1478
  %v1996 = vunpack.c.l.b16 %v1479
  %v1997 = vunpack.c.l.b16 %v1480
  %v1998 = vunpack.c.l.b16 %v1481
  %v1999 = vunpack.c.l.b16 %v1482
  %v2000 = vunpack.c.l.b16 %v1483
  %v2001 = vunpack.c.l.b16 %v1484
  %v2002 = vunpack.c.l.b16 %v1485
  %v2003 = vunpack.c.l.b16 %v1486
  %v2004 = vunpack.c.l.b16 %v1487
  %v2005 = vunpack.c.l.b16 %v1488
  %v2006 = vunpack.c.l.b16 %v1489
  %v2007 = vunpack.c.l.b16 %v1490
  %v2008 = vunpack.c.l.b16 %v1491
  %v2009 = vunpack.c.l.b16 %v1492
  %v2010 = vunpack.c.l.b16 %v1493
  %v2011 = vunpack.c.l.b16 %v1494
  %v2012 = vunpack.c.l.b16 %v1495
  %v2013 = vunpack.c.l.b16 %v1496
  %v2014 = vunpack.c.l.b16 %v1497
  %v2015 = vunpack.c.l.b16 %v1498
  %v2016 = vunpack.c.l.b16 %v1499
  %v2017 = vunpack.c.l.b16 %v1500
  %v2018 = vunpack.c.l.b16 %v1501
  %v2019 = vunpack.c.l.b16 %v1502
  %v2020 = vunpack.c.l.b16 %v1503
  %v2021 = vunpack.c.l.b16 %v1504
  %v2022 = vunpack.c.l.b16 %v1505
  %v2023 = vunpack.c.l.b16 %v1506
  %v2024 = vunpack.c.l.b16 %v1507
  %v2025 = vunpack.c.l.b16 %v1508
  %v2026 = vunpack.c.l.b16 %v1509
  %v2027 = vunpack.c.l.b16 %v1510
  %v2028 = vunpack.c.l.b16 %v1511
  %v2029 = vunpack.c.l.b16 %v1512
  %v2030 = vunpack.c.l.b16 %v1513
  %v2031 = vunpack.c.l.b16 %v1514
  %v2032 = vunpack.c.l.b16 %v1515
  %v2033 = vunpack.c.l.b16 %v1516
  %v2034 = vunpack.c.l.b16 %v1517
  %v2035 = vunpack.c.l.b16 %v1518
  %v2036 = vunpack.c.l.b16 %v1519
  %v2037 = vunpack.c.l.b16 %v1520
  %v2038 = vunpack.c.l.b16 %v1521
  %v2039 = vunpack.c.l.b16 %v1522
  %v2040 = vunpack.c.l.b16 %v1523
  %v2041 = vunpack.c.l.b16 %v1524
  %v2042 = vunpack.c.l.b16 %v1525
  %v2043 = vunpack.c.l.b16 %v1526
  %v2044 = vunpack.c.l.b16 %v1527
  %v2045 = vunpack.c.l.b16 %v1528
  %v2046 = vunpack.c.l.b16 %v1529
  %v2047 = vunpack.c.l.b16 %v1530
  %v2048 = vunpack.c.l.b16 %v1531
  %v2049 = vunpack.c.l.b16 %v1532
  %v2050 = vunpack.c.l.b16 %v1533
  %v2051 = vunpack.c.l.b16 %v1534
  %v2052 = vunpack.c.l.b16 %v1535
  %v2053 = vunpack.c.l.b16 %v1536
  %v2054 = vunpack.c.l.b16 %v1537
  %v2055 = vunpack.c.l.b16 %v1538
  %v2056 = vunpack.c.l.b16 %v1539
  %v2057 = vunpack.c.l.b16 %v1540
  %v2058 = vunpack.c.l.b16 %v1541
  %v2059 = vunpack.c.l.b16 %v1542
  %v2060 = vunpack.c.l.b16 %v1543
  %v2061 = vunpack.c.l.b16 %v1544
  %v2062 = vunpack.c.l.b16 %v1545
  %v2063 = vunpack.c.l.b16 %v1546
  %v2064 = vunpack.c.l.b16 %v1547
  %v2065 = vunpack.c.l.b16 %v1548
  %v2066 = vunpack.c.l.b16 %v1549
  %v2067 = vunpack.c.l.b16 %v1550
  %v2068 = vunpack.c.l.b16 %v1551
  %v2069 = vunpack.c.l.b16 %v1552
  %v2070 = vunpack.c.l.b16 %v1553
  %v2071 = vunpack.c.l.b16 %v1554
  %v2072 = vunpack.c.l.b16 %v1555
  %v2073 = vunpack.c.l.b16 %v1556
  %v2074 = vunpack.c.l.b16 %v1557
  %v2075 = vunpack.c.l.b16 %v1558
  %v2076 = vunpack.c.l.b16 %v1559
  %v2077 = vunpack.c.l.b16 %v1560
  %v2078 = vunpack.c.l.b16 %v1561
  %v2079 = vunpack.c.l.b16 %v1562
  %v2080 = vunpack.c.l.b16 %v1563
  %v2081 = vunpack.c.l.b16 %v1564
  %v2082 = vunpack.c.l.b16 %v1565
  %v2083 = vunpack.c.l.b16 %v1566
  %v2084 = vunpack.c.l.b16 %v1567
  %v2085 = vunpack.c.l.b16 %v1568
  %v2086 = vunpack.c.l.b16 %v1569
  %v2087 = vunpack.c.l.b16 %v1570
  %v2088 = vunpack.c.l.b16 %v1571
  %v2089 = vunpack.c.l.b16 %v1572
  %v2090 = vunpack.c.l.b16 %v1573
  %v2091 = vunpack.c.l.b16 %v1574
  %v2092 = vunpack.c.l.b16 %v1575
  %v2093 = vunpack.c.l.b16 %v1576
  %v2094 = vunpack.c.l.b16 %v1577
  %v2095 = vunpack.c.l.b16 %v1578
  %v2096 = vunpack.c.l.b16 %v1579
  %v2097 = vunpack.c.l.b16 %v1580
  %v2098 = vunpack.c.l.b16 %v1581
  %v2099 = vunpack.c.l.b16 %v1582
  %v2100 = vunpack.c.l.b16 %v1583
  %v2101 = vunpack.c.l.b16 %v1584
  %v2102 = vunpack.c.l.b16 %v1585
  %v2103 = vunpack.c.l.b16 %v1586
  %v2104 = vunpack.c.l.b16 %v1587
  %v2105 = vunpack.c.l.b16 %v1588
  %v2106 = vunpack.c.l.b16 %v1589
  %v2107 = vunpack.c.l.b16 %v1590
  %v2108 = vunpack.c.l.b16 %v1591
  %v2109 = vunpack.c.l.b16 %v1592
  %v2110 = vunpack.c.l.b16 %v1593
  %v2111 = vunpack.c.l.b16 %v1594
  %v2112 = vunpack.c.l.b16 %v1595
  %v2113 = vunpack.c.l.b16 %v1596
  %v2114 = vunpack.c.l.b16 %v1597
  %v2115 = vunpack.c.l.b16 %v1598
  %v2116 = vunpack.c.l.b16 %v1599
  %v2117 = vunpack.c.l.b16 %v1600
  %v2118 = vunpack.c.l.b16 %v1601
  %v2119 = vunpack.c.l.b16 %v1602
  %v2120 = vunpack.c.l.b16 %v1603
  %v2121 = vunpack.c.l.b16 %v1604
  %v2122 = vunpack.c.l.b16 %v1605
  %v2123 = vunpack.c.l.b16 %v1606
  %v2124 = vunpack.c.l.b16 %v1607
  %v2125 = vunpack.c.l.b16 %v1608
  %v2126 = vunpack.c.l.b16 %v1609
  %v2127 = vunpack.c.l.b16 %v1610
  %v2128 = vunpack.c.l.b16 %v1611
  %v2129 = vunpack.c.l.b16 %v1612
  %v2130 = vunpack.c.l.b16 %v1613
  %v2131 = vunpack.c.l.b16 %v1614
  %v2132 = vunpack.c.l.b16 %v1615
  %v2133 = vunpack.c.l.b16 %v1616
  %v2134 = vunpack.c.l.b16 %v1617
  %v2135 = vunpack.c.l.b16 %v1618
  %v2136 = vunpack.c.l.b16 %v1619
  %v2137 = vunpack.c.l.b16 %v1620
  %v2138 = vunpack.c.l.b16 %v1621
  %v2139 = vunpack.c.l.b16 %v1622
  %v2140 = vunpack.c.l.b16 %v1623
  %v2141 = vunpack.c.l.b16 %v1624
  %v2142 = vunpack.c.l.b16 %v1625
  %v2143 = vunpack.c.l.b16 %v1626
  %v2144 = vunpack.c.l.b16 %v1627
  %v2145 = vunpack.c.l.b16 %v1628
  %v2146 = vunpack.c.l.b16 %v1629
  %v2147 = vunpack.c.l.b16 %v1630
  %v2148 = vunpack.c.l.b16 %v1631
  %v2149 = vunpack.c.l.b16 %v1632
  %v2150 = vunpack.c.l.b16 %v1633
  %v2151 = vunpack.c.l.b16 %v1634
  %v2152 = vunpack.c.l.b16 %v1635
  %v2153 = vunpack.c.l.b16 %v1636
  %v2154 = vunpack.c.l.b16 %v1637
  %v2155 = vunpack.c.l.b16 %v1638
  %v2156 = vunpack.c.l.b16 %v1639
  %v2157 = vunpack.c.l.b16 %v1640
  %v2158 = vunpack.c.l.b16 %v1641
  %v2159 = vunpack.c.l.b16 %v1642
  %v2160 = vunpack.c.l.b16 %v1643
  %v2161 = vunpack.c.l.b16 %v1644
  %v2162 = vunpack.c.l.b16 %v1645
  %v2163 = vunpack.c.l.b16 %v1646
  %v2164 = vunpack.c.l.b16 %v1647
  %v2165 = vunpack.c.l.b16 %v1648
  %v2166 = vunpack.c.l.b16 %v1649
  %v2167 = vunpack.c.l.b16 %v1650
  %v2168 = vunpack.c.l.b16 %v1651
  %v2169 = vunpack.c.l.b16 %v1652
  %v2170 = vunpack.c.l.b16 %v1653
  %v2171 = vunpack.c.l.b16 %v1654
  %v2172 = vunpack.c.l.b16 %v1655
  %v2173 = vunpack.c.l.b16 %v1656
  %v2174 = vunpack.c.l.b16 %v1657
  %v2175 = vunpack.c.l.b16 %v1658
  %v2176 = vunpack.c.l.b16 %v1659
  %v2177 = vunpack.c.l.b16 %v1660
  %v2178 = vunpack.c.l.b16 %v1661
  %v2179 = vunpack.c.l.b16 %v1662
  %v2180 = vunpack.c.l.b16 %v1663
  %v2181 = vunpack.c.l.b16 %v1664
  %v2182 = vunpack.c.l.b16 %v1665
  %v2183 = vunpack.c.l.b16 %v1666
  %v2184 = vunpack.c.l.b16 %v1667
  %v2185 = vunpack.c.l.b16 %v1668
  %v2186 = vunpack.c.l.b16 %v1669
  %v2187 = vunpack.c.l.b16 %v1670
  %v2188 = vunpack.c.l.b16 %v1671
  %v2189 = vunpack.c.l.b16 %v1672
  %v2190 = vunpack.c.l.b16 %v1673
  %v2191 = vunpack.c.l.b16 %v1674
  %v2192 = vunpack.c.l.b16 %v1675
  %v2193 = vunpack.c.l.b16 %v1676
  %v2194 = vunpack.c.l.b16 %v1677
  %v2195 = vunpack.c.l.b16 %v1678
  %v2196 = vunpack.c.l.b16 %v1679
  %v2197 = vunpack.c.l.b16 %v1680
  %v2198 = vunpack.c.l.b16 %v1681
  %v2199 = vunpack.c.l.b16 %v1682
  %v2200 = vunpack.c.l.b16 %v1683
  %v2201 = vunpack.c.l.b16 %v1684
  %v2202 = vunpack.c.l.b16 %v1685
  %v2203 = vunpack.c.l.b16 %v1686
  %v2204 = vunpack.c.l.b16 %v1687
  %v2205 = vunpack.c.l.b16 %v1688
  %v2206 = vunpack.c.l.b16 %v1689
  %v2207 = vunpack.c.l.b16 %v1690
  %v2208 = vunpack.c.l.b16 %v1691
  %v2209 = vunpack.c.l.b16 %v1692
  %v2210 = vunpack.c.l.b16 %v1693
  %v2211 = vunpack.c.l.b16 %v1694
  %v2212 = vunpack.c.l.b16 %v1695
  %v2213 = vunpack.c.l.b16 %v1696
  %v2214 = vunpack.c.l.b16 %v1697
  %v2215 = vunpack.c.l.b16 %v1698
  %v2216 = vunpack.c.l.b16 %v1699
  %v2217 = vunpack.c.l.b16 %v1700
  %v2218 = vunpack.c.l.b16 %v1701
  %v2219 = vunpack.c.l.b16 %v1702
  %v2220 = vunpack.c.l.b16 %v1703
  %v2221 = vunpack.c.l.b16 %v1704
  %v2222 = vpack.c.b16 %v1967, %v1966
  %v2223 = vpack.c.b16 %v1969, %v1968
  %v2224 = vpack.c.b16 %v1971, %v1970
  %v2225 = vpack.c.b16 %v1973, %v1972
  %v2226 = vpack.c.b16 %v1975, %v1974
  %v2227 = vpack.c.b16 %v1977, %v1976
  %v2228 = vpack.c.b16 %v1979, %v1978
  %v2229 = vpack.c.b16 %v1981, %v1980
  %v2230 = vpack.c.b16 %v1983, %v1982
  %v2231 = vpack.c.b16 %v1985, %v1984
  %v2232 = vpack.c.b16 %v1987, %v1986
  %v2233 = vpack.c.b16 %v1989, %v1988
  %v2234 = vpack.c.b16 %v1991, %v1990
  %v2235 = vpack.c.b16 %v1993, %v1992
  %v2236 = vpack.c.b16 %v1995, %v1994
  %v2237 = vpack.c.b16 %v1997, %v1996
  %v2238 = vpack.c.b16 %v1999, %v1998
  %v2239 = vpack.c.b16 %v2001, %v2000
  %v2240 = vpack.c.b16 %v2003, %v2002
  %v2241 = vpack.c.b16 %v2005, %v2004
  %v2242 = vpack.c.b16 %v2007, %v2006
  %v2243 = vpack.c.b16 %v2009, %v2008
  %v2244 = vpack.c.b16 %v2011, %v2010
  %v2245 = vpack.c.b16 %v2013, %v2012
  %v2246 = vpack.c.b16 %v2015, %v2014
  %v2247 = vpack.c.b16 %v2017, %v2016
  %v2248 = vpack.c.b16 %v2019, %v2018
  %v2249 = vpack.c.b16 %v2021, %v2020
  %v2250 = vpack.c.b16 %v2023, %v2022
  %v2251 = vpack.c.b16 %v2025, %v2024
  %v2252 = vpack.c.b16 %v2027, %v2026
  %v2253 = vpack.c.b16 %v2029, %v2028
  %v2254 = vpack.c.b16 %v2031, %v2030
  %v2255 = vpack.c.b16 %v2033, %v2032
  %v2256 = vpack.c.b16 %v2035, %v2034
  %v2257 = vpack.c.b16 %v2037, %v2036
  %v2258 = vpack.c.b16 %v2039, %v2038
  %v2259 = vpack.c.b16 %v2041, %v2040
  %v2260 = vpack.c.b16 %v2043, %v2042
  %v2261 = vpack.c.b16 %v2045, %v2044
  %v2262 = vpack.c.b16 %v2047, %v2046
  %v2263 = vpack.c.b16 %v2049, %v2048
  %v2264 = vpack.c.b16 %v2051, %v2050
  %v2265 = vpack.c.b16 %v2053, %v2052
  %v2266 = vpack.c.b16 %v2055, %v2054
  %v2267 = vpack.c.b16 %v2057, %v2056
  %v2268 = vpack.c.b16 %v2059, %v2058
  %v2269 = vpack.c.b16 %v2061, %v2060
  %v2270 = vpack.c.b16 %v2063, %v2062
  %v2271 = vpack.c.b16 %v2065, %v2064
  %v2272 = vpack.c.b16 %v2067, %v2066
  %v2273 = vpack.c.b16 %v2069, %v2068
  %v2274 = vpack.c.b16 %v2071, %v2070
  %v2275 = vpack.c.b16 %v2073, %v2072
  %v2276 = vpack.c.b16 %v2075, %v2074
  %v2277 = vpack.c.b16 %v2077, %v2076
  %v2278 = vpack.c.b16 %v2079, %v2078
  %v2279 = vpack.c.b16 %v2081, %v2080
  %v2280 = vpack.c.b16 %v2083, %v2082
  %v2281 = vpack.c.b16 %v2085, %v2084
  %v2282 = vpack.c.b16 %v2087, %v2086
  %v2283 = vpack.c.b16 %v2089, %v2088
  %v2284 = vpack.c.b16 %v2091, %v2090
  %v2285 = vpack.c.b16 %v2093, %v2092
  %v2286 = vpack.c.b16 %v2095, %v2094
  %v2287 = vpack.c.b16 %v2097, %v2096
  %v2288 = vpack.c.b16 %v2099, %v2098
  %v2289 = vpack.c.b16 %v2101, %v2100
  %v2290 = vpack.c.b16 %v2103, %v2102
  %v2291 = vpack.c.b16 %v2105, %v2104
  %v2292 = vpack.c.b16 %v2107, %v2106
  %v2293 = vpack.c.b16 %v2109, %v2108
  %v2294 = vpack.c.b16 %v2111, %v2110
  %v2295 = vpack.c.b16 %v2113, %v2112
  %v2296 = vpack.c.b16 %v2115, %v2114
  %v2297 = vpack.c.b16 %v2117, %v2116
  %v2298 = vpack.c.b16 %v2119, %v2118
  %v2299 = vpack.c.b16 %v2121, %v2120
  %v2300 = vpack.c.b16 %v2123, %v2122
  %v2301 = vpack.c.b16 %v2125, %v2124
  %v2302 = vpack.c.b16 %v2127, %v2126
  %v2303 = vpack.c.b16 %v2129, %v2128
  %v2304 = vpack.c.b16 %v2131, %v2130
  %v2305 = vpack.c.b16 %v2133, %v2132
  %v2306 = vpack.c.b16 %v2135, %v2134
  %v2307 = vpack.c.b16 %v2137, %v2136
  %v2308 = vpack.c.b16 %v2139, %v2138
  %v2309 = vpack.c.b16 %v2141, %v2140
  %v2310 = vpack.c.b16 %v2143, %v2142
  %v2311 = vpack.c.b16 %v2145, %v2144
  %v2312 = vpack.c.b16 %v2147, %v2146
  %v2313 = vpack.c.b16 %v2149, %v2148
  %v2314 = vpack.c.b16 %v2151, %v2150
  %v2315 = vpack.c.b16 %v2153, %v2152
  %v2316 = vpack.c.b16 %v2155, %v2154
  %v2317 = vpack.c.b16 %v2157, %v2156
  %v2318 = vpack.c.b16 %v2159, %v2158
  %v2319 = vpack.c.b16 %v2161, %v2160
  %v2320 = vpack.c.b16 %v2163, %v2162
  %v2321 = vpack.c.b16 %v2165, %v2164
  %v2322 = vpack.c.b16 %v2167, %v2166
  %v2323 = vpack.c.b16 %v2169, %v2168
  %v2324 = vpack.c.b16 %v2171, %v2170
  %v2325 = vpack.c.b16 %v2173, %v2172
  %v2326 = vpack.c.b16 %v2175, %v2174
  %v2327 = vpack.c.b16 %v2177, %v2176
  %v2328 = vpack.c.b16 %v2179, %v2178
  %v2329 = vpack.c.b16 %v2181, %v2180
  %v2330 = vpack.c.b16 %v2183, %v2182
  %v2331 = vpack.c.b16 %v2185, %v2184
  %v2332 = vpack.c.b16 %v2187, %v2186
  %v2333 = vpack.c.b16 %v2189, %v2188
  %v2334 = vpack.c.b16 %v2191, %v2190
  %v2335 = vpack.c.b16 %v2193, %v2192
  %v2336 = vpack.c.b16 %v2195, %v2194
  %v2337 = vpack.c.b16 %v2197, %v2196
  %v2338 = vpack.c.b16 %v2199, %v2198
  %v2339 = vpack.c.b16 %v2201, %v2200
  %v2340 = vpack.c.b16 %v2203, %v2202
  %v2341 = vpack.c.b16 %v2205, %v2204
  %v2342 = vpack.c.b16 %v2207, %v2206
  %v2343 = vpack.c.b16 %v2209, %v2208
  %v2344 = vpack.c.b16 %v2211, %v2210
  %v2345 = vpack.c.b16 %v2213, %v2212
  %v2346 = vpack.c.b16 %v2215, %v2214
  %v2347 = vpack.c.b16 %v2217, %v2216
  %v2348 = vpack.c.b16 %v2219, %v2218
  %v2349 = vpack.c.b16 %v2221, %v2220
  %2478 = vmatprep.subr.bf16.mxu0 0
  %2479 = vmatpush1.bf16.msra.mxu0 %v2222
  %2480 = vmatprep.subr.bf16.mxu0 0
  %2481 = vmatpush1.bf16.msra.mxu0 %v2223
  %2482 = vmatprep.subr.bf16.mxu0 0
  %2483 = vmatpush1.bf16.msra.mxu0 %v2224
  %2484 = vmatprep.subr.bf16.mxu0 0
  %2485 = vmatpush1.bf16.msra.mxu0 %v2225
  %2486 = vmatprep.subr.bf16.mxu0 0
  %2487 = vmatpush1.bf16.msra.mxu0 %v2226
  %2488 = vmatprep.subr.bf16.mxu0 0
  %2489 = vmatpush1.bf16.msra.mxu0 %v2227
  %2490 = vmatprep.subr.bf16.mxu0 0
  %2491 = vmatpush1.bf16.msra.mxu0 %v2228
  %2492 = vmatprep.subr.bf16.mxu0 0
  %2493 = vmatpush1.bf16.msra.mxu0 %v2229
  %2494 = vmatprep.subr.bf16.mxu0 0
  %2495 = vmatpush1.bf16.msra.mxu0 %v2230
  %2496 = vmatprep.subr.bf16.mxu0 0
  %2497 = vmatpush1.bf16.msra.mxu0 %v2231
  %2498 = vmatprep.subr.bf16.mxu0 0
  %2499 = vmatpush1.bf16.msra.mxu0 %v2232
  %2500 = vmatprep.subr.bf16.mxu0 0
  %2501 = vmatpush1.bf16.msra.mxu0 %v2233
  %2502 = vmatprep.subr.bf16.mxu0 0
  %2503 = vmatpush1.bf16.msra.mxu0 %v2234
  %2504 = vmatprep.subr.bf16.mxu0 0
  %2505 = vmatpush1.bf16.msra.mxu0 %v2235
  %2506 = vmatprep.subr.bf16.mxu0 0
  %2507 = vmatpush1.bf16.msra.mxu0 %v2236
  %2508 = vmatprep.subr.bf16.mxu0 0
  %2509 = vmatpush1.bf16.msra.mxu0 %v2237
  %2510 = vmatprep.mubr.bf16.mxu0 %v1386
  %2511 = vmatmul.mubr.bf16.gmra.mrb[0].mxu0 %v1385
  %v2512 = vpop.f32.mrb[0].mxu0
  %v2513 = vadd.f32 %v1709, %v2512
  %v2514 = vpop.f32.mrb[0].mxu0
  %v2515 = vpop.f32.mrb[0].mxu0
  %v2516 = vadd.f32 %v1709, %v2515
  %v2517 = vpop.f32.mrb[0].mxu0
  %2518 = vmatprep.mubr.bf16.mxu0 %v1402
  %2519 = vmatmul.mubr.bf16.gmra.mrb[0].mxu0 %v1401
  %v2520 = vpop.f32.mrb[0].mxu0
  %v2521 = vadd.f32 %v1709, %v2520
  %v2522 = vpop.f32.mrb[0].mxu0
  %v2523 = vpop.f32.mrb[0].mxu0
  %v2524 = vadd.f32 %v1709, %v2523
  %v2525 = vpop.f32.mrb[0].mxu0
  %2526 = vmatprep.mubr.bf16.mxu0 %v1418
  %2527 = vmatmul.mubr.bf16.gmra.mrb[0].mxu0 %v1417
  %v2528 = vpop.f32.mrb[0].mxu0
  %v2529 = vadd.f32 %v1709, %v2528
  %v2530 = vpop.f32.mrb[0].mxu0
  %v2531 = vpop.f32.mrb[0].mxu0
  %v2532 = vadd.f32 %v1709, %v2531
  %v2533 = vpop.f32.mrb[0].mxu0
  %2534 = vmatprep.mubr.bf16.mxu0 %v1434
  %2535 = vmatmul.mubr.bf16.gmra.mrb[0].mxu0 %v1433
  %v2536 = vpop.f32.mrb[0].mxu0
  %v2537 = vadd.f32 %v1709, %v2536
  %v2538 = vpop.f32.mrb[0].mxu0
  %v2539 = vpop.f32.mrb[0].mxu0
  %v2540 = vadd.f32 %v1709, %v2539
  %v2541 = vpop.f32.mrb[0].mxu0
  %2542 = vdwg.mxu0
  %2543 = vmatprep.subr.bf16.mxu0 0
  %2544 = vmatpush1.bf16.msra.mxu0 %v2238
  %2545 = vmatprep.subr.bf16.mxu0 0
  %2546 = vmatpush1.bf16.msra.mxu0 %v2239
  %2547 = vmatprep.subr.bf16.mxu0 0
  %2548 = vmatpush1.bf16.msra.mxu0 %v2240
  %2549 = vmatprep.subr.bf16.mxu0 0
  %2550 = vmatpush1.bf16.msra.mxu0 %v2241
  %2551 = vmatprep.subr.bf16.mxu0 0
  %2552 = vmatpush1.bf16.msra.mxu0 %v2242
  %2553 = vmatprep.subr.bf16.mxu0 0
  %2554 = vmatpush1.bf16.msra.mxu0 %v2243
  %2555 = vmatprep.subr.bf16.mxu0 0
  %2556 = vmatpush1.bf16.msra.mxu0 %v2244
  %2557 = vmatprep.subr.bf16.mxu0 0
  %2558 = vmatpush1.bf16.msra.mxu0 %v2245
  %2559 = vmatprep.subr.bf16.mxu0 0
  %2560 = vmatpush1.bf16.msra.mxu0 %v2246
  %2561 = vmatprep.subr.bf16.mxu0 0
  %2562 = vmatpush1.bf16.msra.mxu0 %v2247
  %2563 = vmatprep.subr.bf16.mxu0 0
  %2564 = vmatpush1.bf16.msra.mxu0 %v2248
  %2565 = vmatprep.subr.bf16.mxu0 0
  %2566 = vmatpush1.bf16.msra.mxu0 %v2249
  %2567 = vmatprep.subr.bf16.mxu0 0
  %2568 = vmatpush1.bf16.msra.mxu0 %v2250
  %2569 = vmatprep.subr.bf16.mxu0 0
  %2570 = vmatpush1.bf16.msra.mxu0 %v2251
  %2571 = vmatprep.subr.bf16.mxu0 0
  %2572 = vmatpush1.bf16.msra.mxu0 %v2252
  %2573 = vmatprep.subr.bf16.mxu0 0
  %2574 = vmatpush1.bf16.msra.mxu0 %v2253
  %2575 = vmatprep.mubr.bf16.mxu0 %v1388
  %2576 = vmatmul.mubr.bf16.gmra.mrb[0].mxu0 %v1387
  %v2577 = vpop.f32.mrb[0].mxu0
  %v2578 = vadd.f32 %v2513, %v2577
  %v2579 = vpop.f32.mrb[0].mxu0
  %v2580 = vpop.f32.mrb[0].mxu0
  %v2581 = vadd.f32 %v2516, %v2580
  %v2582 = vpop.f32.mrb[0].mxu0
  %2583 = vmatprep.mubr.bf16.mxu0 %v1404
  %2584 = vmatmul.mubr.bf16.gmra.mrb[0].mxu0 %v1403
  %v2585 = vpop.f32.mrb[0].mxu0
  %v2586 = vadd.f32 %v2521, %v2585
  %v2587 = vpop.f32.mrb[0].mxu0
  %v2588 = vpop.f32.mrb[0].mxu0
  %v2589 = vadd.f32 %v2524, %v2588
  %v2590 = vpop.f32.mrb[0].mxu0
  %2591 = vmatprep.mubr.bf16.mxu0 %v1420
  %2592 = vmatmul.mubr.bf16.gmra.mrb[0].mxu0 %v1419
  %v2593 = vpop.f32.mrb[0].mxu0
  %v2594 = vadd.f32 %v2529, %v2593
  %v2595 = vpop.f32.mrb[0].mxu0
  %v2596 = vpop.f32.mrb[0].mxu0
  %v2597 = vadd.f32 %v2532, %v2596
  %v2598 = vpop.f32.mrb[0].mxu0
  %2599 = vmatprep.mubr.bf16.mxu0 %v1436
  %2600 = vmatmul.mubr.bf16.gmra.mrb[0].mxu0 %v1435
  %v2601 = vpop.f32.mrb[0].mxu0
  %v2602 = vadd.f32 %v2537, %v2601
  %v2603 = vpop.f32.mrb[0].mxu0
  %v2604 = vpop.f32.mrb[0].mxu0
  %v2605 = vadd.f32 %v2540, %v2604
  %v2606 = vpop.f32.mrb[0].mxu0
  %2607 = vdwg.mxu0
  %2608 = vmatprep.subr.bf16.mxu0 0
  %2609 = vmatpush1.bf16.msra.mxu0 %v2254
  %2610 = vmatprep.subr.bf16.mxu0 0
  %2611 = vmatpush1.bf16.msra.mxu0 %v2255
  %2612 = vmatprep.subr.bf16.mxu0 0
  %2613 = vmatpush1.bf16.msra.mxu0 %v2256
  %2614 = vmatprep.subr.bf16.mxu0 0
  %2615 = vmatpush1.bf16.msra.mxu0 %v2257
  %2616 = vmatprep.subr.bf16.mxu0 0
  %2617 = vmatpush1.bf16.msra.mxu0 %v2258
  %2618 = vmatprep.subr.bf16.mxu0 0
  %2619 = vmatpush1.bf16.msra.mxu0 %v2259
  %2620 = vmatprep.subr.bf16.mxu0 0
  %2621 = vmatpush1.bf16.msra.mxu0 %v2260
  %2622 = vmatprep.subr.bf16.mxu0 0
  %2623 = vmatpush1.bf16.msra.mxu0 %v2261
  %2624 = vmatprep.subr.bf16.mxu0 0
  %2625 = vmatpush1.bf16.msra.mxu0 %v2262
  %2626 = vmatprep.subr.bf16.mxu0 0
  %2627 = vmatpush1.bf16.msra.mxu0 %v2263
  %2628 = vmatprep.subr.bf16.mxu0 0
  %2629 = vmatpush1.bf16.msra.mxu0 %v2264
  %2630 = vmatprep.subr.bf16.mxu0 0
  %2631 = vmatpush1.bf16.msra.mxu0 %v2265
  %2632 = vmatprep.subr.bf16.mxu0 0
  %2633 = vmatpush1.bf16.msra.mxu0 %v2266
  %2634 = vmatprep.subr.bf16.mxu0 0
  %2635 = vmatpush1.bf16.msra.mxu0 %v2267
  %2636 = vmatprep.subr.bf16.mxu0 0
  %2637 = vmatpush1.bf16.msra.mxu0 %v2268
  %2638 = vmatprep.subr.bf16.mxu0 0
  %2639 = vmatpush1.bf16.msra.mxu0 %v2269
  %2640 = vmatprep.mubr.bf16.mxu0 %v1390
  %2641 = vmatmul.mubr.bf16.gmra.mrb[0].mxu0 %v1389
  %v2642 = vpop.f32.mrb[0].mxu0
  %v2643 = vadd.f32 %v2578, %v2642
  %v2644 = vpop.f32.mrb[0].mxu0
  %v2645 = vpop.f32.mrb[0].mxu0
  %v2646 = vadd.f32 %v2581, %v2645
  %v2647 = vpop.f32.mrb[0].mxu0
  %2648 = vmatprep.mubr.bf16.mxu0 %v1406
  %2649 = vmatmul.mubr.bf16.gmra.mrb[0].mxu0 %v1405
  %v2650 = vpop.f32.mrb[0].mxu0
  %v2651 = vadd.f32 %v2586, %v2650
  %v2652 = vpop.f32.mrb[0].mxu0
  %v2653 = vpop.f32.mrb[0].mxu0
  %v2654 = vadd.f32 %v2589, %v2653
  %v2655 = vpop.f32.mrb[0].mxu0
  %2656 = vmatprep.mubr.bf16.mxu0 %v1422
  %2657 = vmatmul.mubr.bf16.gmra.mrb[0].mxu0 %v1421
  %v2658 = vpop.f32.mrb[0].mxu0
  %v2659 = vadd.f32 %v2594, %v2658
  %v2660 = vpop.f32.mrb[0].mxu0
  %v2661 = vpop.f32.mrb[0].mxu0
  %v2662 = vadd.f32 %v2597, %v2661
  %v2663 = vpop.f32.mrb[0].mxu0
  %2664 = vmatprep.mubr.bf16.mxu0 %v1438
  %2665 = vmatmul.mubr.bf16.gmra.mrb[0].mxu0 %v1437
  %v2666 = vpop.f32.mrb[0].mxu0
  %v2667 = vadd.f32 %v2602, %v2666
  %v2668 = vpop.f32.mrb[0].mxu0
  %v2669 = vpop.f32.mrb[0].mxu0
  %v2670 = vadd.f32 %v2605, %v2669
  %v2671 = vpop.f32.mrb[0].mxu0
  %2672 = vdwg.mxu0
  %2673 = vmatprep.subr.bf16.mxu0 0
  %2674 = vmatpush1.bf16.msra.mxu0 %v2270
  %2675 = vmatprep.subr.bf16.mxu0 0
  %2676 = vmatpush1.bf16.msra.mxu0 %v2271
  %2677 = vmatprep.subr.bf16.mxu0 0
  %2678 = vmatpush1.bf16.msra.mxu0 %v2272
  %2679 = vmatprep.subr.bf16.mxu0 0
  %2680 = vmatpush1.bf16.msra.mxu0 %v2273
  %2681 = vmatprep.subr.bf16.mxu0 0
  %2682 = vmatpush1.bf16.msra.mxu0 %v2274
  %2683 = vmatprep.subr.bf16.mxu0 0
  %2684 = vmatpush1.bf16.msra.mxu0 %v2275
  %2685 = vmatprep.subr.bf16.mxu0 0
  %2686 = vmatpush1.bf16.msra.mxu0 %v2276
  %2687 = vmatprep.subr.bf16.mxu0 0
  %2688 = vmatpush1.bf16.msra.mxu0 %v2277
  %2689 = vmatprep.subr.bf16.mxu0 0
  %2690 = vmatpush1.bf16.msra.mxu0 %v2278
  %2691 = vmatprep.subr.bf16.mxu0 0
  %2692 = vmatpush1.bf16.msra.mxu0 %v2279
  %2693 = vmatprep.subr.bf16.mxu0 0
  %2694 = vmatpush1.bf16.msra.mxu0 %v2280
  %2695 = vmatprep.subr.bf16.mxu0 0
  %2696 = vmatpush1.bf16.msra.mxu0 %v2281
  %2697 = vmatprep.subr.bf16.mxu0 0
  %2698 = vmatpush1.bf16.msra.mxu0 %v2282
  %2699 = vmatprep.subr.bf16.mxu0 0
  %2700 = vmatpush1.bf16.msra.mxu0 %v2283
  %2701 = vmatprep.subr.bf16.mxu0 0
  %2702 = vmatpush1.bf16.msra.mxu0 %v2284
  %2703 = vmatprep.subr.bf16.mxu0 0
  %2704 = vmatpush1.bf16.msra.mxu0 %v2285
  %2705 = vmatprep.mubr.bf16.mxu0 %v1392
  %2706 = vmatmul.mubr.bf16.gmra.mrb[0].mxu0 %v1391
  %v2707 = vpop.f32.mrb[0].mxu0
  %v2708 = vadd.f32 %v2643, %v2707
  %v2709 = vpop.f32.mrb[0].mxu0
  %v2710 = vpop.f32.mrb[0].mxu0
  %v2711 = vadd.f32 %v2646, %v2710
  %v2712 = vpop.f32.mrb[0].mxu0
  %2713 = vmatprep.mubr.bf16.mxu0 %v1408
  %2714 = vmatmul.mubr.bf16.gmra.mrb[0].mxu0 %v1407
  %v2715 = vpop.f32.mrb[0].mxu0
  %v2716 = vadd.f32 %v2651, %v2715
  %v2717 = vpop.f32.mrb[0].mxu0
  %v2718 = vpop.f32.mrb[0].mxu0
  %v2719 = vadd.f32 %v2654, %v2718
  %v2720 = vpop.f32.mrb[0].mxu0
  %2721 = vmatprep.mubr.bf16.mxu0 %v1424
  %2722 = vmatmul.mubr.bf16.gmra.mrb[0].mxu0 %v1423
  %v2723 = vpop.f32.mrb[0].mxu0
  %v2724 = vadd.f32 %v2659, %v2723
  %v2725 = vpop.f32.mrb[0].mxu0
  %v2726 = vpop.f32.mrb[0].mxu0
  %v2727 = vadd.f32 %v2662, %v2726
  %v2728 = vpop.f32.mrb[0].mxu0
  %2729 = vmatprep.mubr.bf16.mxu0 %v1440
  %2730 = vmatmul.mubr.bf16.gmra.mrb[0].mxu0 %v1439
  %v2731 = vpop.f32.mrb[0].mxu0
  %v2732 = vadd.f32 %v2667, %v2731
  %v2733 = vpop.f32.mrb[0].mxu0
  %v2734 = vpop.f32.mrb[0].mxu0
  %v2735 = vadd.f32 %v2670, %v2734
  %v2736 = vpop.f32.mrb[0].mxu0
  %2737 = vdwg.mxu0
  %2738 = vmatprep.subr.bf16.mxu0 0
  %2739 = vmatpush1.bf16.msra.mxu0 %v2286
  %2740 = vmatprep.subr.bf16.mxu0 0
  %2741 = vmatpush1.bf16.msra.mxu0 %v2287
  %2742 = vmatprep.subr.bf16.mxu0 0
  %2743 = vmatpush1.bf16.msra.mxu0 %v2288
  %2744 = vmatprep.subr.bf16.mxu0 0
  %2745 = vmatpush1.bf16.msra.mxu0 %v2289
  %2746 = vmatprep.subr.bf16.mxu0 0
  %2747 = vmatpush1.bf16.msra.mxu0 %v2290
  %2748 = vmatprep.subr.bf16.mxu0 0
  %2749 = vmatpush1.bf16.msra.mxu0 %v2291
  %2750 = vmatprep.subr.bf16.mxu0 0
  %2751 = vmatpush1.bf16.msra.mxu0 %v2292
  %2752 = vmatprep.subr.bf16.mxu0 0
  %2753 = vmatpush1.bf16.msra.mxu0 %v2293
  %2754 = vmatprep.subr.bf16.mxu0 0
  %2755 = vmatpush1.bf16.msra.mxu0 %v2294
  %2756 = vmatprep.subr.bf16.mxu0 0
  %2757 = vmatpush1.bf16.msra.mxu0 %v2295
  %2758 = vmatprep.subr.bf16.mxu0 0
  %2759 = vmatpush1.bf16.msra.mxu0 %v2296
  %2760 = vmatprep.subr.bf16.mxu0 0
  %2761 = vmatpush1.bf16.msra.mxu0 %v2297
  %2762 = vmatprep.subr.bf16.mxu0 0
  %2763 = vmatpush1.bf16.msra.mxu0 %v2298
  %2764 = vmatprep.subr.bf16.mxu0 0
  %2765 = vmatpush1.bf16.msra.mxu0 %v2299
  %2766 = vmatprep.subr.bf16.mxu0 0
  %2767 = vmatpush1.bf16.msra.mxu0 %v2300
  %2768 = vmatprep.subr.bf16.mxu0 0
  %2769 = vmatpush1.bf16.msra.mxu0 %v2301
  %2770 = vmatprep.mubr.bf16.mxu0 %v1394
  %2771 = vmatmul.mubr.bf16.gmra.mrb[0].mxu0 %v1393
  %v2772 = vpop.f32.mrb[0].mxu0
  %v2773 = vadd.f32 %v2708, %v2772
  %v2774 = vpop.f32.mrb[0].mxu0
  %v2775 = vpop.f32.mrb[0].mxu0
  %v2776 = vadd.f32 %v2711, %v2775
  %v2777 = vpop.f32.mrb[0].mxu0
  %2778 = vmatprep.mubr.bf16.mxu0 %v1410
  %2779 = vmatmul.mubr.bf16.gmra.mrb[0].mxu0 %v1409
  %v2780 = vpop.f32.mrb[0].mxu0
  %v2781 = vadd.f32 %v2716, %v2780
  %v2782 = vpop.f32.mrb[0].mxu0
  %v2783 = vpop.f32.mrb[0].mxu0
  %v2784 = vadd.f32 %v2719, %v2783
  %v2785 = vpop.f32.mrb[0].mxu0
  %2786 = vmatprep.mubr.bf16.mxu0 %v1426
  %2787 = vmatmul.mubr.bf16.gmra.mrb[0].mxu0 %v1425
  %v2788 = vpop.f32.mrb[0].mxu0
  %v2789 = vadd.f32 %v2724, %v2788
  %v2790 = vpop.f32.mrb[0].mxu0
  %v2791 = vpop.f32.mrb[0].mxu0
  %v2792 = vadd.f32 %v2727, %v2791
  %v2793 = vpop.f32.mrb[0].mxu0
  %2794 = vmatprep.mubr.bf16.mxu0 %v1442
  %2795 = vmatmul.mubr.bf16.gmra.mrb[0].mxu0 %v1441
  %v2796 = vpop.f32.mrb[0].mxu0
  %v2797 = vadd.f32 %v2732, %v2796
  %v2798 = vpop.f32.mrb[0].mxu0
  %v2799 = vpop.f32.mrb[0].mxu0
  %v2800 = vadd.f32 %v2735, %v2799
  %v2801 = vpop.f32.mrb[0].mxu0
  %2802 = vdwg.mxu0
  %2803 = vmatprep.subr.bf16.mxu0 0
  %2804 = vmatpush1.bf16.msra.mxu0 %v2302
  %2805 = vmatprep.subr.bf16.mxu0 0
  %2806 = vmatpush1.bf16.msra.mxu0 %v2303
  %2807 = vmatprep.subr.bf16.mxu0 0
  %2808 = vmatpush1.bf16.msra.mxu0 %v2304
  %2809 = vmatprep.subr.bf16.mxu0 0
  %2810 = vmatpush1.bf16.msra.mxu0 %v2305
  %2811 = vmatprep.subr.bf16.mxu0 0
  %2812 = vmatpush1.bf16.msra.mxu0 %v2306
  %2813 = vmatprep.subr.bf16.mxu0 0
  %2814 = vmatpush1.bf16.msra.mxu0 %v2307
  %2815 = vmatprep.subr.bf16.mxu0 0
  %2816 = vmatpush1.bf16.msra.mxu0 %v2308
  %2817 = vmatprep.subr.bf16.mxu0 0
  %2818 = vmatpush1.bf16.msra.mxu0 %v2309
  %2819 = vmatprep.subr.bf16.mxu0 0
  %2820 = vmatpush1.bf16.msra.mxu0 %v2310
  %2821 = vmatprep.subr.bf16.mxu0 0
  %2822 = vmatpush1.bf16.msra.mxu0 %v2311
  %2823 = vmatprep.subr.bf16.mxu0 0
  %2824 = vmatpush1.bf16.msra.mxu0 %v2312
  %2825 = vmatprep.subr.bf16.mxu0 0
  %2826 = vmatpush1.bf16.msra.mxu0 %v2313
  %2827 = vmatprep.subr.bf16.mxu0 0
  %2828 = vmatpush1.bf16.msra.mxu0 %v2314
  %2829 = vmatprep.subr.bf16.mxu0 0
  %2830 = vmatpush1.bf16.msra.mxu0 %v2315
  %2831 = vmatprep.subr.bf16.mxu0 0
  %2832 = vmatpush1.bf16.msra.mxu0 %v2316
  %2833 = vmatprep.subr.bf16.mxu0 0
  %2834 = vmatpush1.bf16.msra.mxu0 %v2317
  %2835 = vmatprep.mubr.bf16.mxu0 %v1396
  %2836 = vmatmul.mubr.bf16.gmra.mrb[0].mxu0 %v1395
  %v2837 = vpop.f32.mrb[0].mxu0
  %v2838 = vadd.f32 %v2773, %v2837
  %v2839 = vpop.f32.mrb[0].mxu0
  %v2840 = vpop.f32.mrb[0].mxu0
  %v2841 = vadd.f32 %v2776, %v2840
  %v2842 = vpop.f32.mrb[0].mxu0
  %2843 = vmatprep.mubr.bf16.mxu0 %v1412
  %2844 = vmatmul.mubr.bf16.gmra.mrb[0].mxu0 %v1411
  %v2845 = vpop.f32.mrb[0].mxu0
  %v2846 = vadd.f32 %v2781, %v2845
  %v2847 = vpop.f32.mrb[0].mxu0
  %v2848 = vpop.f32.mrb[0].mxu0
  %v2849 = vadd.f32 %v2784, %v2848
  %v2850 = vpop.f32.mrb[0].mxu0
  %2851 = vmatprep.mubr.bf16.mxu0 %v1428
  %2852 = vmatmul.mubr.bf16.gmra.mrb[0].mxu0 %v1427
  %v2853 = vpop.f32.mrb[0].mxu0
  %v2854 = vadd.f32 %v2789, %v2853
  %v2855 = vpop.f32.mrb[0].mxu0
  %v2856 = vpop.f32.mrb[0].mxu0
  %v2857 = vadd.f32 %v2792, %v2856
  %v2858 = vpop.f32.mrb[0].mxu0
  %2859 = vmatprep.mubr.bf16.mxu0 %v1444
  %2860 = vmatmul.mubr.bf16.gmra.mrb[0].mxu0 %v1443
  %v2861 = vpop.f32.mrb[0].mxu0
  %v2862 = vadd.f32 %v2797, %v2861
  %v2863 = vpop.f32.mrb[0].mxu0
  %v2864 = vpop.f32.mrb[0].mxu0
  %v2865 = vadd.f32 %v2800, %v2864
  %v2866 = vpop.f32.mrb[0].mxu0
  %2867 = vdwg.mxu0
  %2868 = vmatprep.subr.bf16.mxu0 0
  %2869 = vmatpush1.bf16.msra.mxu0 %v2318
  %2870 = vmatprep.subr.bf16.mxu0 0
  %2871 = vmatpush1.bf16.msra.mxu0 %v2319
  %2872 = vmatprep.subr.bf16.mxu0 0
  %2873 = vmatpush1.bf16.msra.mxu0 %v2320
  %2874 = vmatprep.subr.bf16.mxu0 0
  %2875 = vmatpush1.bf16.msra.mxu0 %v2321
  %2876 = vmatprep.subr.bf16.mxu0 0
  %2877 = vmatpush1.bf16.msra.mxu0 %v2322
  %2878 = vmatprep.subr.bf16.mxu0 0
  %2879 = vmatpush1.bf16.msra.mxu0 %v2323
  %2880 = vmatprep.subr.bf16.mxu0 0
  %2881 = vmatpush1.bf16.msra.mxu0 %v2324
  %2882 = vmatprep.subr.bf16.mxu0 0
  %2883 = vmatpush1.bf16.msra.mxu0 %v2325
  %2884 = vmatprep.subr.bf16.mxu0 0
  %2885 = vmatpush1.bf16.msra.mxu0 %v2326
  %2886 = vmatprep.subr.bf16.mxu0 0
  %2887 = vmatpush1.bf16.msra.mxu0 %v2327
  %2888 = vmatprep.subr.bf16.mxu0 0
  %2889 = vmatpush1.bf16.msra.mxu0 %v2328
  %2890 = vmatprep.subr.bf16.mxu0 0
  %2891 = vmatpush1.bf16.msra.mxu0 %v2329
  %2892 = vmatprep.subr.bf16.mxu0 0
  %2893 = vmatpush1.bf16.msra.mxu0 %v2330
  %2894 = vmatprep.subr.bf16.mxu0 0
  %2895 = vmatpush1.bf16.msra.mxu0 %v2331
  %2896 = vmatprep.subr.bf16.mxu0 0
  %2897 = vmatpush1.bf16.msra.mxu0 %v2332
  %2898 = vmatprep.subr.bf16.mxu0 0
  %2899 = vmatpush1.bf16.msra.mxu0 %v2333
  %2900 = vmatprep.mubr.bf16.mxu0 %v1398
  %2901 = vmatmul.mubr.bf16.gmra.mrb[0].mxu0 %v1397
  %v2902 = vpop.f32.mrb[0].mxu0
  %v2903 = vadd.f32 %v2838, %v2902
  %v2904 = vpop.f32.mrb[0].mxu0
  %v2905 = vpop.f32.mrb[0].mxu0
  %v2906 = vadd.f32 %v2841, %v2905
  %v2907 = vpop.f32.mrb[0].mxu0
  %2908 = vmatprep.mubr.bf16.mxu0 %v1414
  %2909 = vmatmul.mubr.bf16.gmra.mrb[0].mxu0 %v1413
  %v2910 = vpop.f32.mrb[0].mxu0
  %v2911 = vadd.f32 %v2846, %v2910
  %v2912 = vpop.f32.mrb[0].mxu0
  %v2913 = vpop.f32.mrb[0].mxu0
  %v2914 = vadd.f32 %v2849, %v2913
  %v2915 = vpop.f32.mrb[0].mxu0
  %2916 = vmatprep.mubr.bf16.mxu0 %v1430
  %2917 = vmatmul.mubr.bf16.gmra.mrb[0].mxu0 %v1429
  %v2918 = vpop.f32.mrb[0].mxu0
  %v2919 = vadd.f32 %v2854, %v2918
  %v2920 = vpop.f32.mrb[0].mxu0
  %v2921 = vpop.f32.mrb[0].mxu0
  %v2922 = vadd.f32 %v2857, %v2921
  %v2923 = vpop.f32.mrb[0].mxu0
  %2924 = vmatprep.mubr.bf16.mxu0 %v1446
  %2925 = vmatmul.mubr.bf16.gmra.mrb[0].mxu0 %v1445
  %v2926 = vpop.f32.mrb[0].mxu0
  %v2927 = vadd.f32 %v2862, %v2926
  %v2928 = vpop.f32.mrb[0].mxu0
  %v2929 = vpop.f32.mrb[0].mxu0
  %v2930 = vadd.f32 %v2865, %v2929
  %v2931 = vpop.f32.mrb[0].mxu0
  %2932 = vdwg.mxu0
  %2933 = vmatprep.subr.bf16.mxu0 0
  %2934 = vmatpush1.bf16.msra.mxu0 %v2334
  %2935 = vmatprep.subr.bf16.mxu0 0
  %2936 = vmatpush1.bf16.msra.mxu0 %v2335
  %2937 = vmatprep.subr.bf16.mxu0 0
  %2938 = vmatpush1.bf16.msra.mxu0 %v2336
  %2939 = vmatprep.subr.bf16.mxu0 0
  %2940 = vmatpush1.bf16.msra.mxu0 %v2337
  %2941 = vmatprep.subr.bf16.mxu0 0
  %2942 = vmatpush1.bf16.msra.mxu0 %v2338
  %2943 = vmatprep.subr.bf16.mxu0 0
  %2944 = vmatpush1.bf16.msra.mxu0 %v2339
  %2945 = vmatprep.subr.bf16.mxu0 0
  %2946 = vmatpush1.bf16.msra.mxu0 %v2340
  %2947 = vmatprep.subr.bf16.mxu0 0
  %2948 = vmatpush1.bf16.msra.mxu0 %v2341
  %2949 = vmatprep.subr.bf16.mxu0 0
  %2950 = vmatpush1.bf16.msra.mxu0 %v2342
  %2951 = vmatprep.subr.bf16.mxu0 0
  %2952 = vmatpush1.bf16.msra.mxu0 %v2343
  %2953 = vmatprep.subr.bf16.mxu0 0
  %2954 = vmatpush1.bf16.msra.mxu0 %v2344
  %2955 = vmatprep.subr.bf16.mxu0 0
  %2956 = vmatpush1.bf16.msra.mxu0 %v2345
  %2957 = vmatprep.subr.bf16.mxu0 0
  %2958 = vmatpush1.bf16.msra.mxu0 %v2346
  %2959 = vmatprep.subr.bf16.mxu0 0
  %2960 = vmatpush1.bf16.msra.mxu0 %v2347
  %2961 = vmatprep.subr.bf16.mxu0 0
  %2962 = vmatpush1.bf16.msra.mxu0 %v2348
  %2963 = vmatprep.subr.bf16.mxu0 0
  %2964 = vmatpush1.bf16.msra.mxu0 %v2349
  %2965 = vmatprep.mubr.bf16.mxu0 %v1400
  %2966 = vmatmul.mubr.bf16.gmra.mrb[0].mxu0 %v1399
  %v2967 = vpop.f32.mrb[0].mxu0
  %v2968 = vadd.f32 %v2903, %v2967
  %v2969 = vpop.f32.mrb[0].mxu0
  %v2970 = vpop.f32.mrb[0].mxu0
  %v2971 = vadd.f32 %v2906, %v2970
  %v2972 = vpop.f32.mrb[0].mxu0
  %2973 = vmatprep.mubr.bf16.mxu0 %v1416
  %2974 = vmatmul.mubr.bf16.gmra.mrb[0].mxu0 %v1415
  %v2975 = vpop.f32.mrb[0].mxu0
  %v2976 = vadd.f32 %v2911, %v2975
  %v2977 = vpop.f32.mrb[0].mxu0
  %v2978 = vpop.f32.mrb[0].mxu0
  %v2979 = vadd.f32 %v2914, %v2978
  %v2980 = vpop.f32.mrb[0].mxu0
  %2981 = vmatprep.mubr.bf16.mxu0 %v1432
  %2982 = vmatmul.mubr.bf16.gmra.mrb[0].mxu0 %v1431
  %v2983 = vpop.f32.mrb[0].mxu0
  %v2984 = vadd.f32 %v2919, %v2983
  %v2985 = vpop.f32.mrb[0].mxu0
  %v2986 = vpop.f32.mrb[0].mxu0
  %v2987 = vadd.f32 %v2922, %v2986
  %v2988 = vpop.f32.mrb[0].mxu0
  %2989 = vmatprep.mubr.bf16.mxu0 %v1448
  %2990 = vmatmul.mubr.bf16.gmra.mrb[0].mxu0 %v1447
  %v2991 = vpop.f32.mrb[0].mxu0
  %v2992 = vadd.f32 %v2927, %v2991
  %v2993 = vpop.f32.mrb[0].mxu0
  %v2994 = vpop.f32.mrb[0].mxu0
  %v2995 = vadd.f32 %v2930, %v2994
  %v2996 = vpop.f32.mrb[0].mxu0
  %2997 = vdwg.mxu0
  %v2998 = vadd.f32 %v372, %v2968
  %v2999 = vadd.f32 %v373, %v2971
  %v3000 = vadd.f32 %v374, %v2976
  %v3001 = vadd.f32 %v375, %v2979
  %v3002 = vadd.f32 %v376, %v2984
  %v3003 = vadd.f32 %v377, %v2987
  %v3004 = vadd.f32 %v378, %v2992
  %v3005 = vadd.f32 %v379, %v2995
  %v3006 = vld [vmem:[%s5 + $0x24] sm:$0x1]
  %v3007 = vld [vmem:[%s5 + $0x25] sm:$0x1]
  %v3008 = vsel %vm250, %v2998, 0.0
  %3009 = vadd.xlane.f32.xlu0 %v3008
  %v3010 = vpop.xlane.xlu0 %3009
  %v3011 = vsel %vm250, %v2999, 0.0
  %3012 = vadd.xlane.f32.xlu0 %v3011
  %v3013 = vpop.xlane.xlu0 %3012
  %v3014 = vsel %vm250, %v3000, 0.0
  %3015 = vadd.xlane.f32.xlu0 %v3014
  %v3016 = vpop.xlane.xlu0 %3015
  %v3017 = vsel %vm250, %v3001, 0.0
  %3018 = vadd.xlane.f32.xlu0 %v3017
  %v3019 = vpop.xlane.xlu0 %3018
  %v3020 = vsel %vm250, %v3002, 0.0
  %3021 = vadd.xlane.f32.xlu0 %v3020
  %v3022 = vpop.xlane.xlu0 %3021
  %v3023 = vsel %vm250, %v3003, 0.0
  %3024 = vadd.xlane.f32.xlu0 %v3023
  %v3025 = vpop.xlane.xlu0 %3024
  %v3026 = vsel %vm250, %v3004, 0.0
  %3027 = vadd.xlane.f32.xlu0 %v3026
  %v3028 = vpop.xlane.xlu0 %3027
  %v3029 = vsel %vm250, %v3005, 0.0
  %3030 = vadd.xlane.f32.xlu0 %v3029
  %v3031 = vpop.xlane.xlu0 %3030
  %v3032 = vmul.f32 %v3010, %v275
  %v3033 = vmul.f32 %v3013, %v275
  %v3034 = vmul.f32 %v3016, %v275
  %v3035 = vmul.f32 %v3019, %v275
  %v3036 = vmul.f32 %v3022, %v275
  %v3037 = vmul.f32 %v3025, %v275
  %v3038 = vmul.f32 %v3028, %v275
  %v3039 = vmul.f32 %v3031, %v275
  %v3040 = vsub.f32 %v2998, %v3032
  %v3041 = vsub.f32 %v2999, %v3033
  %v3042 = vsub.f32 %v3000, %v3034
  %v3043 = vsub.f32 %v3001, %v3035
  %v3044 = vsub.f32 %v3002, %v3036
  %v3045 = vsub.f32 %v3003, %v3037
  %v3046 = vsub.f32 %v3004, %v3038
  %v3047 = vsub.f32 %v3005, %v3039
  %v3048 = vmul.f32 %v3040, %v3040
  %v3049 = vmul.f32 %v3041, %v3041
  %v3050 = vmul.f32 %v3042, %v3042
  %v3051 = vmul.f32 %v3043, %v3043
  %v3052 = vmul.f32 %v3044, %v3044
  %v3053 = vmul.f32 %v3045, %v3045
  %v3054 = vmul.f32 %v3046, %v3046
  %v3055 = vmul.f32 %v3047, %v3047
  %v3056 = vsel %vm250, %v3048, 0.0
  %3057 = vadd.xlane.f32.xlu0 %v3056
  %v3058 = vpop.xlane.xlu0 %3057
  %v3059 = vsel %vm250, %v3049, 0.0
  %3060 = vadd.xlane.f32.xlu0 %v3059
  %v3061 = vpop.xlane.xlu0 %3060
  %v3062 = vsel %vm250, %v3050, 0.0
  %3063 = vadd.xlane.f32.xlu0 %v3062
  %v3064 = vpop.xlane.xlu0 %3063
  %v3065 = vsel %vm250, %v3051, 0.0
  %3066 = vadd.xlane.f32.xlu0 %v3065
  %v3067 = vpop.xlane.xlu0 %3066
  %v3068 = vsel %vm250, %v3052, 0.0
  %3069 = vadd.xlane.f32.xlu0 %v3068
  %v3070 = vpop.xlane.xlu0 %3069
  %v3071 = vsel %vm250, %v3053, 0.0
  %3072 = vadd.xlane.f32.xlu0 %v3071
  %v3073 = vpop.xlane.xlu0 %3072
  %v3074 = vsel %vm250, %v3054, 0.0
  %3075 = vadd.xlane.f32.xlu0 %v3074
  %v3076 = vpop.xlane.xlu0 %3075
  %v3077 = vsel %vm250, %v3055, 0.0
  %3078 = vadd.xlane.f32.xlu0 %v3077
  %v3079 = vpop.xlane.xlu0 %3078
  %v3080 = vmul.f32 %v3058, %v275
  %v3081 = vmul.f32 %v3061, %v275
  %v3082 = vmul.f32 %v3064, %v275
  %v3083 = vmul.f32 %v3067, %v275
  %v3084 = vmul.f32 %v3070, %v275
  %v3085 = vmul.f32 %v3073, %v275
  %v3086 = vmul.f32 %v3076, %v275
  %v3087 = vmul.f32 %v3079, %v275
  %v3088 = vadd.f32 %v3080, 1e-05
  %v3089 = vadd.f32 %v3081, 1e-05
  %v3090 = vadd.f32 %v3082, 1e-05
  %v3091 = vadd.f32 %v3083, 1e-05
  %v3092 = vadd.f32 %v3084, 1e-05
  %v3093 = vadd.f32 %v3085, 1e-05
  %v3094 = vadd.f32 %v3086, 1e-05
  %v3095 = vadd.f32 %v3087, 1e-05
  %v3096 = vrsqrt.pop %v3088
  %v3097 = vrsqrt.pop %v3089
  %v3098 = vrsqrt.pop %v3090
  %v3099 = vrsqrt.pop %v3091
  %v3100 = vrsqrt.pop %v3092
  %v3101 = vrsqrt.pop %v3093
  %v3102 = vrsqrt.pop %v3094
  %v3103 = vrsqrt.pop %v3095
  %v3104 = vmul.f32 %v3040, %v3096
  %v3105 = vmul.f32 %v3041, %v3097
  %v3106 = vmul.f32 %v3042, %v3098
  %v3107 = vmul.f32 %v3043, %v3099
  %v3108 = vmul.f32 %v3044, %v3100
  %v3109 = vmul.f32 %v3045, %v3101
  %v3110 = vmul.f32 %v3046, %v3102
  %v3111 = vmul.f32 %v3047, %v3103
  %v3112 = vlaneseq
  %v3113 = vshrl.u32 %v3112, 7
  %v3114 = vsub.s32 0, %v3113
  %v3115 = vrot.slane %v3006, %v3114
  %v3116 = vmul.f32 %v3104, %v3115
  %v3117 = vmul.f32 %v3105, %v3115
  %v3118 = vmul.f32 %v3106, %v3115
  %v3119 = vmul.f32 %v3107, %v3115
  %v3120 = vmul.f32 %v3108, %v3115
  %v3121 = vmul.f32 %v3109, %v3115
  %v3122 = vmul.f32 %v3110, %v3115
  %v3123 = vmul.f32 %v3111, %v3115
  %v3124 = vlaneseq
  %v3125 = vshrl.u32 %v3124, 7
  %v3126 = vsub.s32 0, %v3125
  %v3127 = vrot.slane %v3007, %v3126
  %v3128 = vadd.f32 %v3116, %v3127
  %v3129 = vadd.f32 %v3117, %v3127
  %v3130 = vadd.f32 %v3118, %v3127
  %v3131 = vadd.f32 %v3119, %v3127
  %v3132 = vadd.f32 %v3120, %v3127
  %v3133 = vadd.f32 %v3121, %v3127
  %v3134 = vadd.f32 %v3122, %v3127
  %v3135 = vadd.f32 %v3123, %v3127
  %s3136 = scalar_lea.vmem %s5, 40
  %v3137 = vld [vmem:[%s3136] sm:$0xff]
  %v3138 = vld [vmem:[%s3136 + $0x8] sm:$0xff]
  %v3139 = vld [vmem:[%s3136 + $0x10] sm:$0xff]
  %v3140 = vld [vmem:[%s3136 + $0x18] sm:$0xff]
  %v3141 = vld [vmem:[%s3136 + $0x20] sm:$0x1]
  %v3142 = vlaneseq
  %v3143 = vshrl.u32 %v3142, 7
  %v3144 = vsub.s32 0, %v3143
  %v3145 = vrot.slane %v3141, %v3144
  %v3147 = vsel %vm250, %v3128, 0
  %v3150 = vsel %vm250, %v3129, 0
  %v3153 = vsel %vm250, %v3130, 0
  %v3156 = vsel %vm250, %v3131, 0
  %v3159 = vsel %vm250, %v3132, 0
  %v3162 = vsel %vm250, %v3133, 0
  %v3165 = vsel %vm250, %v3134, 0
  %v3168 = vsel %vm250, %v3135, 0
  %3170 = vmatprep.subr.mxu0 0.0
  %3171 = vmatpush1.msra.mxu0 %v3137
  %3172 = vmatprep.subr.mxu0 0.0
  %3173 = vmatpush1.msra.mxu0 %v3138
  %3174 = vmatprep.subr.mxu0 0.0
  %3175 = vmatpush1.msra.mxu0 %v3139
  %3176 = vmatprep.subr.mxu0 0.0
  %3177 = vmatpush1.msra.mxu0 %v3140
  %3178 = vmatprep.subr.mxu0 0.0
  %3179 = vmatpush1.msra.mxu0 0.0
  %3180 = vmatprep.subr.mxu0 0.0
  %3181 = vmatpush1.msra.mxu0 0.0
  %3182 = vmatprep.subr.mxu0 0.0
  %3183 = vmatpush1.msra.mxu0 0.0
  %3184 = vmatprep.subr.mxu0 0.0
  %3185 = vmatpush1.msra.mxu0 0.0
  %3186 = vmatprep.subr.mxu0 0.0
  %3187 = vmatpush1.msra.mxu0 0.0
  %3188 = vmatprep.subr.mxu0 0.0
  %3189 = vmatpush1.msra.mxu0 0.0
  %3190 = vmatprep.subr.mxu0 0.0
  %3191 = vmatpush1.msra.mxu0 0.0
  %3192 = vmatprep.subr.mxu0 0.0
  %3193 = vmatpush1.msra.mxu0 0.0
  %3194 = vmatprep.subr.mxu0 0.0
  %3195 = vmatpush1.msra.mxu0 0.0
  %3196 = vmatprep.subr.mxu0 0.0
  %3197 = vmatpush1.msra.mxu0 0.0
  %3198 = vmatprep.subr.mxu0 0.0
  %3199 = vmatpush1.msra.mxu0 0.0
  %3200 = vmatprep.subr.mxu0 0.0
  %3201 = vmatpush1.msra.mxu0 0.0
  %3202 = vmatprep.subr.mxu0 0.0
  %3203 = vmatpush1.msra.mxu0 0.0
  %3204 = vmatprep.subr.mxu0 0.0
  %3205 = vmatpush1.msra.mxu0 0.0
  %3206 = vmatprep.subr.mxu0 0.0
  %3207 = vmatpush1.msra.mxu0 0.0
  %3208 = vmatprep.subr.mxu0 0.0
  %3209 = vmatpush1.msra.mxu0 0.0
  %3210 = vmatprep.subr.mxu0 0.0
  %3211 = vmatpush1.msra.mxu0 0.0
  %3212 = vmatprep.subr.mxu0 0.0
  %3213 = vmatpush1.msra.mxu0 0.0
  %3214 = vmatprep.subr.mxu0 0.0
  %3215 = vmatpush1.msra.mxu0 0.0
  %3216 = vmatprep.subr.mxu0 0.0
  %3217 = vmatpush1.msra.mxu0 0.0
  %3218 = vmatprep.subr.mxu0 0.0
  %3219 = vmatpush1.msra.mxu0 0.0
  %3220 = vmatprep.subr.mxu0 0.0
  %3221 = vmatpush1.msra.mxu0 0.0
  %3222 = vmatprep.subr.mxu0 0.0
  %3223 = vmatpush1.msra.mxu0 0.0
  %3224 = vmatprep.subr.mxu0 0.0
  %3225 = vmatpush1.msra.mxu0 0.0
  %3226 = vmatprep.subr.mxu0 0.0
  %3227 = vmatpush1.msra.mxu0 0.0
  %3228 = vmatprep.subr.mxu0 0.0
  %3229 = vmatpush1.msra.mxu0 0.0
  %3230 = vmatprep.subr.mxu0 0.0
  %3231 = vmatpush1.msra.mxu0 0.0
  %3232 = vmatprep.subr.mxu0 0.0
  %3233 = vmatpush1.msra.mxu0 0.0
  %3234 = vmatprep.mubr.f32.mxu0 0.0
  %3235 = vmatmul.mubr.f32.gmra.mrb[0].mxu0 %v3147
  %v3236 = vpop.f32.mrb[0].mxu0
  %v3237 = vadd.f32 %v3145, %v3236
  %v3238 = vpop.f32.mrb[0].mxu0
  %3239 = vmatprep.mubr.f32.mxu0 0.0
  %3240 = vmatmul.mubr.f32.gmra.mrb[0].mxu0 %v3150
  %v3241 = vpop.f32.mrb[0].mxu0
  %v3242 = vadd.f32 %v3145, %v3241
  %v3243 = vpop.f32.mrb[0].mxu0
  %3244 = vmatprep.mubr.f32.mxu0 0.0
  %3245 = vmatmul.mubr.f32.gmra.mrb[0].mxu0 %v3153
  %v3246 = vpop.f32.mrb[0].mxu0
  %v3247 = vadd.f32 %v3145, %v3246
  %v3248 = vpop.f32.mrb[0].mxu0
  %3249 = vmatprep.mubr.f32.mxu0 0.0
  %3250 = vmatmul.mubr.f32.gmra.mrb[0].mxu0 %v3156
  %v3251 = vpop.f32.mrb[0].mxu0
  %v3252 = vadd.f32 %v3145, %v3251
  %v3253 = vpop.f32.mrb[0].mxu0
  %3254 = vmatprep.mubr.f32.mxu0 0.0
  %3255 = vmatmul.mubr.f32.gmra.mrb[0].mxu0 %v3159
  %v3256 = vpop.f32.mrb[0].mxu0
  %v3257 = vadd.f32 %v3145, %v3256
  %v3258 = vpop.f32.mrb[0].mxu0
  %3259 = vmatprep.mubr.f32.mxu0 0.0
  %3260 = vmatmul.mubr.f32.gmra.mrb[0].mxu0 %v3162
  %v3261 = vpop.f32.mrb[0].mxu0
  %v3262 = vadd.f32 %v3145, %v3261
  %v3263 = vpop.f32.mrb[0].mxu0
  %3264 = vmatprep.mubr.f32.mxu0 0.0
  %3265 = vmatmul.mubr.f32.gmra.mrb[0].mxu0 %v3165
  %v3266 = vpop.f32.mrb[0].mxu0
  %v3267 = vadd.f32 %v3145, %v3266
  %v3268 = vpop.f32.mrb[0].mxu0
  %3269 = vmatprep.mubr.f32.mxu0 0.0
  %3270 = vmatmul.mubr.f32.gmra.mrb[0].mxu0 %v3168
  %v3271 = vpop.f32.mrb[0].mxu0
  %v3272 = vadd.f32 %v3145, %v3271
  %v3273 = vpop.f32.mrb[0].mxu0
  %3274 = vdwg.mxu0
  %v3275 = vld [vmem:[%s3136 + $0x21] sm:$0x1]
  %v3276 = vld [vmem:[%s3136 + $0x22] sm:$0x1]
  %v3277 = vsel %vm250, %v3237, 0.0
  %3278 = vadd.xlane.f32.xlu0 %v3277
  %v3279 = vpop.xlane.xlu0 %3278
  %v3280 = vsel %vm250, %v3242, 0.0
  %3281 = vadd.xlane.f32.xlu0 %v3280
  %v3282 = vpop.xlane.xlu0 %3281
  %v3283 = vsel %vm250, %v3247, 0.0
  %3284 = vadd.xlane.f32.xlu0 %v3283
  %v3285 = vpop.xlane.xlu0 %3284
  %v3286 = vsel %vm250, %v3252, 0.0
  %3287 = vadd.xlane.f32.xlu0 %v3286
  %v3288 = vpop.xlane.xlu0 %3287
  %v3289 = vsel %vm250, %v3257, 0.0
  %3290 = vadd.xlane.f32.xlu0 %v3289
  %v3291 = vpop.xlane.xlu0 %3290
  %v3292 = vsel %vm250, %v3262, 0.0
  %3293 = vadd.xlane.f32.xlu0 %v3292
  %v3294 = vpop.xlane.xlu0 %3293
  %v3295 = vsel %vm250, %v3267, 0.0
  %3296 = vadd.xlane.f32.xlu0 %v3295
  %v3297 = vpop.xlane.xlu0 %3296
  %v3298 = vsel %vm250, %v3272, 0.0
  %3299 = vadd.xlane.f32.xlu0 %v3298
  %v3300 = vpop.xlane.xlu0 %3299
  %v3301 = vmul.f32 %v3279, %v275
  %v3302 = vmul.f32 %v3282, %v275
  %v3303 = vmul.f32 %v3285, %v275
  %v3304 = vmul.f32 %v3288, %v275
  %v3305 = vmul.f32 %v3291, %v275
  %v3306 = vmul.f32 %v3294, %v275
  %v3307 = vmul.f32 %v3297, %v275
  %v3308 = vmul.f32 %v3300, %v275
  %v3309 = vsub.f32 %v3237, %v3301
  %v3310 = vsub.f32 %v3242, %v3302
  %v3311 = vsub.f32 %v3247, %v3303
  %v3312 = vsub.f32 %v3252, %v3304
  %v3313 = vsub.f32 %v3257, %v3305
  %v3314 = vsub.f32 %v3262, %v3306
  %v3315 = vsub.f32 %v3267, %v3307
  %v3316 = vsub.f32 %v3272, %v3308
  %v3317 = vmul.f32 %v3309, %v3309
  %v3318 = vmul.f32 %v3310, %v3310
  %v3319 = vmul.f32 %v3311, %v3311
  %v3320 = vmul.f32 %v3312, %v3312
  %v3321 = vmul.f32 %v3313, %v3313
  %v3322 = vmul.f32 %v3314, %v3314
  %v3323 = vmul.f32 %v3315, %v3315
  %v3324 = vmul.f32 %v3316, %v3316
  %v3325 = vsel %vm250, %v3317, 0.0
  %3326 = vadd.xlane.f32.xlu0 %v3325
  %v3327 = vpop.xlane.xlu0 %3326
  %v3328 = vsel %vm250, %v3318, 0.0
  %3329 = vadd.xlane.f32.xlu0 %v3328
  %v3330 = vpop.xlane.xlu0 %3329
  %v3331 = vsel %vm250, %v3319, 0.0
  %3332 = vadd.xlane.f32.xlu0 %v3331
  %v3333 = vpop.xlane.xlu0 %3332
  %v3334 = vsel %vm250, %v3320, 0.0
  %3335 = vadd.xlane.f32.xlu0 %v3334
  %v3336 = vpop.xlane.xlu0 %3335
  %v3337 = vsel %vm250, %v3321, 0.0
  %3338 = vadd.xlane.f32.xlu0 %v3337
  %v3339 = vpop.xlane.xlu0 %3338
  %v3340 = vsel %vm250, %v3322, 0.0
  %3341 = vadd.xlane.f32.xlu0 %v3340
  %v3342 = vpop.xlane.xlu0 %3341
  %v3343 = vsel %vm250, %v3323, 0.0
  %3344 = vadd.xlane.f32.xlu0 %v3343
  %v3345 = vpop.xlane.xlu0 %3344
  %v3346 = vsel %vm250, %v3324, 0.0
  %3347 = vadd.xlane.f32.xlu0 %v3346
  %v3348 = vpop.xlane.xlu0 %3347
  %v3349 = vmul.f32 %v3327, %v275
  %v3350 = vmul.f32 %v3330, %v275
  %v3351 = vmul.f32 %v3333, %v275
  %v3352 = vmul.f32 %v3336, %v275
  %v3353 = vmul.f32 %v3339, %v275
  %v3354 = vmul.f32 %v3342, %v275
  %v3355 = vmul.f32 %v3345, %v275
  %v3356 = vmul.f32 %v3348, %v275
  %v3357 = vadd.f32 %v3349, 1e-05
  %v3358 = vadd.f32 %v3350, 1e-05
  %v3359 = vadd.f32 %v3351, 1e-05
  %v3360 = vadd.f32 %v3352, 1e-05
  %v3361 = vadd.f32 %v3353, 1e-05
  %v3362 = vadd.f32 %v3354, 1e-05
  %v3363 = vadd.f32 %v3355, 1e-05
  %v3364 = vadd.f32 %v3356, 1e-05
  %v3365 = vrsqrt.pop %v3357
  %v3366 = vrsqrt.pop %v3358
  %v3367 = vrsqrt.pop %v3359
  %v3368 = vrsqrt.pop %v3360
  %v3369 = vrsqrt.pop %v3361
  %v3370 = vrsqrt.pop %v3362
  %v3371 = vrsqrt.pop %v3363
  %v3372 = vrsqrt.pop %v3364
  %v3373 = vmul.f32 %v3309, %v3365
  %v3374 = vmul.f32 %v3310, %v3366
  %v3375 = vmul.f32 %v3311, %v3367
  %v3376 = vmul.f32 %v3312, %v3368
  %v3377 = vmul.f32 %v3313, %v3369
  %v3378 = vmul.f32 %v3314, %v3370
  %v3379 = vmul.f32 %v3315, %v3371
  %v3380 = vmul.f32 %v3316, %v3372
  %v3381 = vlaneseq
  %v3382 = vshrl.u32 %v3381, 7
  %v3383 = vsub.s32 0, %v3382
  %v3384 = vrot.slane %v3275, %v3383
  %v3385 = vmul.f32 %v3373, %v3384
  %v3386 = vmul.f32 %v3374, %v3384
  %v3387 = vmul.f32 %v3375, %v3384
  %v3388 = vmul.f32 %v3376, %v3384
  %v3389 = vmul.f32 %v3377, %v3384
  %v3390 = vmul.f32 %v3378, %v3384
  %v3391 = vmul.f32 %v3379, %v3384
  %v3392 = vmul.f32 %v3380, %v3384
  %v3393 = vlaneseq
  %v3394 = vshrl.u32 %v3393, 7
  %v3395 = vsub.s32 0, %v3394
  %v3396 = vrot.slane %v3276, %v3395
  %v3397 = vadd.f32 %v3385, %v3396
  %v3398 = vadd.f32 %v3386, %v3396
  %v3399 = vadd.f32 %v3387, %v3396
  %v3400 = vadd.f32 %v3388, %v3396
  %v3401 = vadd.f32 %v3389, %v3396
  %v3402 = vadd.f32 %v3390, %v3396
  %v3403 = vadd.f32 %v3391, %v3396
  %v3404 = vadd.f32 %v3392, %v3396
  %v3405 = vpack.c.bf16 %v3398, %v3397
  %v3406 = vpack.c.bf16 %v3400, %v3399
  %v3407 = vpack.c.bf16 %v3402, %v3401
  %v3408 = vpack.c.bf16 %v3404, %v3403
  %s3409 = scalar_lea.vmem %s2, 256
  %v3410 = vld [vmem:[%s3409] sm:$0xff]
  %v3411 = vld [vmem:[%s3409 + $0x8] sm:$0xff]
  %v3412 = vld [vmem:[%s3409 + $0x10] sm:$0xff]
  %v3413 = vld [vmem:[%s3409 + $0x18] sm:$0xff]
  %v3414 = vld [vmem:[%s3409 + $0x20] sm:$0xff]
  %v3415 = vld [vmem:[%s3409 + $0x28] sm:$0xff]
  %v3416 = vld [vmem:[%s3409 + $0x30] sm:$0xff]
  %v3417 = vld [vmem:[%s3409 + $0x38] sm:$0xff]
  %v3418 = vld [vmem:[%s3409 + $0x40] sm:$0xff]
  %v3419 = vld [vmem:[%s3409 + $0x48] sm:$0xff]
  %v3420 = vld [vmem:[%s3409 + $0x50] sm:$0xff]
  %v3421 = vld [vmem:[%s3409 + $0x58] sm:$0xff]
  %v3422 = vld [vmem:[%s3409 + $0x60] sm:$0xff]
  %v3423 = vld [vmem:[%s3409 + $0x68] sm:$0xff]
  %v3424 = vld [vmem:[%s3409 + $0x70] sm:$0xff]
  %v3425 = vld [vmem:[%s3409 + $0x78] sm:$0xff]
  %v3426 = vld [vmem:[%s3409 + $0x80] sm:$0xff]
  %v3427 = vld [vmem:[%s3409 + $0x88] sm:$0xff]
  %v3428 = vld [vmem:[%s3409 + $0x90] sm:$0xff]
  %v3429 = vld [vmem:[%s3409 + $0x98] sm:$0xff]
  %v3430 = vld [vmem:[%s3409 + $0xa0] sm:$0xff]
  %v3431 = vld [vmem:[%s3409 + $0xa8] sm:$0xff]
  %v3432 = vld [vmem:[%s3409 + $0xb0] sm:$0xff]
  %v3433 = vld [vmem:[%s3409 + $0xb8] sm:$0xff]
  %v3434 = vld [vmem:[%s3409 + $0xc0] sm:$0xff]
  %v3435 = vld [vmem:[%s3409 + $0xc8] sm:$0xff]
  %v3436 = vld [vmem:[%s3409 + $0xd0] sm:$0xff]
  %v3437 = vld [vmem:[%s3409 + $0xd8] sm:$0xff]
  %v3438 = vld [vmem:[%s3409 + $0xe0] sm:$0xff]
  %v3439 = vld [vmem:[%s3409 + $0xe8] sm:$0xff]
  %v3440 = vld [vmem:[%s3409 + $0xf0] sm:$0xff]
  %v3441 = vld [vmem:[%s3409 + $0xf8] sm:$0xff]
  %s3442 = scalar_lea.vmem %s4, 1
  %v3443 = vld [vmem:[%s3442] ss:$2 sm:$0xff]
  %s3444 = scalar_lea.vmem %s4, 17
  %v3445 = vld [vmem:[%s3444] ss:$2 sm:$0xff]
  %v3448 = vlaneseq
  %v3449 = vshrl.u32 %v3448, 7
  %v3450 = vsub.s32 0, %v3449
  %v3451 = vrot.slane %v3443, %v3450
  %v3452 = vlaneseq
  %v3453 = vshrl.u32 %v3452, 7
  %v3454 = vsub.s32 1, %v3453
  %v3455 = vrot.slane %v3443, %v3454
  %v3456 = vlaneseq
  %v3457 = vshrl.u32 %v3456, 7
  %v3458 = vsub.s32 2, %v3457
  %v3459 = vrot.slane %v3443, %v3458
  %v3460 = vlaneseq
  %v3461 = vshrl.u32 %v3460, 7
  %v3462 = vsub.s32 3, %v3461
  %v3463 = vrot.slane %v3443, %v3462
  %v3464 = vlaneseq
  %v3465 = vshrl.u32 %v3464, 7
  %v3466 = vsub.s32 4, %v3465
  %v3467 = vrot.slane %v3443, %v3466
  %v3468 = vlaneseq
  %v3469 = vshrl.u32 %v3468, 7
  %v3470 = vsub.s32 5, %v3469
  %v3471 = vrot.slane %v3443, %v3470
  %v3472 = vlaneseq
  %v3473 = vshrl.u32 %v3472, 7
  %v3474 = vsub.s32 6, %v3473
  %v3475 = vrot.slane %v3443, %v3474
  %v3476 = vlaneseq
  %v3477 = vshrl.u32 %v3476, 7
  %v3478 = vsub.s32 7, %v3477
  %v3479 = vrot.slane %v3443, %v3478
  %v3480 = vlaneseq
  %v3481 = vshrl.u32 %v3480, 7
  %v3482 = vsub.s32 0, %v3481
  %v3483 = vrot.slane %v3445, %v3482
  %v3484 = vlaneseq
  %v3485 = vshrl.u32 %v3484, 7
  %v3486 = vsub.s32 1, %v3485
  %v3487 = vrot.slane %v3445, %v3486
  %v3488 = vlaneseq
  %v3489 = vshrl.u32 %v3488, 7
  %v3490 = vsub.s32 2, %v3489
  %v3491 = vrot.slane %v3445, %v3490
  %v3492 = vlaneseq
  %v3493 = vshrl.u32 %v3492, 7
  %v3494 = vsub.s32 3, %v3493
  %v3495 = vrot.slane %v3445, %v3494
  %v3496 = vlaneseq
  %v3497 = vshrl.u32 %v3496, 7
  %v3498 = vsub.s32 4, %v3497
  %v3499 = vrot.slane %v3445, %v3498
  %v3500 = vlaneseq
  %v3501 = vshrl.u32 %v3500, 7
  %v3502 = vsub.s32 5, %v3501
  %v3503 = vrot.slane %v3445, %v3502
  %v3504 = vlaneseq
  %v3505 = vshrl.u32 %v3504, 7
  %v3506 = vsub.s32 6, %v3505
  %v3507 = vrot.slane %v3445, %v3506
  %v3508 = vlaneseq
  %v3509 = vshrl.u32 %v3508, 7
  %v3510 = vsub.s32 7, %v3509
  %v3511 = vrot.slane %v3445, %v3510
  %v3560 = vunpack.c.l.b16 %v3410
  %v3561 = vunpack.c.h.b16 %v3410
  %v3562 = vunpack.c.l.b16 %v3411
  %v3563 = vunpack.c.h.b16 %v3411
  %v3564 = vunpack.c.l.b16 %v3412
  %v3565 = vunpack.c.h.b16 %v3412
  %v3566 = vunpack.c.l.b16 %v3413
  %v3567 = vunpack.c.h.b16 %v3413
  %v3568 = vunpack.c.l.b16 %v3414
  %v3569 = vunpack.c.h.b16 %v3414
  %v3570 = vunpack.c.l.b16 %v3415
  %v3571 = vunpack.c.h.b16 %v3415
  %v3572 = vunpack.c.l.b16 %v3416
  %v3573 = vunpack.c.h.b16 %v3416
  %v3574 = vunpack.c.l.b16 %v3417
  %v3575 = vunpack.c.h.b16 %v3417
  %v3576 = vunpack.c.l.b16 %v3418
  %v3577 = vunpack.c.h.b16 %v3418
  %v3578 = vunpack.c.l.b16 %v3419
  %v3579 = vunpack.c.h.b16 %v3419
  %v3580 = vunpack.c.l.b16 %v3420
  %v3581 = vunpack.c.h.b16 %v3420
  %v3582 = vunpack.c.l.b16 %v3421
  %v3583 = vunpack.c.h.b16 %v3421
  %v3584 = vunpack.c.l.b16 %v3422
  %v3585 = vunpack.c.h.b16 %v3422
  %v3586 = vunpack.c.l.b16 %v3423
  %v3587 = vunpack.c.h.b16 %v3423
  %v3588 = vunpack.c.l.b16 %v3424
  %v3589 = vunpack.c.h.b16 %v3424
  %v3590 = vunpack.c.l.b16 %v3425
  %v3591 = vunpack.c.h.b16 %v3425
  %v3592 = vunpack.c.l.b16 %v3426
  %v3593 = vunpack.c.h.b16 %v3426
  %v3594 = vunpack.c.l.b16 %v3427
  %v3595 = vunpack.c.h.b16 %v3427
  %v3596 = vunpack.c.l.b16 %v3428
  %v3597 = vunpack.c.h.b16 %v3428
  %v3598 = vunpack.c.l.b16 %v3429
  %v3599 = vunpack.c.h.b16 %v3429
  %v3600 = vunpack.c.l.b16 %v3430
  %v3601 = vunpack.c.h.b16 %v3430
  %v3602 = vunpack.c.l.b16 %v3431
  %v3603 = vunpack.c.h.b16 %v3431
  %v3604 = vunpack.c.l.b16 %v3432
  %v3605 = vunpack.c.h.b16 %v3432
  %v3606 = vunpack.c.l.b16 %v3433
  %v3607 = vunpack.c.h.b16 %v3433
  %v3608 = vunpack.c.l.b16 %v3434
  %v3609 = vunpack.c.h.b16 %v3434
  %v3610 = vunpack.c.l.b16 %v3435
  %v3611 = vunpack.c.h.b16 %v3435
  %v3612 = vunpack.c.l.b16 %v3436
  %v3613 = vunpack.c.h.b16 %v3436
  %v3614 = vunpack.c.l.b16 %v3437
  %v3615 = vunpack.c.h.b16 %v3437
  %v3616 = vunpack.c.l.b16 %v3438
  %v3617 = vunpack.c.h.b16 %v3438
  %v3618 = vunpack.c.l.b16 %v3439
  %v3619 = vunpack.c.h.b16 %v3439
  %v3620 = vunpack.c.l.b16 %v3440
  %v3621 = vunpack.c.h.b16 %v3440
  %v3622 = vunpack.c.l.b16 %v3441
  %v3623 = vunpack.c.h.b16 %v3441
  %v3624 = vpack.c.b16 %v3576, %v3560
  %v3625 = vpack.c.b16 %v3577, %v3561
  %v3626 = vpack.c.b16 %v3578, %v3562
  %v3627 = vpack.c.b16 %v3579, %v3563
  %v3628 = vpack.c.b16 %v3580, %v3564
  %v3629 = vpack.c.b16 %v3581, %v3565
  %v3630 = vpack.c.b16 %v3582, %v3566
  %v3631 = vpack.c.b16 %v3583, %v3567
  %v3632 = vpack.c.b16 %v3584, %v3568
  %v3633 = vpack.c.b16 %v3585, %v3569
  %v3634 = vpack.c.b16 %v3586, %v3570
  %v3635 = vpack.c.b16 %v3587, %v3571
  %v3636 = vpack.c.b16 %v3588, %v3572
  %v3637 = vpack.c.b16 %v3589, %v3573
  %v3638 = vpack.c.b16 %v3590, %v3574
  %v3639 = vpack.c.b16 %v3591, %v3575
  %v3640 = vpack.c.b16 %v3608, %v3592
  %v3641 = vpack.c.b16 %v3609, %v3593
  %v3642 = vpack.c.b16 %v3610, %v3594
  %v3643 = vpack.c.b16 %v3611, %v3595
  %v3644 = vpack.c.b16 %v3612, %v3596
  %v3645 = vpack.c.b16 %v3613, %v3597
  %v3646 = vpack.c.b16 %v3614, %v3598
  %v3647 = vpack.c.b16 %v3615, %v3599
  %v3648 = vpack.c.b16 %v3616, %v3600
  %v3649 = vpack.c.b16 %v3617, %v3601
  %v3650 = vpack.c.b16 %v3618, %v3602
  %v3651 = vpack.c.b16 %v3619, %v3603
  %v3652 = vpack.c.b16 %v3620, %v3604
  %v3653 = vpack.c.b16 %v3621, %v3605
  %v3654 = vpack.c.b16 %v3622, %v3606
  %v3655 = vpack.c.b16 %v3623, %v3607
  %v3689 = vsel %vm250, %v3405, 0
  %v3692 = vsel %vm250, %v3406, 0
  %v3695 = vsel %vm250, %v3407, 0
  %v3698 = vsel %vm250, %v3408, 0
  %3700 = vmatprep.subr.bf16.mxu0 %v3625
  %3701 = vmatpush1.bf16.msra.mxu0 %v3624
  %3702 = vmatprep.subr.bf16.mxu0 %v3641
  %3703 = vmatpush1.bf16.msra.mxu0 %v3640
  %3704 = vmatprep.subr.bf16.mxu0 0
  %3705 = vmatpush1.bf16.msra.mxu0 0
  %3706 = vmatprep.subr.bf16.mxu0 0
  %3707 = vmatpush1.bf16.msra.mxu0 0
  %3708 = vmatprep.subr.bf16.mxu0 0
  %3709 = vmatpush1.bf16.msra.mxu0 0
  %3710 = vmatprep.subr.bf16.mxu0 0
  %3711 = vmatpush1.bf16.msra.mxu0 0
  %3712 = vmatprep.subr.bf16.mxu0 0
  %3713 = vmatpush1.bf16.msra.mxu0 0
  %3714 = vmatprep.subr.bf16.mxu0 0
  %3715 = vmatpush1.bf16.msra.mxu0 0
  %3716 = vmatprep.subr.bf16.mxu0 0
  %3717 = vmatpush1.bf16.msra.mxu0 0
  %3718 = vmatprep.subr.bf16.mxu0 0
  %3719 = vmatpush1.bf16.msra.mxu0 0
  %3720 = vmatprep.subr.bf16.mxu0 0
  %3721 = vmatpush1.bf16.msra.mxu0 0
  %3722 = vmatprep.subr.bf16.mxu0 0
  %3723 = vmatpush1.bf16.msra.mxu0 0
  %3724 = vmatprep.subr.bf16.mxu0 0
  %3725 = vmatpush1.bf16.msra.mxu0 0
  %3726 = vmatprep.subr.bf16.mxu0 0
  %3727 = vmatpush1.bf16.msra.mxu0 0
  %3728 = vmatprep.subr.bf16.mxu0 0
  %3729 = vmatpush1.bf16.msra.mxu0 0
  %3730 = vmatprep.subr.bf16.mxu0 0
  %3731 = vmatpush1.bf16.msra.mxu0 0
  %3732 = vmatprep.mubr.bf16.mxu0 0
  %3733 = vmatmul.mubr.bf16.gmra.mrb[0].mxu0 %v3689
  %v3734 = vpop.f32.mrb[0].mxu0
  %v3735 = vadd.f32 %v3451, %v3734
  %v3736 = vpop.f32.mrb[0].mxu0
  %v3737 = vadd.f32 %v3455, %v3736
  %v3738 = vpop.f32.mrb[0].mxu0
  %v3739 = vadd.f32 %v3451, %v3738
  %v3740 = vpop.f32.mrb[0].mxu0
  %v3741 = vadd.f32 %v3455, %v3740
  %3742 = vmatprep.mubr.bf16.mxu0 0
  %3743 = vmatmul.mubr.bf16.gmra.mrb[0].mxu0 %v3692
  %v3744 = vpop.f32.mrb[0].mxu0
  %v3745 = vadd.f32 %v3451, %v3744
  %v3746 = vpop.f32.mrb[0].mxu0
  %v3747 = vadd.f32 %v3455, %v3746
  %v3748 = vpop.f32.mrb[0].mxu0
  %v3749 = vadd.f32 %v3451, %v3748
  %v3750 = vpop.f32.mrb[0].mxu0
  %v3751 = vadd.f32 %v3455, %v3750
  %3752 = vmatprep.mubr.bf16.mxu0 0
  %3753 = vmatmul.mubr.bf16.gmra.mrb[0].mxu0 %v3695
  %v3754 = vpop.f32.mrb[0].mxu0
  %v3755 = vadd.f32 %v3451, %v3754
  %v3756 = vpop.f32.mrb[0].mxu0
  %v3757 = vadd.f32 %v3455, %v3756
  %v3758 = vpop.f32.mrb[0].mxu0
  %v3759 = vadd.f32 %v3451, %v3758
  %v3760 = vpop.f32.mrb[0].mxu0
  %v3761 = vadd.f32 %v3455, %v3760
  %3762 = vmatprep.mubr.bf16.mxu0 0
  %3763 = vmatmul.mubr.bf16.gmra.mrb[0].mxu0 %v3698
  %v3764 = vpop.f32.mrb[0].mxu0
  %v3765 = vadd.f32 %v3451, %v3764
  %v3766 = vpop.f32.mrb[0].mxu0
  %v3767 = vadd.f32 %v3455, %v3766
  %v3768 = vpop.f32.mrb[0].mxu0
  %v3769 = vadd.f32 %v3451, %v3768
  %v3770 = vpop.f32.mrb[0].mxu0
  %v3771 = vadd.f32 %v3455, %v3770
  %3772 = vdwg.mxu0
  %3773 = vmatprep.subr.bf16.mxu0 %v3627
  %3774 = vmatpush1.bf16.msra.mxu0 %v3626
  %3775 = vmatprep.subr.bf16.mxu0 %v3643
  %3776 = vmatpush1.bf16.msra.mxu0 %v3642
  %3777 = vmatprep.subr.bf16.mxu0 0
  %3778 = vmatpush1.bf16.msra.mxu0 0
  %3779 = vmatprep.subr.bf16.mxu0 0
  %3780 = vmatpush1.bf16.msra.mxu0 0
  %3781 = vmatprep.subr.bf16.mxu0 0
  %3782 = vmatpush1.bf16.msra.mxu0 0
  %3783 = vmatprep.subr.bf16.mxu0 0
  %3784 = vmatpush1.bf16.msra.mxu0 0
  %3785 = vmatprep.subr.bf16.mxu0 0
  %3786 = vmatpush1.bf16.msra.mxu0 0
  %3787 = vmatprep.subr.bf16.mxu0 0
  %3788 = vmatpush1.bf16.msra.mxu0 0
  %3789 = vmatprep.subr.bf16.mxu0 0
  %3790 = vmatpush1.bf16.msra.mxu0 0
  %3791 = vmatprep.subr.bf16.mxu0 0
  %3792 = vmatpush1.bf16.msra.mxu0 0
  %3793 = vmatprep.subr.bf16.mxu0 0
  %3794 = vmatpush1.bf16.msra.mxu0 0
  %3795 = vmatprep.subr.bf16.mxu0 0
  %3796 = vmatpush1.bf16.msra.mxu0 0
  %3797 = vmatprep.subr.bf16.mxu0 0
  %3798 = vmatpush1.bf16.msra.mxu0 0
  %3799 = vmatprep.subr.bf16.mxu0 0
  %3800 = vmatpush1.bf16.msra.mxu0 0
  %3801 = vmatprep.subr.bf16.mxu0 0
  %3802 = vmatpush1.bf16.msra.mxu0 0
  %3803 = vmatprep.subr.bf16.mxu0 0
  %3804 = vmatpush1.bf16.msra.mxu0 0
  %3805 = vmatprep.mubr.bf16.mxu0 0
  %3806 = vmatmul.mubr.bf16.gmra.mrb[0].mxu0 %v3689
  %v3807 = vpop.f32.mrb[0].mxu0
  %v3808 = vadd.f32 %v3459, %v3807
  %v3809 = vpop.f32.mrb[0].mxu0
  %v3810 = vadd.f32 %v3463, %v3809
  %v3811 = vpop.f32.mrb[0].mxu0
  %v3812 = vadd.f32 %v3459, %v3811
  %v3813 = vpop.f32.mrb[0].mxu0
  %v3814 = vadd.f32 %v3463, %v3813
  %3815 = vmatprep.mubr.bf16.mxu0 0
  %3816 = vmatmul.mubr.bf16.gmra.mrb[0].mxu0 %v3692
  %v3817 = vpop.f32.mrb[0].mxu0
  %v3818 = vadd.f32 %v3459, %v3817
  %v3819 = vpop.f32.mrb[0].mxu0
  %v3820 = vadd.f32 %v3463, %v3819
  %v3821 = vpop.f32.mrb[0].mxu0
  %v3822 = vadd.f32 %v3459, %v3821
  %v3823 = vpop.f32.mrb[0].mxu0
  %v3824 = vadd.f32 %v3463, %v3823
  %3825 = vmatprep.mubr.bf16.mxu0 0
  %3826 = vmatmul.mubr.bf16.gmra.mrb[0].mxu0 %v3695
  %v3827 = vpop.f32.mrb[0].mxu0
  %v3828 = vadd.f32 %v3459, %v3827
  %v3829 = vpop.f32.mrb[0].mxu0
  %v3830 = vadd.f32 %v3463, %v3829
  %v3831 = vpop.f32.mrb[0].mxu0
  %v3832 = vadd.f32 %v3459, %v3831
  %v3833 = vpop.f32.mrb[0].mxu0
  %v3834 = vadd.f32 %v3463, %v3833
  %3835 = vmatprep.mubr.bf16.mxu0 0
  %3836 = vmatmul.mubr.bf16.gmra.mrb[0].mxu0 %v3698
  %v3837 = vpop.f32.mrb[0].mxu0
  %v3838 = vadd.f32 %v3459, %v3837
  %v3839 = vpop.f32.mrb[0].mxu0
  %v3840 = vadd.f32 %v3463, %v3839
  %v3841 = vpop.f32.mrb[0].mxu0
  %v3842 = vadd.f32 %v3459, %v3841
  %v3843 = vpop.f32.mrb[0].mxu0
  %v3844 = vadd.f32 %v3463, %v3843
  %3845 = vdwg.mxu0
  %3846 = vmatprep.subr.bf16.mxu0 %v3629
  %3847 = vmatpush1.bf16.msra.mxu0 %v3628
  %3848 = vmatprep.subr.bf16.mxu0 %v3645
  %3849 = vmatpush1.bf16.msra.mxu0 %v3644
  %3850 = vmatprep.subr.bf16.mxu0 0
  %3851 = vmatpush1.bf16.msra.mxu0 0
  %3852 = vmatprep.subr.bf16.mxu0 0
  %3853 = vmatpush1.bf16.msra.mxu0 0
  %3854 = vmatprep.subr.bf16.mxu0 0
  %3855 = vmatpush1.bf16.msra.mxu0 0
  %3856 = vmatprep.subr.bf16.mxu0 0
  %3857 = vmatpush1.bf16.msra.mxu0 0
  %3858 = vmatprep.subr.bf16.mxu0 0
  %3859 = vmatpush1.bf16.msra.mxu0 0
  %3860 = vmatprep.subr.bf16.mxu0 0
  %3861 = vmatpush1.bf16.msra.mxu0 0
  %3862 = vmatprep.subr.bf16.mxu0 0
  %3863 = vmatpush1.bf16.msra.mxu0 0
  %3864 = vmatprep.subr.bf16.mxu0 0
  %3865 = vmatpush1.bf16.msra.mxu0 0
  %3866 = vmatprep.subr.bf16.mxu0 0
  %3867 = vmatpush1.bf16.msra.mxu0 0
  %3868 = vmatprep.subr.bf16.mxu0 0
  %3869 = vmatpush1.bf16.msra.mxu0 0
  %3870 = vmatprep.subr.bf16.mxu0 0
  %3871 = vmatpush1.bf16.msra.mxu0 0
  %3872 = vmatprep.subr.bf16.mxu0 0
  %3873 = vmatpush1.bf16.msra.mxu0 0
  %3874 = vmatprep.subr.bf16.mxu0 0
  %3875 = vmatpush1.bf16.msra.mxu0 0
  %3876 = vmatprep.subr.bf16.mxu0 0
  %3877 = vmatpush1.bf16.msra.mxu0 0
  %3878 = vmatprep.mubr.bf16.mxu0 0
  %3879 = vmatmul.mubr.bf16.gmra.mrb[0].mxu0 %v3689
  %v3880 = vpop.f32.mrb[0].mxu0
  %v3881 = vadd.f32 %v3467, %v3880
  %v3882 = vpop.f32.mrb[0].mxu0
  %v3883 = vadd.f32 %v3471, %v3882
  %v3884 = vpop.f32.mrb[0].mxu0
  %v3885 = vadd.f32 %v3467, %v3884
  %v3886 = vpop.f32.mrb[0].mxu0
  %v3887 = vadd.f32 %v3471, %v3886
  %3888 = vmatprep.mubr.bf16.mxu0 0
  %3889 = vmatmul.mubr.bf16.gmra.mrb[0].mxu0 %v3692
  %v3890 = vpop.f32.mrb[0].mxu0
  %v3891 = vadd.f32 %v3467, %v3890
  %v3892 = vpop.f32.mrb[0].mxu0
  %v3893 = vadd.f32 %v3471, %v3892
  %v3894 = vpop.f32.mrb[0].mxu0
  %v3895 = vadd.f32 %v3467, %v3894
  %v3896 = vpop.f32.mrb[0].mxu0
  %v3897 = vadd.f32 %v3471, %v3896
  %3898 = vmatprep.mubr.bf16.mxu0 0
  %3899 = vmatmul.mubr.bf16.gmra.mrb[0].mxu0 %v3695
  %v3900 = vpop.f32.mrb[0].mxu0
  %v3901 = vadd.f32 %v3467, %v3900
  %v3902 = vpop.f32.mrb[0].mxu0
  %v3903 = vadd.f32 %v3471, %v3902
  %v3904 = vpop.f32.mrb[0].mxu0
  %v3905 = vadd.f32 %v3467, %v3904
  %v3906 = vpop.f32.mrb[0].mxu0
  %v3907 = vadd.f32 %v3471, %v3906
  %3908 = vmatprep.mubr.bf16.mxu0 0
  %3909 = vmatmul.mubr.bf16.gmra.mrb[0].mxu0 %v3698
  %v3910 = vpop.f32.mrb[0].mxu0
  %v3911 = vadd.f32 %v3467, %v3910
  %v3912 = vpop.f32.mrb[0].mxu0
  %v3913 = vadd.f32 %v3471, %v3912
  %v3914 = vpop.f32.mrb[0].mxu0
  %v3915 = vadd.f32 %v3467, %v3914
  %v3916 = vpop.f32.mrb[0].mxu0
  %v3917 = vadd.f32 %v3471, %v3916
  %3918 = vdwg.mxu0
  %3919 = vmatprep.subr.bf16.mxu0 %v3631
  %3920 = vmatpush1.bf16.msra.mxu0 %v3630
  %3921 = vmatprep.subr.bf16.mxu0 %v3647
  %3922 = vmatpush1.bf16.msra.mxu0 %v3646
  %3923 = vmatprep.subr.bf16.mxu0 0
  %3924 = vmatpush1.bf16.msra.mxu0 0
  %3925 = vmatprep.subr.bf16.mxu0 0
  %3926 = vmatpush1.bf16.msra.mxu0 0
  %3927 = vmatprep.subr.bf16.mxu0 0
  %3928 = vmatpush1.bf16.msra.mxu0 0
  %3929 = vmatprep.subr.bf16.mxu0 0
  %3930 = vmatpush1.bf16.msra.mxu0 0
  %3931 = vmatprep.subr.bf16.mxu0 0
  %3932 = vmatpush1.bf16.msra.mxu0 0
  %3933 = vmatprep.subr.bf16.mxu0 0
  %3934 = vmatpush1.bf16.msra.mxu0 0
  %3935 = vmatprep.subr.bf16.mxu0 0
  %3936 = vmatpush1.bf16.msra.mxu0 0
  %3937 = vmatprep.subr.bf16.mxu0 0
  %3938 = vmatpush1.bf16.msra.mxu0 0
  %3939 = vmatprep.subr.bf16.mxu0 0
  %3940 = vmatpush1.bf16.msra.mxu0 0
  %3941 = vmatprep.subr.bf16.mxu0 0
  %3942 = vmatpush1.bf16.msra.mxu0 0
  %3943 = vmatprep.subr.bf16.mxu0 0
  %3944 = vmatpush1.bf16.msra.mxu0 0
  %3945 = vmatprep.subr.bf16.mxu0 0
  %3946 = vmatpush1.bf16.msra.mxu0 0
  %3947 = vmatprep.subr.bf16.mxu0 0
  %3948 = vmatpush1.bf16.msra.mxu0 0
  %3949 = vmatprep.subr.bf16.mxu0 0
  %3950 = vmatpush1.bf16.msra.mxu0 0
  %3951 = vmatprep.mubr.bf16.mxu0 0
  %3952 = vmatmul.mubr.bf16.gmra.mrb[0].mxu0 %v3689
  %v3953 = vpop.f32.mrb[0].mxu0
  %v3954 = vadd.f32 %v3475, %v3953
  %v3955 = vpop.f32.mrb[0].mxu0
  %v3956 = vadd.f32 %v3479, %v3955
  %v3957 = vpop.f32.mrb[0].mxu0
  %v3958 = vadd.f32 %v3475, %v3957
  %v3959 = vpop.f32.mrb[0].mxu0
  %v3960 = vadd.f32 %v3479, %v3959
  %3961 = vmatprep.mubr.bf16.mxu0 0
  %3962 = vmatmul.mubr.bf16.gmra.mrb[0].mxu0 %v3692
  %v3963 = vpop.f32.mrb[0].mxu0
  %v3964 = vadd.f32 %v3475, %v3963
  %v3965 = vpop.f32.mrb[0].mxu0
  %v3966 = vadd.f32 %v3479, %v3965
  %v3967 = vpop.f32.mrb[0].mxu0
  %v3968 = vadd.f32 %v3475, %v3967
  %v3969 = vpop.f32.mrb[0].mxu0
  %v3970 = vadd.f32 %v3479, %v3969
  %3971 = vmatprep.mubr.bf16.mxu0 0
  %3972 = vmatmul.mubr.bf16.gmra.mrb[0].mxu0 %v3695
  %v3973 = vpop.f32.mrb[0].mxu0
  %v3974 = vadd.f32 %v3475, %v3973
  %v3975 = vpop.f32.mrb[0].mxu0
  %v3976 = vadd.f32 %v3479, %v3975
  %v3977 = vpop.f32.mrb[0].mxu0
  %v3978 = vadd.f32 %v3475, %v3977
  %v3979 = vpop.f32.mrb[0].mxu0
  %v3980 = vadd.f32 %v3479, %v3979
  %3981 = vmatprep.mubr.bf16.mxu0 0
  %3982 = vmatmul.mubr.bf16.gmra.mrb[0].mxu0 %v3698
  %v3983 = vpop.f32.mrb[0].mxu0
  %v3984 = vadd.f32 %v3475, %v3983
  %v3985 = vpop.f32.mrb[0].mxu0
  %v3986 = vadd.f32 %v3479, %v3985
  %v3987 = vpop.f32.mrb[0].mxu0
  %v3988 = vadd.f32 %v3475, %v3987
  %v3989 = vpop.f32.mrb[0].mxu0
  %v3990 = vadd.f32 %v3479, %v3989
  %3991 = vdwg.mxu0
  %3992 = vmatprep.subr.bf16.mxu0 %v3633
  %3993 = vmatpush1.bf16.msra.mxu0 %v3632
  %3994 = vmatprep.subr.bf16.mxu0 %v3649
  %3995 = vmatpush1.bf16.msra.mxu0 %v3648
  %3996 = vmatprep.subr.bf16.mxu0 0
  %3997 = vmatpush1.bf16.msra.mxu0 0
  %3998 = vmatprep.subr.bf16.mxu0 0
  %3999 = vmatpush1.bf16.msra.mxu0 0
  %4000 = vmatprep.subr.bf16.mxu0 0
  %4001 = vmatpush1.bf16.msra.mxu0 0
  %4002 = vmatprep.subr.bf16.mxu0 0
  %4003 = vmatpush1.bf16.msra.mxu0 0
  %4004 = vmatprep.subr.bf16.mxu0 0
  %4005 = vmatpush1.bf16.msra.mxu0 0
  %4006 = vmatprep.subr.bf16.mxu0 0
  %4007 = vmatpush1.bf16.msra.mxu0 0
  %4008 = vmatprep.subr.bf16.mxu0 0
  %4009 = vmatpush1.bf16.msra.mxu0 0
  %4010 = vmatprep.subr.bf16.mxu0 0
  %4011 = vmatpush1.bf16.msra.mxu0 0
  %4012 = vmatprep.subr.bf16.mxu0 0
  %4013 = vmatpush1.bf16.msra.mxu0 0
  %4014 = vmatprep.subr.bf16.mxu0 0
  %4015 = vmatpush1.bf16.msra.mxu0 0
  %4016 = vmatprep.subr.bf16.mxu0 0
  %4017 = vmatpush1.bf16.msra.mxu0 0
  %4018 = vmatprep.subr.bf16.mxu0 0
  %4019 = vmatpush1.bf16.msra.mxu0 0
  %4020 = vmatprep.subr.bf16.mxu0 0
  %4021 = vmatpush1.bf16.msra.mxu0 0
  %4022 = vmatprep.subr.bf16.mxu0 0
  %4023 = vmatpush1.bf16.msra.mxu0 0
  %4024 = vmatprep.mubr.bf16.mxu0 0
  %4025 = vmatmul.mubr.bf16.gmra.mrb[0].mxu0 %v3689
  %v4026 = vpop.f32.mrb[0].mxu0
  %v4027 = vadd.f32 %v3483, %v4026
  %v4028 = vpop.f32.mrb[0].mxu0
  %v4029 = vadd.f32 %v3487, %v4028
  %v4030 = vpop.f32.mrb[0].mxu0
  %v4031 = vadd.f32 %v3483, %v4030
  %v4032 = vpop.f32.mrb[0].mxu0
  %v4033 = vadd.f32 %v3487, %v4032
  %4034 = vmatprep.mubr.bf16.mxu0 0
  %4035 = vmatmul.mubr.bf16.gmra.mrb[0].mxu0 %v3692
  %v4036 = vpop.f32.mrb[0].mxu0
  %v4037 = vadd.f32 %v3483, %v4036
  %v4038 = vpop.f32.mrb[0].mxu0
  %v4039 = vadd.f32 %v3487, %v4038
  %v4040 = vpop.f32.mrb[0].mxu0
  %v4041 = vadd.f32 %v3483, %v4040
  %v4042 = vpop.f32.mrb[0].mxu0
  %v4043 = vadd.f32 %v3487, %v4042
  %4044 = vmatprep.mubr.bf16.mxu0 0
  %4045 = vmatmul.mubr.bf16.gmra.mrb[0].mxu0 %v3695
  %v4046 = vpop.f32.mrb[0].mxu0
  %v4047 = vadd.f32 %v3483, %v4046
  %v4048 = vpop.f32.mrb[0].mxu0
  %v4049 = vadd.f32 %v3487, %v4048
  %v4050 = vpop.f32.mrb[0].mxu0
  %v4051 = vadd.f32 %v3483, %v4050
  %v4052 = vpop.f32.mrb[0].mxu0
  %v4053 = vadd.f32 %v3487, %v4052
  %4054 = vmatprep.mubr.bf16.mxu0 0
  %4055 = vmatmul.mubr.bf16.gmra.mrb[0].mxu0 %v3698
  %v4056 = vpop.f32.mrb[0].mxu0
  %v4057 = vadd.f32 %v3483, %v4056
  %v4058 = vpop.f32.mrb[0].mxu0
  %v4059 = vadd.f32 %v3487, %v4058
  %v4060 = vpop.f32.mrb[0].mxu0
  %v4061 = vadd.f32 %v3483, %v4060
  %v4062 = vpop.f32.mrb[0].mxu0
  %v4063 = vadd.f32 %v3487, %v4062
  %4064 = vdwg.mxu0
  %4065 = vmatprep.subr.bf16.mxu0 %v3635
  %4066 = vmatpush1.bf16.msra.mxu0 %v3634
  %4067 = vmatprep.subr.bf16.mxu0 %v3651
  %4068 = vmatpush1.bf16.msra.mxu0 %v3650
  %4069 = vmatprep.subr.bf16.mxu0 0
  %4070 = vmatpush1.bf16.msra.mxu0 0
  %4071 = vmatprep.subr.bf16.mxu0 0
  %4072 = vmatpush1.bf16.msra.mxu0 0
  %4073 = vmatprep.subr.bf16.mxu0 0
  %4074 = vmatpush1.bf16.msra.mxu0 0
  %4075 = vmatprep.subr.bf16.mxu0 0
  %4076 = vmatpush1.bf16.msra.mxu0 0
  %4077 = vmatprep.subr.bf16.mxu0 0
  %4078 = vmatpush1.bf16.msra.mxu0 0
  %4079 = vmatprep.subr.bf16.mxu0 0
  %4080 = vmatpush1.bf16.msra.mxu0 0
  %4081 = vmatprep.subr.bf16.mxu0 0
  %4082 = vmatpush1.bf16.msra.mxu0 0
  %4083 = vmatprep.subr.bf16.mxu0 0
  %4084 = vmatpush1.bf16.msra.mxu0 0
  %4085 = vmatprep.subr.bf16.mxu0 0
  %4086 = vmatpush1.bf16.msra.mxu0 0
  %4087 = vmatprep.subr.bf16.mxu0 0
  %4088 = vmatpush1.bf16.msra.mxu0 0
  %4089 = vmatprep.subr.bf16.mxu0 0
  %4090 = vmatpush1.bf16.msra.mxu0 0
  %4091 = vmatprep.subr.bf16.mxu0 0
  %4092 = vmatpush1.bf16.msra.mxu0 0
  %4093 = vmatprep.subr.bf16.mxu0 0
  %4094 = vmatpush1.bf16.msra.mxu0 0
  %4095 = vmatprep.subr.bf16.mxu0 0
  %4096 = vmatpush1.bf16.msra.mxu0 0
  %4097 = vmatprep.mubr.bf16.mxu0 0
  %4098 = vmatmul.mubr.bf16.gmra.mrb[0].mxu0 %v3689
  %v4099 = vpop.f32.mrb[0].mxu0
  %v4100 = vadd.f32 %v3491, %v4099
  %v4101 = vpop.f32.mrb[0].mxu0
  %v4102 = vadd.f32 %v3495, %v4101
  %v4103 = vpop.f32.mrb[0].mxu0
  %v4104 = vadd.f32 %v3491, %v4103
  %v4105 = vpop.f32.mrb[0].mxu0
  %v4106 = vadd.f32 %v3495, %v4105
  %4107 = vmatprep.mubr.bf16.mxu0 0
  %4108 = vmatmul.mubr.bf16.gmra.mrb[0].mxu0 %v3692
  %v4109 = vpop.f32.mrb[0].mxu0
  %v4110 = vadd.f32 %v3491, %v4109
  %v4111 = vpop.f32.mrb[0].mxu0
  %v4112 = vadd.f32 %v3495, %v4111
  %v4113 = vpop.f32.mrb[0].mxu0
  %v4114 = vadd.f32 %v3491, %v4113
  %v4115 = vpop.f32.mrb[0].mxu0
  %v4116 = vadd.f32 %v3495, %v4115
  %4117 = vmatprep.mubr.bf16.mxu0 0
  %4118 = vmatmul.mubr.bf16.gmra.mrb[0].mxu0 %v3695
  %v4119 = vpop.f32.mrb[0].mxu0
  %v4120 = vadd.f32 %v3491, %v4119
  %v4121 = vpop.f32.mrb[0].mxu0
  %v4122 = vadd.f32 %v3495, %v4121
  %v4123 = vpop.f32.mrb[0].mxu0
  %v4124 = vadd.f32 %v3491, %v4123
  %v4125 = vpop.f32.mrb[0].mxu0
  %v4126 = vadd.f32 %v3495, %v4125
  %4127 = vmatprep.mubr.bf16.mxu0 0
  %4128 = vmatmul.mubr.bf16.gmra.mrb[0].mxu0 %v3698
  %v4129 = vpop.f32.mrb[0].mxu0
  %v4130 = vadd.f32 %v3491, %v4129
  %v4131 = vpop.f32.mrb[0].mxu0
  %v4132 = vadd.f32 %v3495, %v4131
  %v4133 = vpop.f32.mrb[0].mxu0
  %v4134 = vadd.f32 %v3491, %v4133
  %v4135 = vpop.f32.mrb[0].mxu0
  %v4136 = vadd.f32 %v3495, %v4135
  %4137 = vdwg.mxu0
  %4138 = vmatprep.subr.bf16.mxu0 %v3637
  %4139 = vmatpush1.bf16.msra.mxu0 %v3636
  %4140 = vmatprep.subr.bf16.mxu0 %v3653
  %4141 = vmatpush1.bf16.msra.mxu0 %v3652
  %4142 = vmatprep.subr.bf16.mxu0 0
  %4143 = vmatpush1.bf16.msra.mxu0 0
  %4144 = vmatprep.subr.bf16.mxu0 0
  %4145 = vmatpush1.bf16.msra.mxu0 0
  %4146 = vmatprep.subr.bf16.mxu0 0
  %4147 = vmatpush1.bf16.msra.mxu0 0
  %4148 = vmatprep.subr.bf16.mxu0 0
  %4149 = vmatpush1.bf16.msra.mxu0 0
  %4150 = vmatprep.subr.bf16.mxu0 0
  %4151 = vmatpush1.bf16.msra.mxu0 0
  %4152 = vmatprep.subr.bf16.mxu0 0
  %4153 = vmatpush1.bf16.msra.mxu0 0
  %4154 = vmatprep.subr.bf16.mxu0 0
  %4155 = vmatpush1.bf16.msra.mxu0 0
  %4156 = vmatprep.subr.bf16.mxu0 0
  %4157 = vmatpush1.bf16.msra.mxu0 0
  %4158 = vmatprep.subr.bf16.mxu0 0
  %4159 = vmatpush1.bf16.msra.mxu0 0
  %4160 = vmatprep.subr.bf16.mxu0 0
  %4161 = vmatpush1.bf16.msra.mxu0 0
  %4162 = vmatprep.subr.bf16.mxu0 0
  %4163 = vmatpush1.bf16.msra.mxu0 0
  %4164 = vmatprep.subr.bf16.mxu0 0
  %4165 = vmatpush1.bf16.msra.mxu0 0
  %4166 = vmatprep.subr.bf16.mxu0 0
  %4167 = vmatpush1.bf16.msra.mxu0 0
  %4168 = vmatprep.subr.bf16.mxu0 0
  %4169 = vmatpush1.bf16.msra.mxu0 0
  %4170 = vmatprep.mubr.bf16.mxu0 0
  %4171 = vmatmul.mubr.bf16.gmra.mrb[0].mxu0 %v3689
  %v4172 = vpop.f32.mrb[0].mxu0
  %v4173 = vadd.f32 %v3499, %v4172
  %v4174 = vpop.f32.mrb[0].mxu0
  %v4175 = vadd.f32 %v3503, %v4174
  %v4176 = vpop.f32.mrb[0].mxu0
  %v4177 = vadd.f32 %v3499, %v4176
  %v4178 = vpop.f32.mrb[0].mxu0
  %v4179 = vadd.f32 %v3503, %v4178
  %4180 = vmatprep.mubr.bf16.mxu0 0
  %4181 = vmatmul.mubr.bf16.gmra.mrb[0].mxu0 %v3692
  %v4182 = vpop.f32.mrb[0].mxu0
  %v4183 = vadd.f32 %v3499, %v4182
  %v4184 = vpop.f32.mrb[0].mxu0
  %v4185 = vadd.f32 %v3503, %v4184
  %v4186 = vpop.f32.mrb[0].mxu0
  %v4187 = vadd.f32 %v3499, %v4186
  %v4188 = vpop.f32.mrb[0].mxu0
  %v4189 = vadd.f32 %v3503, %v4188
  %4190 = vmatprep.mubr.bf16.mxu0 0
  %4191 = vmatmul.mubr.bf16.gmra.mrb[0].mxu0 %v3695
  %v4192 = vpop.f32.mrb[0].mxu0
  %v4193 = vadd.f32 %v3499, %v4192
  %v4194 = vpop.f32.mrb[0].mxu0
  %v4195 = vadd.f32 %v3503, %v4194
  %v4196 = vpop.f32.mrb[0].mxu0
  %v4197 = vadd.f32 %v3499, %v4196
  %v4198 = vpop.f32.mrb[0].mxu0
  %v4199 = vadd.f32 %v3503, %v4198
  %4200 = vmatprep.mubr.bf16.mxu0 0
  %4201 = vmatmul.mubr.bf16.gmra.mrb[0].mxu0 %v3698
  %v4202 = vpop.f32.mrb[0].mxu0
  %v4203 = vadd.f32 %v3499, %v4202
  %v4204 = vpop.f32.mrb[0].mxu0
  %v4205 = vadd.f32 %v3503, %v4204
  %v4206 = vpop.f32.mrb[0].mxu0
  %v4207 = vadd.f32 %v3499, %v4206
  %v4208 = vpop.f32.mrb[0].mxu0
  %v4209 = vadd.f32 %v3503, %v4208
  %4210 = vdwg.mxu0
  %4211 = vmatprep.subr.bf16.mxu0 %v3639
  %4212 = vmatpush1.bf16.msra.mxu0 %v3638
  %4213 = vmatprep.subr.bf16.mxu0 %v3655
  %4214 = vmatpush1.bf16.msra.mxu0 %v3654
  %4215 = vmatprep.subr.bf16.mxu0 0
  %4216 = vmatpush1.bf16.msra.mxu0 0
  %4217 = vmatprep.subr.bf16.mxu0 0
  %4218 = vmatpush1.bf16.msra.mxu0 0
  %4219 = vmatprep.subr.bf16.mxu0 0
  %4220 = vmatpush1.bf16.msra.mxu0 0
  %4221 = vmatprep.subr.bf16.mxu0 0
  %4222 = vmatpush1.bf16.msra.mxu0 0
  %4223 = vmatprep.subr.bf16.mxu0 0
  %4224 = vmatpush1.bf16.msra.mxu0 0
  %4225 = vmatprep.subr.bf16.mxu0 0
  %4226 = vmatpush1.bf16.msra.mxu0 0
  %4227 = vmatprep.subr.bf16.mxu0 0
  %4228 = vmatpush1.bf16.msra.mxu0 0
  %4229 = vmatprep.subr.bf16.mxu0 0
  %4230 = vmatpush1.bf16.msra.mxu0 0
  %4231 = vmatprep.subr.bf16.mxu0 0
  %4232 = vmatpush1.bf16.msra.mxu0 0
  %4233 = vmatprep.subr.bf16.mxu0 0
  %4234 = vmatpush1.bf16.msra.mxu0 0
  %4235 = vmatprep.subr.bf16.mxu0 0
  %4236 = vmatpush1.bf16.msra.mxu0 0
  %4237 = vmatprep.subr.bf16.mxu0 0
  %4238 = vmatpush1.bf16.msra.mxu0 0
  %4239 = vmatprep.subr.bf16.mxu0 0
  %4240 = vmatpush1.bf16.msra.mxu0 0
  %4241 = vmatprep.subr.bf16.mxu0 0
  %4242 = vmatpush1.bf16.msra.mxu0 0
  %4243 = vmatprep.mubr.bf16.mxu0 0
  %4244 = vmatmul.mubr.bf16.gmra.mrb[0].mxu0 %v3689
  %v4245 = vpop.f32.mrb[0].mxu0
  %v4246 = vadd.f32 %v3507, %v4245
  %v4247 = vpop.f32.mrb[0].mxu0
  %v4248 = vadd.f32 %v3511, %v4247
  %v4249 = vpop.f32.mrb[0].mxu0
  %v4250 = vadd.f32 %v3507, %v4249
  %v4251 = vpop.f32.mrb[0].mxu0
  %v4252 = vadd.f32 %v3511, %v4251
  %4253 = vmatprep.mubr.bf16.mxu0 0
  %4254 = vmatmul.mubr.bf16.gmra.mrb[0].mxu0 %v3692
  %v4255 = vpop.f32.mrb[0].mxu0
  %v4256 = vadd.f32 %v3507, %v4255
  %v4257 = vpop.f32.mrb[0].mxu0
  %v4258 = vadd.f32 %v3511, %v4257
  %v4259 = vpop.f32.mrb[0].mxu0
  %v4260 = vadd.f32 %v3507, %v4259
  %v4261 = vpop.f32.mrb[0].mxu0
  %v4262 = vadd.f32 %v3511, %v4261
  %4263 = vmatprep.mubr.bf16.mxu0 0
  %4264 = vmatmul.mubr.bf16.gmra.mrb[0].mxu0 %v3695
  %v4265 = vpop.f32.mrb[0].mxu0
  %v4266 = vadd.f32 %v3507, %v4265
  %v4267 = vpop.f32.mrb[0].mxu0
  %v4268 = vadd.f32 %v3511, %v4267
  %v4269 = vpop.f32.mrb[0].mxu0
  %v4270 = vadd.f32 %v3507, %v4269
  %v4271 = vpop.f32.mrb[0].mxu0
  %v4272 = vadd.f32 %v3511, %v4271
  %4273 = vmatprep.mubr.bf16.mxu0 0
  %4274 = vmatmul.mubr.bf16.gmra.mrb[0].mxu0 %v3698
  %v4275 = vpop.f32.mrb[0].mxu0
  %v4276 = vadd.f32 %v3507, %v4275
  %v4277 = vpop.f32.mrb[0].mxu0
  %v4278 = vadd.f32 %v3511, %v4277
  %v4279 = vpop.f32.mrb[0].mxu0
  %v4280 = vadd.f32 %v3507, %v4279
  %v4281 = vpop.f32.mrb[0].mxu0
  %v4282 = vadd.f32 %v3511, %v4281
  %4283 = vdwg.mxu0
  %v4284 = vmax.f32 %v3735, 0.0
  %v4285 = vmax.f32 %v3737, 0.0
  %v4286 = vmax.f32 %v3808, 0.0
  %v4287 = vmax.f32 %v3810, 0.0
  %v4288 = vmax.f32 %v3881, 0.0
  %v4289 = vmax.f32 %v3883, 0.0
  %v4290 = vmax.f32 %v3954, 0.0
  %v4291 = vmax.f32 %v3956, 0.0
  %v4292 = vmax.f32 %v4027, 0.0
  %v4293 = vmax.f32 %v4029, 0.0
  %v4294 = vmax.f32 %v4100, 0.0
  %v4295 = vmax.f32 %v4102, 0.0
  %v4296 = vmax.f32 %v4173, 0.0
  %v4297 = vmax.f32 %v4175, 0.0
  %v4298 = vmax.f32 %v4246, 0.0
  %v4299 = vmax.f32 %v4248, 0.0
  %v4300 = vmax.f32 %v3739, 0.0
  %v4301 = vmax.f32 %v3741, 0.0
  %v4302 = vmax.f32 %v3812, 0.0
  %v4303 = vmax.f32 %v3814, 0.0
  %v4304 = vmax.f32 %v3885, 0.0
  %v4305 = vmax.f32 %v3887, 0.0
  %v4306 = vmax.f32 %v3958, 0.0
  %v4307 = vmax.f32 %v3960, 0.0
  %v4308 = vmax.f32 %v4031, 0.0
  %v4309 = vmax.f32 %v4033, 0.0
  %v4310 = vmax.f32 %v4104, 0.0
  %v4311 = vmax.f32 %v4106, 0.0
  %v4312 = vmax.f32 %v4177, 0.0
  %v4313 = vmax.f32 %v4179, 0.0
  %v4314 = vmax.f32 %v4250, 0.0
  %v4315 = vmax.f32 %v4252, 0.0
  %v4316 = vmax.f32 %v3745, 0.0
  %v4317 = vmax.f32 %v3747, 0.0
  %v4318 = vmax.f32 %v3818, 0.0
  %v4319 = vmax.f32 %v3820, 0.0
  %v4320 = vmax.f32 %v3891, 0.0
  %v4321 = vmax.f32 %v3893, 0.0
  %v4322 = vmax.f32 %v3964, 0.0
  %v4323 = vmax.f32 %v3966, 0.0
  %v4324 = vmax.f32 %v4037, 0.0
  %v4325 = vmax.f32 %v4039, 0.0
  %v4326 = vmax.f32 %v4110, 0.0
  %v4327 = vmax.f32 %v4112, 0.0
  %v4328 = vmax.f32 %v4183, 0.0
  %v4329 = vmax.f32 %v4185, 0.0
  %v4330 = vmax.f32 %v4256, 0.0
  %v4331 = vmax.f32 %v4258, 0.0
  %v4332 = vmax.f32 %v3749, 0.0
  %v4333 = vmax.f32 %v3751, 0.0
  %v4334 = vmax.f32 %v3822, 0.0
  %v4335 = vmax.f32 %v3824, 0.0
  %v4336 = vmax.f32 %v3895, 0.0
  %v4337 = vmax.f32 %v3897, 0.0
  %v4338 = vmax.f32 %v3968, 0.0
  %v4339 = vmax.f32 %v3970, 0.0
  %v4340 = vmax.f32 %v4041, 0.0
  %v4341 = vmax.f32 %v4043, 0.0
  %v4342 = vmax.f32 %v4114, 0.0
  %v4343 = vmax.f32 %v4116, 0.0
  %v4344 = vmax.f32 %v4187, 0.0
  %v4345 = vmax.f32 %v4189, 0.0
  %v4346 = vmax.f32 %v4260, 0.0
  %v4347 = vmax.f32 %v4262, 0.0
  %v4348 = vmax.f32 %v3755, 0.0
  %v4349 = vmax.f32 %v3757, 0.0
  %v4350 = vmax.f32 %v3828, 0.0
  %v4351 = vmax.f32 %v3830, 0.0
  %v4352 = vmax.f32 %v3901, 0.0
  %v4353 = vmax.f32 %v3903, 0.0
  %v4354 = vmax.f32 %v3974, 0.0
  %v4355 = vmax.f32 %v3976, 0.0
  %v4356 = vmax.f32 %v4047, 0.0
  %v4357 = vmax.f32 %v4049, 0.0
  %v4358 = vmax.f32 %v4120, 0.0
  %v4359 = vmax.f32 %v4122, 0.0
  %v4360 = vmax.f32 %v4193, 0.0
  %v4361 = vmax.f32 %v4195, 0.0
  %v4362 = vmax.f32 %v4266, 0.0
  %v4363 = vmax.f32 %v4268, 0.0
  %v4364 = vmax.f32 %v3759, 0.0
  %v4365 = vmax.f32 %v3761, 0.0
  %v4366 = vmax.f32 %v3832, 0.0
  %v4367 = vmax.f32 %v3834, 0.0
  %v4368 = vmax.f32 %v3905, 0.0
  %v4369 = vmax.f32 %v3907, 0.0
  %v4370 = vmax.f32 %v3978, 0.0
  %v4371 = vmax.f32 %v3980, 0.0
  %v4372 = vmax.f32 %v4051, 0.0
  %v4373 = vmax.f32 %v4053, 0.0
  %v4374 = vmax.f32 %v4124, 0.0
  %v4375 = vmax.f32 %v4126, 0.0
  %v4376 = vmax.f32 %v4197, 0.0
  %v4377 = vmax.f32 %v4199, 0.0
  %v4378 = vmax.f32 %v4270, 0.0
  %v4379 = vmax.f32 %v4272, 0.0
  %v4380 = vmax.f32 %v3765, 0.0
  %v4381 = vmax.f32 %v3767, 0.0
  %v4382 = vmax.f32 %v3838, 0.0
  %v4383 = vmax.f32 %v3840, 0.0
  %v4384 = vmax.f32 %v3911, 0.0
  %v4385 = vmax.f32 %v3913, 0.0
  %v4386 = vmax.f32 %v3984, 0.0
  %v4387 = vmax.f32 %v3986, 0.0
  %v4388 = vmax.f32 %v4057, 0.0
  %v4389 = vmax.f32 %v4059, 0.0
  %v4390 = vmax.f32 %v4130, 0.0
  %v4391 = vmax.f32 %v4132, 0.0
  %v4392 = vmax.f32 %v4203, 0.0
  %v4393 = vmax.f32 %v4205, 0.0
  %v4394 = vmax.f32 %v4276, 0.0
  %v4395 = vmax.f32 %v4278, 0.0
  %v4396 = vmax.f32 %v3769, 0.0
  %v4397 = vmax.f32 %v3771, 0.0
  %v4398 = vmax.f32 %v3842, 0.0
  %v4399 = vmax.f32 %v3844, 0.0
  %v4400 = vmax.f32 %v3915, 0.0
  %v4401 = vmax.f32 %v3917, 0.0
  %v4402 = vmax.f32 %v3988, 0.0
  %v4403 = vmax.f32 %v3990, 0.0
  %v4404 = vmax.f32 %v4061, 0.0
  %v4405 = vmax.f32 %v4063, 0.0
  %v4406 = vmax.f32 %v4134, 0.0
  %v4407 = vmax.f32 %v4136, 0.0
  %v4408 = vmax.f32 %v4207, 0.0
  %v4409 = vmax.f32 %v4209, 0.0
  %v4410 = vmax.f32 %v4280, 0.0
  %v4411 = vmax.f32 %v4282, 0.0
  %v4412 = vpack.c.bf16 %v4300, %v4284
  %v4413 = vpack.c.bf16 %v4301, %v4285
  %v4414 = vpack.c.bf16 %v4302, %v4286
  %v4415 = vpack.c.bf16 %v4303, %v4287
  %v4416 = vpack.c.bf16 %v4304, %v4288
  %v4417 = vpack.c.bf16 %v4305, %v4289
  %v4418 = vpack.c.bf16 %v4306, %v4290
  %v4419 = vpack.c.bf16 %v4307, %v4291
  %v4420 = vpack.c.bf16 %v4308, %v4292
  %v4421 = vpack.c.bf16 %v4309, %v4293
  %v4422 = vpack.c.bf16 %v4310, %v4294
  %v4423 = vpack.c.bf16 %v4311, %v4295
  %v4424 = vpack.c.bf16 %v4312, %v4296
  %v4425 = vpack.c.bf16 %v4313, %v4297
  %v4426 = vpack.c.bf16 %v4314, %v4298
  %v4427 = vpack.c.bf16 %v4315, %v4299
  %v4428 = vpack.c.bf16 %v4332, %v4316
  %v4429 = vpack.c.bf16 %v4333, %v4317
  %v4430 = vpack.c.bf16 %v4334, %v4318
  %v4431 = vpack.c.bf16 %v4335, %v4319
  %v4432 = vpack.c.bf16 %v4336, %v4320
  %v4433 = vpack.c.bf16 %v4337, %v4321
  %v4434 = vpack.c.bf16 %v4338, %v4322
  %v4435 = vpack.c.bf16 %v4339, %v4323
  %v4436 = vpack.c.bf16 %v4340, %v4324
  %v4437 = vpack.c.bf16 %v4341, %v4325
  %v4438 = vpack.c.bf16 %v4342, %v4326
  %v4439 = vpack.c.bf16 %v4343, %v4327
  %v4440 = vpack.c.bf16 %v4344, %v4328
  %v4441 = vpack.c.bf16 %v4345, %v4329
  %v4442 = vpack.c.bf16 %v4346, %v4330
  %v4443 = vpack.c.bf16 %v4347, %v4331
  %v4444 = vpack.c.bf16 %v4364, %v4348
  %v4445 = vpack.c.bf16 %v4365, %v4349
  %v4446 = vpack.c.bf16 %v4366, %v4350
  %v4447 = vpack.c.bf16 %v4367, %v4351
  %v4448 = vpack.c.bf16 %v4368, %v4352
  %v4449 = vpack.c.bf16 %v4369, %v4353
  %v4450 = vpack.c.bf16 %v4370, %v4354
  %v4451 = vpack.c.bf16 %v4371, %v4355
  %v4452 = vpack.c.bf16 %v4372, %v4356
  %v4453 = vpack.c.bf16 %v4373, %v4357
  %v4454 = vpack.c.bf16 %v4374, %v4358
  %v4455 = vpack.c.bf16 %v4375, %v4359
  %v4456 = vpack.c.bf16 %v4376, %v4360
  %v4457 = vpack.c.bf16 %v4377, %v4361
  %v4458 = vpack.c.bf16 %v4378, %v4362
  %v4459 = vpack.c.bf16 %v4379, %v4363
  %v4460 = vpack.c.bf16 %v4396, %v4380
  %v4461 = vpack.c.bf16 %v4397, %v4381
  %v4462 = vpack.c.bf16 %v4398, %v4382
  %v4463 = vpack.c.bf16 %v4399, %v4383
  %v4464 = vpack.c.bf16 %v4400, %v4384
  %v4465 = vpack.c.bf16 %v4401, %v4385
  %v4466 = vpack.c.bf16 %v4402, %v4386
  %v4467 = vpack.c.bf16 %v4403, %v4387
  %v4468 = vpack.c.bf16 %v4404, %v4388
  %v4469 = vpack.c.bf16 %v4405, %v4389
  %v4470 = vpack.c.bf16 %v4406, %v4390
  %v4471 = vpack.c.bf16 %v4407, %v4391
  %v4472 = vpack.c.bf16 %v4408, %v4392
  %v4473 = vpack.c.bf16 %v4409, %v4393
  %v4474 = vpack.c.bf16 %v4410, %v4394
  %v4475 = vpack.c.bf16 %v4411, %v4395
  %s4476 = scalar_lea.vmem %s3, 1024
  %v4477 = vld [vmem:[%s4476] sm:$0xf]
  %v4478 = vld [vmem:[%s4476 + $0x4] sm:$0xf]
  %v4479 = vld [vmem:[%s4476 + $0x8] sm:$0xf]
  %v4480 = vld [vmem:[%s4476 + $0xc] sm:$0xf]
  %v4481 = vld [vmem:[%s4476 + $0x10] sm:$0xf]
  %v4482 = vld [vmem:[%s4476 + $0x14] sm:$0xf]
  %v4483 = vld [vmem:[%s4476 + $0x18] sm:$0xf]
  %v4484 = vld [vmem:[%s4476 + $0x1c] sm:$0xf]
  %v4485 = vld [vmem:[%s4476 + $0x20] sm:$0xf]
  %v4486 = vld [vmem:[%s4476 + $0x24] sm:$0xf]
  %v4487 = vld [vmem:[%s4476 + $0x28] sm:$0xf]
  %v4488 = vld [vmem:[%s4476 + $0x2c] sm:$0xf]
  %v4489 = vld [vmem:[%s4476 + $0x30] sm:$0xf]
  %v4490 = vld [vmem:[%s4476 + $0x34] sm:$0xf]
  %v4491 = vld [vmem:[%s4476 + $0x38] sm:$0xf]
  %v4492 = vld [vmem:[%s4476 + $0x3c] sm:$0xf]
  %v4493 = vld [vmem:[%s4476 + $0x40] sm:$0xf]
  %v4494 = vld [vmem:[%s4476 + $0x44] sm:$0xf]
  %v4495 = vld [vmem:[%s4476 + $0x48] sm:$0xf]
  %v4496 = vld [vmem:[%s4476 + $0x4c] sm:$0xf]
  %v4497 = vld [vmem:[%s4476 + $0x50] sm:$0xf]
  %v4498 = vld [vmem:[%s4476 + $0x54] sm:$0xf]
  %v4499 = vld [vmem:[%s4476 + $0x58] sm:$0xf]
  %v4500 = vld [vmem:[%s4476 + $0x5c] sm:$0xf]
  %v4501 = vld [vmem:[%s4476 + $0x60] sm:$0xf]
  %v4502 = vld [vmem:[%s4476 + $0x64] sm:$0xf]
  %v4503 = vld [vmem:[%s4476 + $0x68] sm:$0xf]
  %v4504 = vld [vmem:[%s4476 + $0x6c] sm:$0xf]
  %v4505 = vld [vmem:[%s4476 + $0x70] sm:$0xf]
  %v4506 = vld [vmem:[%s4476 + $0x74] sm:$0xf]
  %v4507 = vld [vmem:[%s4476 + $0x78] sm:$0xf]
  %v4508 = vld [vmem:[%s4476 + $0x7c] sm:$0xf]
  %v4509 = vld [vmem:[%s4476 + $0x80] sm:$0xf]
  %v4510 = vld [vmem:[%s4476 + $0x84] sm:$0xf]
  %v4511 = vld [vmem:[%s4476 + $0x88] sm:$0xf]
  %v4512 = vld [vmem:[%s4476 + $0x8c] sm:$0xf]
  %v4513 = vld [vmem:[%s4476 + $0x90] sm:$0xf]
  %v4514 = vld [vmem:[%s4476 + $0x94] sm:$0xf]
  %v4515 = vld [vmem:[%s4476 + $0x98] sm:$0xf]
  %v4516 = vld [vmem:[%s4476 + $0x9c] sm:$0xf]
  %v4517 = vld [vmem:[%s4476 + $0xa0] sm:$0xf]
  %v4518 = vld [vmem:[%s4476 + $0xa4] sm:$0xf]
  %v4519 = vld [vmem:[%s4476 + $0xa8] sm:$0xf]
  %v4520 = vld [vmem:[%s4476 + $0xac] sm:$0xf]
  %v4521 = vld [vmem:[%s4476 + $0xb0] sm:$0xf]
  %v4522 = vld [vmem:[%s4476 + $0xb4] sm:$0xf]
  %v4523 = vld [vmem:[%s4476 + $0xb8] sm:$0xf]
  %v4524 = vld [vmem:[%s4476 + $0xbc] sm:$0xf]
  %v4525 = vld [vmem:[%s4476 + $0xc0] sm:$0xf]
  %v4526 = vld [vmem:[%s4476 + $0xc4] sm:$0xf]
  %v4527 = vld [vmem:[%s4476 + $0xc8] sm:$0xf]
  %v4528 = vld [vmem:[%s4476 + $0xcc] sm:$0xf]
  %v4529 = vld [vmem:[%s4476 + $0xd0] sm:$0xf]
  %v4530 = vld [vmem:[%s4476 + $0xd4] sm:$0xf]
  %v4531 = vld [vmem:[%s4476 + $0xd8] sm:$0xf]
  %v4532 = vld [vmem:[%s4476 + $0xdc] sm:$0xf]
  %v4533 = vld [vmem:[%s4476 + $0xe0] sm:$0xf]
  %v4534 = vld [vmem:[%s4476 + $0xe4] sm:$0xf]
  %v4535 = vld [vmem:[%s4476 + $0xe8] sm:$0xf]
  %v4536 = vld [vmem:[%s4476 + $0xec] sm:$0xf]
  %v4537 = vld [vmem:[%s4476 + $0xf0] sm:$0xf]
  %v4538 = vld [vmem:[%s4476 + $0xf4] sm:$0xf]
  %v4539 = vld [vmem:[%s4476 + $0xf8] sm:$0xf]
  %v4540 = vld [vmem:[%s4476 + $0xfc] sm:$0xf]
  %v4541 = vld [vmem:[%s4476 + $0x100] sm:$0xf]
  %v4542 = vld [vmem:[%s4476 + $0x104] sm:$0xf]
  %v4543 = vld [vmem:[%s4476 + $0x108] sm:$0xf]
  %v4544 = vld [vmem:[%s4476 + $0x10c] sm:$0xf]
  %v4545 = vld [vmem:[%s4476 + $0x110] sm:$0xf]
  %v4546 = vld [vmem:[%s4476 + $0x114] sm:$0xf]
  %v4547 = vld [vmem:[%s4476 + $0x118] sm:$0xf]
  %v4548 = vld [vmem:[%s4476 + $0x11c] sm:$0xf]
  %v4549 = vld [vmem:[%s4476 + $0x120] sm:$0xf]
  %v4550 = vld [vmem:[%s4476 + $0x124] sm:$0xf]
  %v4551 = vld [vmem:[%s4476 + $0x128] sm:$0xf]
  %v4552 = vld [vmem:[%s4476 + $0x12c] sm:$0xf]
  %v4553 = vld [vmem:[%s4476 + $0x130] sm:$0xf]
  %v4554 = vld [vmem:[%s4476 + $0x134] sm:$0xf]
  %v4555 = vld [vmem:[%s4476 + $0x138] sm:$0xf]
  %v4556 = vld [vmem:[%s4476 + $0x13c] sm:$0xf]
  %v4557 = vld [vmem:[%s4476 + $0x140] sm:$0xf]
  %v4558 = vld [vmem:[%s4476 + $0x144] sm:$0xf]
  %v4559 = vld [vmem:[%s4476 + $0x148] sm:$0xf]
  %v4560 = vld [vmem:[%s4476 + $0x14c] sm:$0xf]
  %v4561 = vld [vmem:[%s4476 + $0x150] sm:$0xf]
  %v4562 = vld [vmem:[%s4476 + $0x154] sm:$0xf]
  %v4563 = vld [vmem:[%s4476 + $0x158] sm:$0xf]
  %v4564 = vld [vmem:[%s4476 + $0x15c] sm:$0xf]
  %v4565 = vld [vmem:[%s4476 + $0x160] sm:$0xf]
  %v4566 = vld [vmem:[%s4476 + $0x164] sm:$0xf]
  %v4567 = vld [vmem:[%s4476 + $0x168] sm:$0xf]
  %v4568 = vld [vmem:[%s4476 + $0x16c] sm:$0xf]
  %v4569 = vld [vmem:[%s4476 + $0x170] sm:$0xf]
  %v4570 = vld [vmem:[%s4476 + $0x174] sm:$0xf]
  %v4571 = vld [vmem:[%s4476 + $0x178] sm:$0xf]
  %v4572 = vld [vmem:[%s4476 + $0x17c] sm:$0xf]
  %v4573 = vld [vmem:[%s4476 + $0x180] sm:$0xf]
  %v4574 = vld [vmem:[%s4476 + $0x184] sm:$0xf]
  %v4575 = vld [vmem:[%s4476 + $0x188] sm:$0xf]
  %v4576 = vld [vmem:[%s4476 + $0x18c] sm:$0xf]
  %v4577 = vld [vmem:[%s4476 + $0x190] sm:$0xf]
  %v4578 = vld [vmem:[%s4476 + $0x194] sm:$0xf]
  %v4579 = vld [vmem:[%s4476 + $0x198] sm:$0xf]
  %v4580 = vld [vmem:[%s4476 + $0x19c] sm:$0xf]
  %v4581 = vld [vmem:[%s4476 + $0x1a0] sm:$0xf]
  %v4582 = vld [vmem:[%s4476 + $0x1a4] sm:$0xf]
  %v4583 = vld [vmem:[%s4476 + $0x1a8] sm:$0xf]
  %v4584 = vld [vmem:[%s4476 + $0x1ac] sm:$0xf]
  %v4585 = vld [vmem:[%s4476 + $0x1b0] sm:$0xf]
  %v4586 = vld [vmem:[%s4476 + $0x1b4] sm:$0xf]
  %v4587 = vld [vmem:[%s4476 + $0x1b8] sm:$0xf]
  %v4588 = vld [vmem:[%s4476 + $0x1bc] sm:$0xf]
  %v4589 = vld [vmem:[%s4476 + $0x1c0] sm:$0xf]
  %v4590 = vld [vmem:[%s4476 + $0x1c4] sm:$0xf]
  %v4591 = vld [vmem:[%s4476 + $0x1c8] sm:$0xf]
  %v4592 = vld [vmem:[%s4476 + $0x1cc] sm:$0xf]
  %v4593 = vld [vmem:[%s4476 + $0x1d0] sm:$0xf]
  %v4594 = vld [vmem:[%s4476 + $0x1d4] sm:$0xf]
  %v4595 = vld [vmem:[%s4476 + $0x1d8] sm:$0xf]
  %v4596 = vld [vmem:[%s4476 + $0x1dc] sm:$0xf]
  %v4597 = vld [vmem:[%s4476 + $0x1e0] sm:$0xf]
  %v4598 = vld [vmem:[%s4476 + $0x1e4] sm:$0xf]
  %v4599 = vld [vmem:[%s4476 + $0x1e8] sm:$0xf]
  %v4600 = vld [vmem:[%s4476 + $0x1ec] sm:$0xf]
  %v4601 = vld [vmem:[%s4476 + $0x1f0] sm:$0xf]
  %v4602 = vld [vmem:[%s4476 + $0x1f4] sm:$0xf]
  %v4603 = vld [vmem:[%s4476 + $0x1f8] sm:$0xf]
  %v4604 = vld [vmem:[%s4476 + $0x1fc] sm:$0xf]
  %v4605 = vld [vmem:[%s4476 + $0x200] sm:$0xf]
  %v4606 = vld [vmem:[%s4476 + $0x204] sm:$0xf]
  %v4607 = vld [vmem:[%s4476 + $0x208] sm:$0xf]
  %v4608 = vld [vmem:[%s4476 + $0x20c] sm:$0xf]
  %v4609 = vld [vmem:[%s4476 + $0x210] sm:$0xf]
  %v4610 = vld [vmem:[%s4476 + $0x214] sm:$0xf]
  %v4611 = vld [vmem:[%s4476 + $0x218] sm:$0xf]
  %v4612 = vld [vmem:[%s4476 + $0x21c] sm:$0xf]
  %v4613 = vld [vmem:[%s4476 + $0x220] sm:$0xf]
  %v4614 = vld [vmem:[%s4476 + $0x224] sm:$0xf]
  %v4615 = vld [vmem:[%s4476 + $0x228] sm:$0xf]
  %v4616 = vld [vmem:[%s4476 + $0x22c] sm:$0xf]
  %v4617 = vld [vmem:[%s4476 + $0x230] sm:$0xf]
  %v4618 = vld [vmem:[%s4476 + $0x234] sm:$0xf]
  %v4619 = vld [vmem:[%s4476 + $0x238] sm:$0xf]
  %v4620 = vld [vmem:[%s4476 + $0x23c] sm:$0xf]
  %v4621 = vld [vmem:[%s4476 + $0x240] sm:$0xf]
  %v4622 = vld [vmem:[%s4476 + $0x244] sm:$0xf]
  %v4623 = vld [vmem:[%s4476 + $0x248] sm:$0xf]
  %v4624 = vld [vmem:[%s4476 + $0x24c] sm:$0xf]
  %v4625 = vld [vmem:[%s4476 + $0x250] sm:$0xf]
  %v4626 = vld [vmem:[%s4476 + $0x254] sm:$0xf]
  %v4627 = vld [vmem:[%s4476 + $0x258] sm:$0xf]
  %v4628 = vld [vmem:[%s4476 + $0x25c] sm:$0xf]
  %v4629 = vld [vmem:[%s4476 + $0x260] sm:$0xf]
  %v4630 = vld [vmem:[%s4476 + $0x264] sm:$0xf]
  %v4631 = vld [vmem:[%s4476 + $0x268] sm:$0xf]
  %v4632 = vld [vmem:[%s4476 + $0x26c] sm:$0xf]
  %v4633 = vld [vmem:[%s4476 + $0x270] sm:$0xf]
  %v4634 = vld [vmem:[%s4476 + $0x274] sm:$0xf]
  %v4635 = vld [vmem:[%s4476 + $0x278] sm:$0xf]
  %v4636 = vld [vmem:[%s4476 + $0x27c] sm:$0xf]
  %v4637 = vld [vmem:[%s4476 + $0x280] sm:$0xf]
  %v4638 = vld [vmem:[%s4476 + $0x284] sm:$0xf]
  %v4639 = vld [vmem:[%s4476 + $0x288] sm:$0xf]
  %v4640 = vld [vmem:[%s4476 + $0x28c] sm:$0xf]
  %v4641 = vld [vmem:[%s4476 + $0x290] sm:$0xf]
  %v4642 = vld [vmem:[%s4476 + $0x294] sm:$0xf]
  %v4643 = vld [vmem:[%s4476 + $0x298] sm:$0xf]
  %v4644 = vld [vmem:[%s4476 + $0x29c] sm:$0xf]
  %v4645 = vld [vmem:[%s4476 + $0x2a0] sm:$0xf]
  %v4646 = vld [vmem:[%s4476 + $0x2a4] sm:$0xf]
  %v4647 = vld [vmem:[%s4476 + $0x2a8] sm:$0xf]
  %v4648 = vld [vmem:[%s4476 + $0x2ac] sm:$0xf]
  %v4649 = vld [vmem:[%s4476 + $0x2b0] sm:$0xf]
  %v4650 = vld [vmem:[%s4476 + $0x2b4] sm:$0xf]
  %v4651 = vld [vmem:[%s4476 + $0x2b8] sm:$0xf]
  %v4652 = vld [vmem:[%s4476 + $0x2bc] sm:$0xf]
  %v4653 = vld [vmem:[%s4476 + $0x2c0] sm:$0xf]
  %v4654 = vld [vmem:[%s4476 + $0x2c4] sm:$0xf]
  %v4655 = vld [vmem:[%s4476 + $0x2c8] sm:$0xf]
  %v4656 = vld [vmem:[%s4476 + $0x2cc] sm:$0xf]
  %v4657 = vld [vmem:[%s4476 + $0x2d0] sm:$0xf]
  %v4658 = vld [vmem:[%s4476 + $0x2d4] sm:$0xf]
  %v4659 = vld [vmem:[%s4476 + $0x2d8] sm:$0xf]
  %v4660 = vld [vmem:[%s4476 + $0x2dc] sm:$0xf]
  %v4661 = vld [vmem:[%s4476 + $0x2e0] sm:$0xf]
  %v4662 = vld [vmem:[%s4476 + $0x2e4] sm:$0xf]
  %v4663 = vld [vmem:[%s4476 + $0x2e8] sm:$0xf]
  %v4664 = vld [vmem:[%s4476 + $0x2ec] sm:$0xf]
  %v4665 = vld [vmem:[%s4476 + $0x2f0] sm:$0xf]
  %v4666 = vld [vmem:[%s4476 + $0x2f4] sm:$0xf]
  %v4667 = vld [vmem:[%s4476 + $0x2f8] sm:$0xf]
  %v4668 = vld [vmem:[%s4476 + $0x2fc] sm:$0xf]
  %v4669 = vld [vmem:[%s4476 + $0x300] sm:$0xf]
  %v4670 = vld [vmem:[%s4476 + $0x304] sm:$0xf]
  %v4671 = vld [vmem:[%s4476 + $0x308] sm:$0xf]
  %v4672 = vld [vmem:[%s4476 + $0x30c] sm:$0xf]
  %v4673 = vld [vmem:[%s4476 + $0x310] sm:$0xf]
  %v4674 = vld [vmem:[%s4476 + $0x314] sm:$0xf]
  %v4675 = vld [vmem:[%s4476 + $0x318] sm:$0xf]
  %v4676 = vld [vmem:[%s4476 + $0x31c] sm:$0xf]
  %v4677 = vld [vmem:[%s4476 + $0x320] sm:$0xf]
  %v4678 = vld [vmem:[%s4476 + $0x324] sm:$0xf]
  %v4679 = vld [vmem:[%s4476 + $0x328] sm:$0xf]
  %v4680 = vld [vmem:[%s4476 + $0x32c] sm:$0xf]
  %v4681 = vld [vmem:[%s4476 + $0x330] sm:$0xf]
  %v4682 = vld [vmem:[%s4476 + $0x334] sm:$0xf]
  %v4683 = vld [vmem:[%s4476 + $0x338] sm:$0xf]
  %v4684 = vld [vmem:[%s4476 + $0x33c] sm:$0xf]
  %v4685 = vld [vmem:[%s4476 + $0x340] sm:$0xf]
  %v4686 = vld [vmem:[%s4476 + $0x344] sm:$0xf]
  %v4687 = vld [vmem:[%s4476 + $0x348] sm:$0xf]
  %v4688 = vld [vmem:[%s4476 + $0x34c] sm:$0xf]
  %v4689 = vld [vmem:[%s4476 + $0x350] sm:$0xf]
  %v4690 = vld [vmem:[%s4476 + $0x354] sm:$0xf]
  %v4691 = vld [vmem:[%s4476 + $0x358] sm:$0xf]
  %v4692 = vld [vmem:[%s4476 + $0x35c] sm:$0xf]
  %v4693 = vld [vmem:[%s4476 + $0x360] sm:$0xf]
  %v4694 = vld [vmem:[%s4476 + $0x364] sm:$0xf]
  %v4695 = vld [vmem:[%s4476 + $0x368] sm:$0xf]
  %v4696 = vld [vmem:[%s4476 + $0x36c] sm:$0xf]
  %v4697 = vld [vmem:[%s4476 + $0x370] sm:$0xf]
  %v4698 = vld [vmem:[%s4476 + $0x374] sm:$0xf]
  %v4699 = vld [vmem:[%s4476 + $0x378] sm:$0xf]
  %v4700 = vld [vmem:[%s4476 + $0x37c] sm:$0xf]
  %v4701 = vld [vmem:[%s4476 + $0x380] sm:$0xf]
  %v4702 = vld [vmem:[%s4476 + $0x384] sm:$0xf]
  %v4703 = vld [vmem:[%s4476 + $0x388] sm:$0xf]
  %v4704 = vld [vmem:[%s4476 + $0x38c] sm:$0xf]
  %v4705 = vld [vmem:[%s4476 + $0x390] sm:$0xf]
  %v4706 = vld [vmem:[%s4476 + $0x394] sm:$0xf]
  %v4707 = vld [vmem:[%s4476 + $0x398] sm:$0xf]
  %v4708 = vld [vmem:[%s4476 + $0x39c] sm:$0xf]
  %v4709 = vld [vmem:[%s4476 + $0x3a0] sm:$0xf]
  %v4710 = vld [vmem:[%s4476 + $0x3a4] sm:$0xf]
  %v4711 = vld [vmem:[%s4476 + $0x3a8] sm:$0xf]
  %v4712 = vld [vmem:[%s4476 + $0x3ac] sm:$0xf]
  %v4713 = vld [vmem:[%s4476 + $0x3b0] sm:$0xf]
  %v4714 = vld [vmem:[%s4476 + $0x3b4] sm:$0xf]
  %v4715 = vld [vmem:[%s4476 + $0x3b8] sm:$0xf]
  %v4716 = vld [vmem:[%s4476 + $0x3bc] sm:$0xf]
  %v4717 = vld [vmem:[%s4476 + $0x3c0] sm:$0xf]
  %v4718 = vld [vmem:[%s4476 + $0x3c4] sm:$0xf]
  %v4719 = vld [vmem:[%s4476 + $0x3c8] sm:$0xf]
  %v4720 = vld [vmem:[%s4476 + $0x3cc] sm:$0xf]
  %v4721 = vld [vmem:[%s4476 + $0x3d0] sm:$0xf]
  %v4722 = vld [vmem:[%s4476 + $0x3d4] sm:$0xf]
  %v4723 = vld [vmem:[%s4476 + $0x3d8] sm:$0xf]
  %v4724 = vld [vmem:[%s4476 + $0x3dc] sm:$0xf]
  %v4725 = vld [vmem:[%s4476 + $0x3e0] sm:$0xf]
  %v4726 = vld [vmem:[%s4476 + $0x3e4] sm:$0xf]
  %v4727 = vld [vmem:[%s4476 + $0x3e8] sm:$0xf]
  %v4728 = vld [vmem:[%s4476 + $0x3ec] sm:$0xf]
  %v4729 = vld [vmem:[%s4476 + $0x3f0] sm:$0xf]
  %v4730 = vld [vmem:[%s4476 + $0x3f4] sm:$0xf]
  %v4731 = vld [vmem:[%s4476 + $0x3f8] sm:$0xf]
  %v4732 = vld [vmem:[%s4476 + $0x3fc] sm:$0xf]
  %v4733 = vld [vmem:[%s3136 + $0x23] sm:$0x1]
  %v4734 = vlaneseq
  %v4735 = vshrl.u32 %v4734, 7
  %v4736 = vsub.s32 0, %v4735
  %v4737 = vrot.slane %v4733, %v4736
  %v4994 = vunpack.c.l.b16 %v4477
  %v4995 = vunpack.c.l.b16 %v4478
  %v4996 = vunpack.c.l.b16 %v4479
  %v4997 = vunpack.c.l.b16 %v4480
  %v4998 = vunpack.c.l.b16 %v4481
  %v4999 = vunpack.c.l.b16 %v4482
  %v5000 = vunpack.c.l.b16 %v4483
  %v5001 = vunpack.c.l.b16 %v4484
  %v5002 = vunpack.c.l.b16 %v4485
  %v5003 = vunpack.c.l.b16 %v4486
  %v5004 = vunpack.c.l.b16 %v4487
  %v5005 = vunpack.c.l.b16 %v4488
  %v5006 = vunpack.c.l.b16 %v4489
  %v5007 = vunpack.c.l.b16 %v4490
  %v5008 = vunpack.c.l.b16 %v4491
  %v5009 = vunpack.c.l.b16 %v4492
  %v5010 = vunpack.c.l.b16 %v4493
  %v5011 = vunpack.c.l.b16 %v4494
  %v5012 = vunpack.c.l.b16 %v4495
  %v5013 = vunpack.c.l.b16 %v4496
  %v5014 = vunpack.c.l.b16 %v4497
  %v5015 = vunpack.c.l.b16 %v4498
  %v5016 = vunpack.c.l.b16 %v4499
  %v5017 = vunpack.c.l.b16 %v4500
  %v5018 = vunpack.c.l.b16 %v4501
  %v5019 = vunpack.c.l.b16 %v4502
  %v5020 = vunpack.c.l.b16 %v4503
  %v5021 = vunpack.c.l.b16 %v4504
  %v5022 = vunpack.c.l.b16 %v4505
  %v5023 = vunpack.c.l.b16 %v4506
  %v5024 = vunpack.c.l.b16 %v4507
  %v5025 = vunpack.c.l.b16 %v4508
  %v5026 = vunpack.c.l.b16 %v4509
  %v5027 = vunpack.c.l.b16 %v4510
  %v5028 = vunpack.c.l.b16 %v4511
  %v5029 = vunpack.c.l.b16 %v4512
  %v5030 = vunpack.c.l.b16 %v4513
  %v5031 = vunpack.c.l.b16 %v4514
  %v5032 = vunpack.c.l.b16 %v4515
  %v5033 = vunpack.c.l.b16 %v4516
  %v5034 = vunpack.c.l.b16 %v4517
  %v5035 = vunpack.c.l.b16 %v4518
  %v5036 = vunpack.c.l.b16 %v4519
  %v5037 = vunpack.c.l.b16 %v4520
  %v5038 = vunpack.c.l.b16 %v4521
  %v5039 = vunpack.c.l.b16 %v4522
  %v5040 = vunpack.c.l.b16 %v4523
  %v5041 = vunpack.c.l.b16 %v4524
  %v5042 = vunpack.c.l.b16 %v4525
  %v5043 = vunpack.c.l.b16 %v4526
  %v5044 = vunpack.c.l.b16 %v4527
  %v5045 = vunpack.c.l.b16 %v4528
  %v5046 = vunpack.c.l.b16 %v4529
  %v5047 = vunpack.c.l.b16 %v4530
  %v5048 = vunpack.c.l.b16 %v4531
  %v5049 = vunpack.c.l.b16 %v4532
  %v5050 = vunpack.c.l.b16 %v4533
  %v5051 = vunpack.c.l.b16 %v4534
  %v5052 = vunpack.c.l.b16 %v4535
  %v5053 = vunpack.c.l.b16 %v4536
  %v5054 = vunpack.c.l.b16 %v4537
  %v5055 = vunpack.c.l.b16 %v4538
  %v5056 = vunpack.c.l.b16 %v4539
  %v5057 = vunpack.c.l.b16 %v4540
  %v5058 = vunpack.c.l.b16 %v4541
  %v5059 = vunpack.c.l.b16 %v4542
  %v5060 = vunpack.c.l.b16 %v4543
  %v5061 = vunpack.c.l.b16 %v4544
  %v5062 = vunpack.c.l.b16 %v4545
  %v5063 = vunpack.c.l.b16 %v4546
  %v5064 = vunpack.c.l.b16 %v4547
  %v5065 = vunpack.c.l.b16 %v4548
  %v5066 = vunpack.c.l.b16 %v4549
  %v5067 = vunpack.c.l.b16 %v4550
  %v5068 = vunpack.c.l.b16 %v4551
  %v5069 = vunpack.c.l.b16 %v4552
  %v5070 = vunpack.c.l.b16 %v4553
  %v5071 = vunpack.c.l.b16 %v4554
  %v5072 = vunpack.c.l.b16 %v4555
  %v5073 = vunpack.c.l.b16 %v4556
  %v5074 = vunpack.c.l.b16 %v4557
  %v5075 = vunpack.c.l.b16 %v4558
  %v5076 = vunpack.c.l.b16 %v4559
  %v5077 = vunpack.c.l.b16 %v4560
  %v5078 = vunpack.c.l.b16 %v4561
  %v5079 = vunpack.c.l.b16 %v4562
  %v5080 = vunpack.c.l.b16 %v4563
  %v5081 = vunpack.c.l.b16 %v4564
  %v5082 = vunpack.c.l.b16 %v4565
  %v5083 = vunpack.c.l.b16 %v4566
  %v5084 = vunpack.c.l.b16 %v4567
  %v5085 = vunpack.c.l.b16 %v4568
  %v5086 = vunpack.c.l.b16 %v4569
  %v5087 = vunpack.c.l.b16 %v4570
  %v5088 = vunpack.c.l.b16 %v4571
  %v5089 = vunpack.c.l.b16 %v4572
  %v5090 = vunpack.c.l.b16 %v4573
  %v5091 = vunpack.c.l.b16 %v4574
  %v5092 = vunpack.c.l.b16 %v4575
  %v5093 = vunpack.c.l.b16 %v4576
  %v5094 = vunpack.c.l.b16 %v4577
  %v5095 = vunpack.c.l.b16 %v4578
  %v5096 = vunpack.c.l.b16 %v4579
  %v5097 = vunpack.c.l.b16 %v4580
  %v5098 = vunpack.c.l.b16 %v4581
  %v5099 = vunpack.c.l.b16 %v4582
  %v5100 = vunpack.c.l.b16 %v4583
  %v5101 = vunpack.c.l.b16 %v4584
  %v5102 = vunpack.c.l.b16 %v4585
  %v5103 = vunpack.c.l.b16 %v4586
  %v5104 = vunpack.c.l.b16 %v4587
  %v5105 = vunpack.c.l.b16 %v4588
  %v5106 = vunpack.c.l.b16 %v4589
  %v5107 = vunpack.c.l.b16 %v4590
  %v5108 = vunpack.c.l.b16 %v4591
  %v5109 = vunpack.c.l.b16 %v4592
  %v5110 = vunpack.c.l.b16 %v4593
  %v5111 = vunpack.c.l.b16 %v4594
  %v5112 = vunpack.c.l.b16 %v4595
  %v5113 = vunpack.c.l.b16 %v4596
  %v5114 = vunpack.c.l.b16 %v4597
  %v5115 = vunpack.c.l.b16 %v4598
  %v5116 = vunpack.c.l.b16 %v4599
  %v5117 = vunpack.c.l.b16 %v4600
  %v5118 = vunpack.c.l.b16 %v4601
  %v5119 = vunpack.c.l.b16 %v4602
  %v5120 = vunpack.c.l.b16 %v4603
  %v5121 = vunpack.c.l.b16 %v4604
  %v5122 = vunpack.c.l.b16 %v4605
  %v5123 = vunpack.c.l.b16 %v4606
  %v5124 = vunpack.c.l.b16 %v4607
  %v5125 = vunpack.c.l.b16 %v4608
  %v5126 = vunpack.c.l.b16 %v4609
  %v5127 = vunpack.c.l.b16 %v4610
  %v5128 = vunpack.c.l.b16 %v4611
  %v5129 = vunpack.c.l.b16 %v4612
  %v5130 = vunpack.c.l.b16 %v4613
  %v5131 = vunpack.c.l.b16 %v4614
  %v5132 = vunpack.c.l.b16 %v4615
  %v5133 = vunpack.c.l.b16 %v4616
  %v5134 = vunpack.c.l.b16 %v4617
  %v5135 = vunpack.c.l.b16 %v4618
  %v5136 = vunpack.c.l.b16 %v4619
  %v5137 = vunpack.c.l.b16 %v4620
  %v5138 = vunpack.c.l.b16 %v4621
  %v5139 = vunpack.c.l.b16 %v4622
  %v5140 = vunpack.c.l.b16 %v4623
  %v5141 = vunpack.c.l.b16 %v4624
  %v5142 = vunpack.c.l.b16 %v4625
  %v5143 = vunpack.c.l.b16 %v4626
  %v5144 = vunpack.c.l.b16 %v4627
  %v5145 = vunpack.c.l.b16 %v4628
  %v5146 = vunpack.c.l.b16 %v4629
  %v5147 = vunpack.c.l.b16 %v4630
  %v5148 = vunpack.c.l.b16 %v4631
  %v5149 = vunpack.c.l.b16 %v4632
  %v5150 = vunpack.c.l.b16 %v4633
  %v5151 = vunpack.c.l.b16 %v4634
  %v5152 = vunpack.c.l.b16 %v4635
  %v5153 = vunpack.c.l.b16 %v4636
  %v5154 = vunpack.c.l.b16 %v4637
  %v5155 = vunpack.c.l.b16 %v4638
  %v5156 = vunpack.c.l.b16 %v4639
  %v5157 = vunpack.c.l.b16 %v4640
  %v5158 = vunpack.c.l.b16 %v4641
  %v5159 = vunpack.c.l.b16 %v4642
  %v5160 = vunpack.c.l.b16 %v4643
  %v5161 = vunpack.c.l.b16 %v4644
  %v5162 = vunpack.c.l.b16 %v4645
  %v5163 = vunpack.c.l.b16 %v4646
  %v5164 = vunpack.c.l.b16 %v4647
  %v5165 = vunpack.c.l.b16 %v4648
  %v5166 = vunpack.c.l.b16 %v4649
  %v5167 = vunpack.c.l.b16 %v4650
  %v5168 = vunpack.c.l.b16 %v4651
  %v5169 = vunpack.c.l.b16 %v4652
  %v5170 = vunpack.c.l.b16 %v4653
  %v5171 = vunpack.c.l.b16 %v4654
  %v5172 = vunpack.c.l.b16 %v4655
  %v5173 = vunpack.c.l.b16 %v4656
  %v5174 = vunpack.c.l.b16 %v4657
  %v5175 = vunpack.c.l.b16 %v4658
  %v5176 = vunpack.c.l.b16 %v4659
  %v5177 = vunpack.c.l.b16 %v4660
  %v5178 = vunpack.c.l.b16 %v4661
  %v5179 = vunpack.c.l.b16 %v4662
  %v5180 = vunpack.c.l.b16 %v4663
  %v5181 = vunpack.c.l.b16 %v4664
  %v5182 = vunpack.c.l.b16 %v4665
  %v5183 = vunpack.c.l.b16 %v4666
  %v5184 = vunpack.c.l.b16 %v4667
  %v5185 = vunpack.c.l.b16 %v4668
  %v5186 = vunpack.c.l.b16 %v4669
  %v5187 = vunpack.c.l.b16 %v4670
  %v5188 = vunpack.c.l.b16 %v4671
  %v5189 = vunpack.c.l.b16 %v4672
  %v5190 = vunpack.c.l.b16 %v4673
  %v5191 = vunpack.c.l.b16 %v4674
  %v5192 = vunpack.c.l.b16 %v4675
  %v5193 = vunpack.c.l.b16 %v4676
  %v5194 = vunpack.c.l.b16 %v4677
  %v5195 = vunpack.c.l.b16 %v4678
  %v5196 = vunpack.c.l.b16 %v4679
  %v5197 = vunpack.c.l.b16 %v4680
  %v5198 = vunpack.c.l.b16 %v4681
  %v5199 = vunpack.c.l.b16 %v4682
  %v5200 = vunpack.c.l.b16 %v4683
  %v5201 = vunpack.c.l.b16 %v4684
  %v5202 = vunpack.c.l.b16 %v4685
  %v5203 = vunpack.c.l.b16 %v4686
  %v5204 = vunpack.c.l.b16 %v4687
  %v5205 = vunpack.c.l.b16 %v4688
  %v5206 = vunpack.c.l.b16 %v4689
  %v5207 = vunpack.c.l.b16 %v4690
  %v5208 = vunpack.c.l.b16 %v4691
  %v5209 = vunpack.c.l.b16 %v4692
  %v5210 = vunpack.c.l.b16 %v4693
  %v5211 = vunpack.c.l.b16 %v4694
  %v5212 = vunpack.c.l.b16 %v4695
  %v5213 = vunpack.c.l.b16 %v4696
  %v5214 = vunpack.c.l.b16 %v4697
  %v5215 = vunpack.c.l.b16 %v4698
  %v5216 = vunpack.c.l.b16 %v4699
  %v5217 = vunpack.c.l.b16 %v4700
  %v5218 = vunpack.c.l.b16 %v4701
  %v5219 = vunpack.c.l.b16 %v4702
  %v5220 = vunpack.c.l.b16 %v4703
  %v5221 = vunpack.c.l.b16 %v4704
  %v5222 = vunpack.c.l.b16 %v4705
  %v5223 = vunpack.c.l.b16 %v4706
  %v5224 = vunpack.c.l.b16 %v4707
  %v5225 = vunpack.c.l.b16 %v4708
  %v5226 = vunpack.c.l.b16 %v4709
  %v5227 = vunpack.c.l.b16 %v4710
  %v5228 = vunpack.c.l.b16 %v4711
  %v5229 = vunpack.c.l.b16 %v4712
  %v5230 = vunpack.c.l.b16 %v4713
  %v5231 = vunpack.c.l.b16 %v4714
  %v5232 = vunpack.c.l.b16 %v4715
  %v5233 = vunpack.c.l.b16 %v4716
  %v5234 = vunpack.c.l.b16 %v4717
  %v5235 = vunpack.c.l.b16 %v4718
  %v5236 = vunpack.c.l.b16 %v4719
  %v5237 = vunpack.c.l.b16 %v4720
  %v5238 = vunpack.c.l.b16 %v4721
  %v5239 = vunpack.c.l.b16 %v4722
  %v5240 = vunpack.c.l.b16 %v4723
  %v5241 = vunpack.c.l.b16 %v4724
  %v5242 = vunpack.c.l.b16 %v4725
  %v5243 = vunpack.c.l.b16 %v4726
  %v5244 = vunpack.c.l.b16 %v4727
  %v5245 = vunpack.c.l.b16 %v4728
  %v5246 = vunpack.c.l.b16 %v4729
  %v5247 = vunpack.c.l.b16 %v4730
  %v5248 = vunpack.c.l.b16 %v4731
  %v5249 = vunpack.c.l.b16 %v4732
  %v5250 = vpack.c.b16 %v4995, %v4994
  %v5251 = vpack.c.b16 %v4997, %v4996
  %v5252 = vpack.c.b16 %v4999, %v4998
  %v5253 = vpack.c.b16 %v5001, %v5000
  %v5254 = vpack.c.b16 %v5003, %v5002
  %v5255 = vpack.c.b16 %v5005, %v5004
  %v5256 = vpack.c.b16 %v5007, %v5006
  %v5257 = vpack.c.b16 %v5009, %v5008
  %v5258 = vpack.c.b16 %v5011, %v5010
  %v5259 = vpack.c.b16 %v5013, %v5012
  %v5260 = vpack.c.b16 %v5015, %v5014
  %v5261 = vpack.c.b16 %v5017, %v5016
  %v5262 = vpack.c.b16 %v5019, %v5018
  %v5263 = vpack.c.b16 %v5021, %v5020
  %v5264 = vpack.c.b16 %v5023, %v5022
  %v5265 = vpack.c.b16 %v5025, %v5024
  %v5266 = vpack.c.b16 %v5027, %v5026
  %v5267 = vpack.c.b16 %v5029, %v5028
  %v5268 = vpack.c.b16 %v5031, %v5030
  %v5269 = vpack.c.b16 %v5033, %v5032
  %v5270 = vpack.c.b16 %v5035, %v5034
  %v5271 = vpack.c.b16 %v5037, %v5036
  %v5272 = vpack.c.b16 %v5039, %v5038
  %v5273 = vpack.c.b16 %v5041, %v5040
  %v5274 = vpack.c.b16 %v5043, %v5042
  %v5275 = vpack.c.b16 %v5045, %v5044
  %v5276 = vpack.c.b16 %v5047, %v5046
  %v5277 = vpack.c.b16 %v5049, %v5048
  %v5278 = vpack.c.b16 %v5051, %v5050
  %v5279 = vpack.c.b16 %v5053, %v5052
  %v5280 = vpack.c.b16 %v5055, %v5054
  %v5281 = vpack.c.b16 %v5057, %v5056
  %v5282 = vpack.c.b16 %v5059, %v5058
  %v5283 = vpack.c.b16 %v5061, %v5060
  %v5284 = vpack.c.b16 %v5063, %v5062
  %v5285 = vpack.c.b16 %v5065, %v5064
  %v5286 = vpack.c.b16 %v5067, %v5066
  %v5287 = vpack.c.b16 %v5069, %v5068
  %v5288 = vpack.c.b16 %v5071, %v5070
  %v5289 = vpack.c.b16 %v5073, %v5072
  %v5290 = vpack.c.b16 %v5075, %v5074
  %v5291 = vpack.c.b16 %v5077, %v5076
  %v5292 = vpack.c.b16 %v5079, %v5078
  %v5293 = vpack.c.b16 %v5081, %v5080
  %v5294 = vpack.c.b16 %v5083, %v5082
  %v5295 = vpack.c.b16 %v5085, %v5084
  %v5296 = vpack.c.b16 %v5087, %v5086
  %v5297 = vpack.c.b16 %v5089, %v5088
  %v5298 = vpack.c.b16 %v5091, %v5090
  %v5299 = vpack.c.b16 %v5093, %v5092
  %v5300 = vpack.c.b16 %v5095, %v5094
  %v5301 = vpack.c.b16 %v5097, %v5096
  %v5302 = vpack.c.b16 %v5099, %v5098
  %v5303 = vpack.c.b16 %v5101, %v5100
  %v5304 = vpack.c.b16 %v5103, %v5102
  %v5305 = vpack.c.b16 %v5105, %v5104
  %v5306 = vpack.c.b16 %v5107, %v5106
  %v5307 = vpack.c.b16 %v5109, %v5108
  %v5308 = vpack.c.b16 %v5111, %v5110
  %v5309 = vpack.c.b16 %v5113, %v5112
  %v5310 = vpack.c.b16 %v5115, %v5114
  %v5311 = vpack.c.b16 %v5117, %v5116
  %v5312 = vpack.c.b16 %v5119, %v5118
  %v5313 = vpack.c.b16 %v5121, %v5120
  %v5314 = vpack.c.b16 %v5123, %v5122
  %v5315 = vpack.c.b16 %v5125, %v5124
  %v5316 = vpack.c.b16 %v5127, %v5126
  %v5317 = vpack.c.b16 %v5129, %v5128
  %v5318 = vpack.c.b16 %v5131, %v5130
  %v5319 = vpack.c.b16 %v5133, %v5132
  %v5320 = vpack.c.b16 %v5135, %v5134
  %v5321 = vpack.c.b16 %v5137, %v5136
  %v5322 = vpack.c.b16 %v5139, %v5138
  %v5323 = vpack.c.b16 %v5141, %v5140
  %v5324 = vpack.c.b16 %v5143, %v5142
  %v5325 = vpack.c.b16 %v5145, %v5144
  %v5326 = vpack.c.b16 %v5147, %v5146
  %v5327 = vpack.c.b16 %v5149, %v5148
  %v5328 = vpack.c.b16 %v5151, %v5150
  %v5329 = vpack.c.b16 %v5153, %v5152
  %v5330 = vpack.c.b16 %v5155, %v5154
  %v5331 = vpack.c.b16 %v5157, %v5156
  %v5332 = vpack.c.b16 %v5159, %v5158
  %v5333 = vpack.c.b16 %v5161, %v5160
  %v5334 = vpack.c.b16 %v5163, %v5162
  %v5335 = vpack.c.b16 %v5165, %v5164
  %v5336 = vpack.c.b16 %v5167, %v5166
  %v5337 = vpack.c.b16 %v5169, %v5168
  %v5338 = vpack.c.b16 %v5171, %v5170
  %v5339 = vpack.c.b16 %v5173, %v5172
  %v5340 = vpack.c.b16 %v5175, %v5174
  %v5341 = vpack.c.b16 %v5177, %v5176
  %v5342 = vpack.c.b16 %v5179, %v5178
  %v5343 = vpack.c.b16 %v5181, %v5180
  %v5344 = vpack.c.b16 %v5183, %v5182
  %v5345 = vpack.c.b16 %v5185, %v5184
  %v5346 = vpack.c.b16 %v5187, %v5186
  %v5347 = vpack.c.b16 %v5189, %v5188
  %v5348 = vpack.c.b16 %v5191, %v5190
  %v5349 = vpack.c.b16 %v5193, %v5192
  %v5350 = vpack.c.b16 %v5195, %v5194
  %v5351 = vpack.c.b16 %v5197, %v5196
  %v5352 = vpack.c.b16 %v5199, %v5198
  %v5353 = vpack.c.b16 %v5201, %v5200
  %v5354 = vpack.c.b16 %v5203, %v5202
  %v5355 = vpack.c.b16 %v5205, %v5204
  %v5356 = vpack.c.b16 %v5207, %v5206
  %v5357 = vpack.c.b16 %v5209, %v5208
  %v5358 = vpack.c.b16 %v5211, %v5210
  %v5359 = vpack.c.b16 %v5213, %v5212
  %v5360 = vpack.c.b16 %v5215, %v5214
  %v5361 = vpack.c.b16 %v5217, %v5216
  %v5362 = vpack.c.b16 %v5219, %v5218
  %v5363 = vpack.c.b16 %v5221, %v5220
  %v5364 = vpack.c.b16 %v5223, %v5222
  %v5365 = vpack.c.b16 %v5225, %v5224
  %v5366 = vpack.c.b16 %v5227, %v5226
  %v5367 = vpack.c.b16 %v5229, %v5228
  %v5368 = vpack.c.b16 %v5231, %v5230
  %v5369 = vpack.c.b16 %v5233, %v5232
  %v5370 = vpack.c.b16 %v5235, %v5234
  %v5371 = vpack.c.b16 %v5237, %v5236
  %v5372 = vpack.c.b16 %v5239, %v5238
  %v5373 = vpack.c.b16 %v5241, %v5240
  %v5374 = vpack.c.b16 %v5243, %v5242
  %v5375 = vpack.c.b16 %v5245, %v5244
  %v5376 = vpack.c.b16 %v5247, %v5246
  %v5377 = vpack.c.b16 %v5249, %v5248
  %5506 = vmatprep.subr.bf16.mxu0 0
  %5507 = vmatpush1.bf16.msra.mxu0 %v5250
  %5508 = vmatprep.subr.bf16.mxu0 0
  %5509 = vmatpush1.bf16.msra.mxu0 %v5251
  %5510 = vmatprep.subr.bf16.mxu0 0
  %5511 = vmatpush1.bf16.msra.mxu0 %v5252
  %5512 = vmatprep.subr.bf16.mxu0 0
  %5513 = vmatpush1.bf16.msra.mxu0 %v5253
  %5514 = vmatprep.subr.bf16.mxu0 0
  %5515 = vmatpush1.bf16.msra.mxu0 %v5254
  %5516 = vmatprep.subr.bf16.mxu0 0
  %5517 = vmatpush1.bf16.msra.mxu0 %v5255
  %5518 = vmatprep.subr.bf16.mxu0 0
  %5519 = vmatpush1.bf16.msra.mxu0 %v5256
  %5520 = vmatprep.subr.bf16.mxu0 0
  %5521 = vmatpush1.bf16.msra.mxu0 %v5257
  %5522 = vmatprep.subr.bf16.mxu0 0
  %5523 = vmatpush1.bf16.msra.mxu0 %v5258
  %5524 = vmatprep.subr.bf16.mxu0 0
  %5525 = vmatpush1.bf16.msra.mxu0 %v5259
  %5526 = vmatprep.subr.bf16.mxu0 0
  %5527 = vmatpush1.bf16.msra.mxu0 %v5260
  %5528 = vmatprep.subr.bf16.mxu0 0
  %5529 = vmatpush1.bf16.msra.mxu0 %v5261
  %5530 = vmatprep.subr.bf16.mxu0 0
  %5531 = vmatpush1.bf16.msra.mxu0 %v5262
  %5532 = vmatprep.subr.bf16.mxu0 0
  %5533 = vmatpush1.bf16.msra.mxu0 %v5263
  %5534 = vmatprep.subr.bf16.mxu0 0
  %5535 = vmatpush1.bf16.msra.mxu0 %v5264
  %5536 = vmatprep.subr.bf16.mxu0 0
  %5537 = vmatpush1.bf16.msra.mxu0 %v5265
  %5538 = vmatprep.mubr.bf16.mxu0 %v4413
  %5539 = vmatmul.mubr.bf16.gmra.mrb[0].mxu0 %v4412
  %v5540 = vpop.f32.mrb[0].mxu0
  %v5541 = vadd.f32 %v4737, %v5540
  %v5542 = vpop.f32.mrb[0].mxu0
  %v5543 = vpop.f32.mrb[0].mxu0
  %v5544 = vadd.f32 %v4737, %v5543
  %v5545 = vpop.f32.mrb[0].mxu0
  %5546 = vmatprep.mubr.bf16.mxu0 %v4429
  %5547 = vmatmul.mubr.bf16.gmra.mrb[0].mxu0 %v4428
  %v5548 = vpop.f32.mrb[0].mxu0
  %v5549 = vadd.f32 %v4737, %v5548
  %v5550 = vpop.f32.mrb[0].mxu0
  %v5551 = vpop.f32.mrb[0].mxu0
  %v5552 = vadd.f32 %v4737, %v5551
  %v5553 = vpop.f32.mrb[0].mxu0
  %5554 = vmatprep.mubr.bf16.mxu0 %v4445
  %5555 = vmatmul.mubr.bf16.gmra.mrb[0].mxu0 %v4444
  %v5556 = vpop.f32.mrb[0].mxu0
  %v5557 = vadd.f32 %v4737, %v5556
  %v5558 = vpop.f32.mrb[0].mxu0
  %v5559 = vpop.f32.mrb[0].mxu0
  %v5560 = vadd.f32 %v4737, %v5559
  %v5561 = vpop.f32.mrb[0].mxu0
  %5562 = vmatprep.mubr.bf16.mxu0 %v4461
  %5563 = vmatmul.mubr.bf16.gmra.mrb[0].mxu0 %v4460
  %v5564 = vpop.f32.mrb[0].mxu0
  %v5565 = vadd.f32 %v4737, %v5564
  %v5566 = vpop.f32.mrb[0].mxu0
  %v5567 = vpop.f32.mrb[0].mxu0
  %v5568 = vadd.f32 %v4737, %v5567
  %v5569 = vpop.f32.mrb[0].mxu0
  %5570 = vdwg.mxu0
  %5571 = vmatprep.subr.bf16.mxu0 0
  %5572 = vmatpush1.bf16.msra.mxu0 %v5266
  %5573 = vmatprep.subr.bf16.mxu0 0
  %5574 = vmatpush1.bf16.msra.mxu0 %v5267
  %5575 = vmatprep.subr.bf16.mxu0 0
  %5576 = vmatpush1.bf16.msra.mxu0 %v5268
  %5577 = vmatprep.subr.bf16.mxu0 0
  %5578 = vmatpush1.bf16.msra.mxu0 %v5269
  %5579 = vmatprep.subr.bf16.mxu0 0
  %5580 = vmatpush1.bf16.msra.mxu0 %v5270
  %5581 = vmatprep.subr.bf16.mxu0 0
  %5582 = vmatpush1.bf16.msra.mxu0 %v5271
  %5583 = vmatprep.subr.bf16.mxu0 0
  %5584 = vmatpush1.bf16.msra.mxu0 %v5272
  %5585 = vmatprep.subr.bf16.mxu0 0
  %5586 = vmatpush1.bf16.msra.mxu0 %v5273
  %5587 = vmatprep.subr.bf16.mxu0 0
  %5588 = vmatpush1.bf16.msra.mxu0 %v5274
  %5589 = vmatprep.subr.bf16.mxu0 0
  %5590 = vmatpush1.bf16.msra.mxu0 %v5275
  %5591 = vmatprep.subr.bf16.mxu0 0
  %5592 = vmatpush1.bf16.msra.mxu0 %v5276
  %5593 = vmatprep.subr.bf16.mxu0 0
  %5594 = vmatpush1.bf16.msra.mxu0 %v5277
  %5595 = vmatprep.subr.bf16.mxu0 0
  %5596 = vmatpush1.bf16.msra.mxu0 %v5278
  %5597 = vmatprep.subr.bf16.mxu0 0
  %5598 = vmatpush1.bf16.msra.mxu0 %v5279
  %5599 = vmatprep.subr.bf16.mxu0 0
  %5600 = vmatpush1.bf16.msra.mxu0 %v5280
  %5601 = vmatprep.subr.bf16.mxu0 0
  %5602 = vmatpush1.bf16.msra.mxu0 %v5281
  %5603 = vmatprep.mubr.bf16.mxu0 %v4415
  %5604 = vmatmul.mubr.bf16.gmra.mrb[0].mxu0 %v4414
  %v5605 = vpop.f32.mrb[0].mxu0
  %v5606 = vadd.f32 %v5541, %v5605
  %v5607 = vpop.f32.mrb[0].mxu0
  %v5608 = vpop.f32.mrb[0].mxu0
  %v5609 = vadd.f32 %v5544, %v5608
  %v5610 = vpop.f32.mrb[0].mxu0
  %5611 = vmatprep.mubr.bf16.mxu0 %v4431
  %5612 = vmatmul.mubr.bf16.gmra.mrb[0].mxu0 %v4430
  %v5613 = vpop.f32.mrb[0].mxu0
  %v5614 = vadd.f32 %v5549, %v5613
  %v5615 = vpop.f32.mrb[0].mxu0
  %v5616 = vpop.f32.mrb[0].mxu0
  %v5617 = vadd.f32 %v5552, %v5616
  %v5618 = vpop.f32.mrb[0].mxu0
  %5619 = vmatprep.mubr.bf16.mxu0 %v4447
  %5620 = vmatmul.mubr.bf16.gmra.mrb[0].mxu0 %v4446
  %v5621 = vpop.f32.mrb[0].mxu0
  %v5622 = vadd.f32 %v5557, %v5621
  %v5623 = vpop.f32.mrb[0].mxu0
  %v5624 = vpop.f32.mrb[0].mxu0
  %v5625 = vadd.f32 %v5560, %v5624
  %v5626 = vpop.f32.mrb[0].mxu0
  %5627 = vmatprep.mubr.bf16.mxu0 %v4463
  %5628 = vmatmul.mubr.bf16.gmra.mrb[0].mxu0 %v4462
  %v5629 = vpop.f32.mrb[0].mxu0
  %v5630 = vadd.f32 %v5565, %v5629
  %v5631 = vpop.f32.mrb[0].mxu0
  %v5632 = vpop.f32.mrb[0].mxu0
  %v5633 = vadd.f32 %v5568, %v5632
  %v5634 = vpop.f32.mrb[0].mxu0
  %5635 = vdwg.mxu0
  %5636 = vmatprep.subr.bf16.mxu0 0
  %5637 = vmatpush1.bf16.msra.mxu0 %v5282
  %5638 = vmatprep.subr.bf16.mxu0 0
  %5639 = vmatpush1.bf16.msra.mxu0 %v5283
  %5640 = vmatprep.subr.bf16.mxu0 0
  %5641 = vmatpush1.bf16.msra.mxu0 %v5284
  %5642 = vmatprep.subr.bf16.mxu0 0
  %5643 = vmatpush1.bf16.msra.mxu0 %v5285
  %5644 = vmatprep.subr.bf16.mxu0 0
  %5645 = vmatpush1.bf16.msra.mxu0 %v5286
  %5646 = vmatprep.subr.bf16.mxu0 0
  %5647 = vmatpush1.bf16.msra.mxu0 %v5287
  %5648 = vmatprep.subr.bf16.mxu0 0
  %5649 = vmatpush1.bf16.msra.mxu0 %v5288
  %5650 = vmatprep.subr.bf16.mxu0 0
  %5651 = vmatpush1.bf16.msra.mxu0 %v5289
  %5652 = vmatprep.subr.bf16.mxu0 0
  %5653 = vmatpush1.bf16.msra.mxu0 %v5290
  %5654 = vmatprep.subr.bf16.mxu0 0
  %5655 = vmatpush1.bf16.msra.mxu0 %v5291
  %5656 = vmatprep.subr.bf16.mxu0 0
  %5657 = vmatpush1.bf16.msra.mxu0 %v5292
  %5658 = vmatprep.subr.bf16.mxu0 0
  %5659 = vmatpush1.bf16.msra.mxu0 %v5293
  %5660 = vmatprep.subr.bf16.mxu0 0
  %5661 = vmatpush1.bf16.msra.mxu0 %v5294
  %5662 = vmatprep.subr.bf16.mxu0 0
  %5663 = vmatpush1.bf16.msra.mxu0 %v5295
  %5664 = vmatprep.subr.bf16.mxu0 0
  %5665 = vmatpush1.bf16.msra.mxu0 %v5296
  %5666 = vmatprep.subr.bf16.mxu0 0
  %5667 = vmatpush1.bf16.msra.mxu0 %v5297
  %5668 = vmatprep.mubr.bf16.mxu0 %v4417
  %5669 = vmatmul.mubr.bf16.gmra.mrb[0].mxu0 %v4416
  %v5670 = vpop.f32.mrb[0].mxu0
  %v5671 = vadd.f32 %v5606, %v5670
  %v5672 = vpop.f32.mrb[0].mxu0
  %v5673 = vpop.f32.mrb[0].mxu0
  %v5674 = vadd.f32 %v5609, %v5673
  %v5675 = vpop.f32.mrb[0].mxu0
  %5676 = vmatprep.mubr.bf16.mxu0 %v4433
  %5677 = vmatmul.mubr.bf16.gmra.mrb[0].mxu0 %v4432
  %v5678 = vpop.f32.mrb[0].mxu0
  %v5679 = vadd.f32 %v5614, %v5678
  %v5680 = vpop.f32.mrb[0].mxu0
  %v5681 = vpop.f32.mrb[0].mxu0
  %v5682 = vadd.f32 %v5617, %v5681
  %v5683 = vpop.f32.mrb[0].mxu0
  %5684 = vmatprep.mubr.bf16.mxu0 %v4449
  %5685 = vmatmul.mubr.bf16.gmra.mrb[0].mxu0 %v4448
  %v5686 = vpop.f32.mrb[0].mxu0
  %v5687 = vadd.f32 %v5622, %v5686
  %v5688 = vpop.f32.mrb[0].mxu0
  %v5689 = vpop.f32.mrb[0].mxu0
  %v5690 = vadd.f32 %v5625, %v5689
  %v5691 = vpop.f32.mrb[0].mxu0
  %5692 = vmatprep.mubr.bf16.mxu0 %v4465
  %5693 = vmatmul.mubr.bf16.gmra.mrb[0].mxu0 %v4464
  %v5694 = vpop.f32.mrb[0].mxu0
  %v5695 = vadd.f32 %v5630, %v5694
  %v5696 = vpop.f32.mrb[0].mxu0
  %v5697 = vpop.f32.mrb[0].mxu0
  %v5698 = vadd.f32 %v5633, %v5697
  %v5699 = vpop.f32.mrb[0].mxu0
  %5700 = vdwg.mxu0
  %5701 = vmatprep.subr.bf16.mxu0 0
  %5702 = vmatpush1.bf16.msra.mxu0 %v5298
  %5703 = vmatprep.subr.bf16.mxu0 0
  %5704 = vmatpush1.bf16.msra.mxu0 %v5299
  %5705 = vmatprep.subr.bf16.mxu0 0
  %5706 = vmatpush1.bf16.msra.mxu0 %v5300
  %5707 = vmatprep.subr.bf16.mxu0 0
  %5708 = vmatpush1.bf16.msra.mxu0 %v5301
  %5709 = vmatprep.subr.bf16.mxu0 0
  %5710 = vmatpush1.bf16.msra.mxu0 %v5302
  %5711 = vmatprep.subr.bf16.mxu0 0
  %5712 = vmatpush1.bf16.msra.mxu0 %v5303
  %5713 = vmatprep.subr.bf16.mxu0 0
  %5714 = vmatpush1.bf16.msra.mxu0 %v5304
  %5715 = vmatprep.subr.bf16.mxu0 0
  %5716 = vmatpush1.bf16.msra.mxu0 %v5305
  %5717 = vmatprep.subr.bf16.mxu0 0
  %5718 = vmatpush1.bf16.msra.mxu0 %v5306
  %5719 = vmatprep.subr.bf16.mxu0 0
  %5720 = vmatpush1.bf16.msra.mxu0 %v5307
  %5721 = vmatprep.subr.bf16.mxu0 0
  %5722 = vmatpush1.bf16.msra.mxu0 %v5308
  %5723 = vmatprep.subr.bf16.mxu0 0
  %5724 = vmatpush1.bf16.msra.mxu0 %v5309
  %5725 = vmatprep.subr.bf16.mxu0 0
  %5726 = vmatpush1.bf16.msra.mxu0 %v5310
  %5727 = vmatprep.subr.bf16.mxu0 0
  %5728 = vmatpush1.bf16.msra.mxu0 %v5311
  %5729 = vmatprep.subr.bf16.mxu0 0
  %5730 = vmatpush1.bf16.msra.mxu0 %v5312
  %5731 = vmatprep.subr.bf16.mxu0 0
  %5732 = vmatpush1.bf16.msra.mxu0 %v5313
  %5733 = vmatprep.mubr.bf16.mxu0 %v4419
  %5734 = vmatmul.mubr.bf16.gmra.mrb[0].mxu0 %v4418
  %v5735 = vpop.f32.mrb[0].mxu0
  %v5736 = vadd.f32 %v5671, %v5735
  %v5737 = vpop.f32.mrb[0].mxu0
  %v5738 = vpop.f32.mrb[0].mxu0
  %v5739 = vadd.f32 %v5674, %v5738
  %v5740 = vpop.f32.mrb[0].mxu0
  %5741 = vmatprep.mubr.bf16.mxu0 %v4435
  %5742 = vmatmul.mubr.bf16.gmra.mrb[0].mxu0 %v4434
  %v5743 = vpop.f32.mrb[0].mxu0
  %v5744 = vadd.f32 %v5679, %v5743
  %v5745 = vpop.f32.mrb[0].mxu0
  %v5746 = vpop.f32.mrb[0].mxu0
  %v5747 = vadd.f32 %v5682, %v5746
  %v5748 = vpop.f32.mrb[0].mxu0
  %5749 = vmatprep.mubr.bf16.mxu0 %v4451
  %5750 = vmatmul.mubr.bf16.gmra.mrb[0].mxu0 %v4450
  %v5751 = vpop.f32.mrb[0].mxu0
  %v5752 = vadd.f32 %v5687, %v5751
  %v5753 = vpop.f32.mrb[0].mxu0
  %v5754 = vpop.f32.mrb[0].mxu0
  %v5755 = vadd.f32 %v5690, %v5754
  %v5756 = vpop.f32.mrb[0].mxu0
  %5757 = vmatprep.mubr.bf16.mxu0 %v4467
  %5758 = vmatmul.mubr.bf16.gmra.mrb[0].mxu0 %v4466
  %v5759 = vpop.f32.mrb[0].mxu0
  %v5760 = vadd.f32 %v5695, %v5759
  %v5761 = vpop.f32.mrb[0].mxu0
  %v5762 = vpop.f32.mrb[0].mxu0
  %v5763 = vadd.f32 %v5698, %v5762
  %v5764 = vpop.f32.mrb[0].mxu0
  %5765 = vdwg.mxu0
  %5766 = vmatprep.subr.bf16.mxu0 0
  %5767 = vmatpush1.bf16.msra.mxu0 %v5314
  %5768 = vmatprep.subr.bf16.mxu0 0
  %5769 = vmatpush1.bf16.msra.mxu0 %v5315
  %5770 = vmatprep.subr.bf16.mxu0 0
  %5771 = vmatpush1.bf16.msra.mxu0 %v5316
  %5772 = vmatprep.subr.bf16.mxu0 0
  %5773 = vmatpush1.bf16.msra.mxu0 %v5317
  %5774 = vmatprep.subr.bf16.mxu0 0
  %5775 = vmatpush1.bf16.msra.mxu0 %v5318
  %5776 = vmatprep.subr.bf16.mxu0 0
  %5777 = vmatpush1.bf16.msra.mxu0 %v5319
  %5778 = vmatprep.subr.bf16.mxu0 0
  %5779 = vmatpush1.bf16.msra.mxu0 %v5320
  %5780 = vmatprep.subr.bf16.mxu0 0
  %5781 = vmatpush1.bf16.msra.mxu0 %v5321
  %5782 = vmatprep.subr.bf16.mxu0 0
  %5783 = vmatpush1.bf16.msra.mxu0 %v5322
  %5784 = vmatprep.subr.bf16.mxu0 0
  %5785 = vmatpush1.bf16.msra.mxu0 %v5323
  %5786 = vmatprep.subr.bf16.mxu0 0
  %5787 = vmatpush1.bf16.msra.mxu0 %v5324
  %5788 = vmatprep.subr.bf16.mxu0 0
  %5789 = vmatpush1.bf16.msra.mxu0 %v5325
  %5790 = vmatprep.subr.bf16.mxu0 0
  %5791 = vmatpush1.bf16.msra.mxu0 %v5326
  %5792 = vmatprep.subr.bf16.mxu0 0
  %5793 = vmatpush1.bf16.msra.mxu0 %v5327
  %5794 = vmatprep.subr.bf16.mxu0 0
  %5795 = vmatpush1.bf16.msra.mxu0 %v5328
  %5796 = vmatprep.subr.bf16.mxu0 0
  %5797 = vmatpush1.bf16.msra.mxu0 %v5329
  %5798 = vmatprep.mubr.bf16.mxu0 %v4421
  %5799 = vmatmul.mubr.bf16.gmra.mrb[0].mxu0 %v4420
  %v5800 = vpop.f32.mrb[0].mxu0
  %v5801 = vadd.f32 %v5736, %v5800
  %v5802 = vpop.f32.mrb[0].mxu0
  %v5803 = vpop.f32.mrb[0].mxu0
  %v5804 = vadd.f32 %v5739, %v5803
  %v5805 = vpop.f32.mrb[0].mxu0
  %5806 = vmatprep.mubr.bf16.mxu0 %v4437
  %5807 = vmatmul.mubr.bf16.gmra.mrb[0].mxu0 %v4436
  %v5808 = vpop.f32.mrb[0].mxu0
  %v5809 = vadd.f32 %v5744, %v5808
  %v5810 = vpop.f32.mrb[0].mxu0
  %v5811 = vpop.f32.mrb[0].mxu0
  %v5812 = vadd.f32 %v5747, %v5811
  %v5813 = vpop.f32.mrb[0].mxu0
  %5814 = vmatprep.mubr.bf16.mxu0 %v4453
  %5815 = vmatmul.mubr.bf16.gmra.mrb[0].mxu0 %v4452
  %v5816 = vpop.f32.mrb[0].mxu0
  %v5817 = vadd.f32 %v5752, %v5816
  %v5818 = vpop.f32.mrb[0].mxu0
  %v5819 = vpop.f32.mrb[0].mxu0
  %v5820 = vadd.f32 %v5755, %v5819
  %v5821 = vpop.f32.mrb[0].mxu0
  %5822 = vmatprep.mubr.bf16.mxu0 %v4469
  %5823 = vmatmul.mubr.bf16.gmra.mrb[0].mxu0 %v4468
  %v5824 = vpop.f32.mrb[0].mxu0
  %v5825 = vadd.f32 %v5760, %v5824
  %v5826 = vpop.f32.mrb[0].mxu0
  %v5827 = vpop.f32.mrb[0].mxu0
  %v5828 = vadd.f32 %v5763, %v5827
  %v5829 = vpop.f32.mrb[0].mxu0
  %5830 = vdwg.mxu0
  %5831 = vmatprep.subr.bf16.mxu0 0
  %5832 = vmatpush1.bf16.msra.mxu0 %v5330
  %5833 = vmatprep.subr.bf16.mxu0 0
  %5834 = vmatpush1.bf16.msra.mxu0 %v5331
  %5835 = vmatprep.subr.bf16.mxu0 0
  %5836 = vmatpush1.bf16.msra.mxu0 %v5332
  %5837 = vmatprep.subr.bf16.mxu0 0
  %5838 = vmatpush1.bf16.msra.mxu0 %v5333
  %5839 = vmatprep.subr.bf16.mxu0 0
  %5840 = vmatpush1.bf16.msra.mxu0 %v5334
  %5841 = vmatprep.subr.bf16.mxu0 0
  %5842 = vmatpush1.bf16.msra.mxu0 %v5335
  %5843 = vmatprep.subr.bf16.mxu0 0
  %5844 = vmatpush1.bf16.msra.mxu0 %v5336
  %5845 = vmatprep.subr.bf16.mxu0 0
  %5846 = vmatpush1.bf16.msra.mxu0 %v5337
  %5847 = vmatprep.subr.bf16.mxu0 0
  %5848 = vmatpush1.bf16.msra.mxu0 %v5338
  %5849 = vmatprep.subr.bf16.mxu0 0
  %5850 = vmatpush1.bf16.msra.mxu0 %v5339
  %5851 = vmatprep.subr.bf16.mxu0 0
  %5852 = vmatpush1.bf16.msra.mxu0 %v5340
  %5853 = vmatprep.subr.bf16.mxu0 0
  %5854 = vmatpush1.bf16.msra.mxu0 %v5341
  %5855 = vmatprep.subr.bf16.mxu0 0
  %5856 = vmatpush1.bf16.msra.mxu0 %v5342
  %5857 = vmatprep.subr.bf16.mxu0 0
  %5858 = vmatpush1.bf16.msra.mxu0 %v5343
  %5859 = vmatprep.subr.bf16.mxu0 0
  %5860 = vmatpush1.bf16.msra.mxu0 %v5344
  %5861 = vmatprep.subr.bf16.mxu0 0
  %5862 = vmatpush1.bf16.msra.mxu0 %v5345
  %5863 = vmatprep.mubr.bf16.mxu0 %v4423
  %5864 = vmatmul.mubr.bf16.gmra.mrb[0].mxu0 %v4422
  %v5865 = vpop.f32.mrb[0].mxu0
  %v5866 = vadd.f32 %v5801, %v5865
  %v5867 = vpop.f32.mrb[0].mxu0
  %v5868 = vpop.f32.mrb[0].mxu0
  %v5869 = vadd.f32 %v5804, %v5868
  %v5870 = vpop.f32.mrb[0].mxu0
  %5871 = vmatprep.mubr.bf16.mxu0 %v4439
  %5872 = vmatmul.mubr.bf16.gmra.mrb[0].mxu0 %v4438
  %v5873 = vpop.f32.mrb[0].mxu0
  %v5874 = vadd.f32 %v5809, %v5873
  %v5875 = vpop.f32.mrb[0].mxu0
  %v5876 = vpop.f32.mrb[0].mxu0
  %v5877 = vadd.f32 %v5812, %v5876
  %v5878 = vpop.f32.mrb[0].mxu0
  %5879 = vmatprep.mubr.bf16.mxu0 %v4455
  %5880 = vmatmul.mubr.bf16.gmra.mrb[0].mxu0 %v4454
  %v5881 = vpop.f32.mrb[0].mxu0
  %v5882 = vadd.f32 %v5817, %v5881
  %v5883 = vpop.f32.mrb[0].mxu0
  %v5884 = vpop.f32.mrb[0].mxu0
  %v5885 = vadd.f32 %v5820, %v5884
  %v5886 = vpop.f32.mrb[0].mxu0
  %5887 = vmatprep.mubr.bf16.mxu0 %v4471
  %5888 = vmatmul.mubr.bf16.gmra.mrb[0].mxu0 %v4470
  %v5889 = vpop.f32.mrb[0].mxu0
  %v5890 = vadd.f32 %v5825, %v5889
  %v5891 = vpop.f32.mrb[0].mxu0
  %v5892 = vpop.f32.mrb[0].mxu0
  %v5893 = vadd.f32 %v5828, %v5892
  %v5894 = vpop.f32.mrb[0].mxu0
  %5895 = vdwg.mxu0
  %5896 = vmatprep.subr.bf16.mxu0 0
  %5897 = vmatpush1.bf16.msra.mxu0 %v5346
  %5898 = vmatprep.subr.bf16.mxu0 0
  %5899 = vmatpush1.bf16.msra.mxu0 %v5347
  %5900 = vmatprep.subr.bf16.mxu0 0
  %5901 = vmatpush1.bf16.msra.mxu0 %v5348
  %5902 = vmatprep.subr.bf16.mxu0 0
  %5903 = vmatpush1.bf16.msra.mxu0 %v5349
  %5904 = vmatprep.subr.bf16.mxu0 0
  %5905 = vmatpush1.bf16.msra.mxu0 %v5350
  %5906 = vmatprep.subr.bf16.mxu0 0
  %5907 = vmatpush1.bf16.msra.mxu0 %v5351
  %5908 = vmatprep.subr.bf16.mxu0 0
  %5909 = vmatpush1.bf16.msra.mxu0 %v5352
  %5910 = vmatprep.subr.bf16.mxu0 0
  %5911 = vmatpush1.bf16.msra.mxu0 %v5353
  %5912 = vmatprep.subr.bf16.mxu0 0
  %5913 = vmatpush1.bf16.msra.mxu0 %v5354
  %5914 = vmatprep.subr.bf16.mxu0 0
  %5915 = vmatpush1.bf16.msra.mxu0 %v5355
  %5916 = vmatprep.subr.bf16.mxu0 0
  %5917 = vmatpush1.bf16.msra.mxu0 %v5356
  %5918 = vmatprep.subr.bf16.mxu0 0
  %5919 = vmatpush1.bf16.msra.mxu0 %v5357
  %5920 = vmatprep.subr.bf16.mxu0 0
  %5921 = vmatpush1.bf16.msra.mxu0 %v5358
  %5922 = vmatprep.subr.bf16.mxu0 0
  %5923 = vmatpush1.bf16.msra.mxu0 %v5359
  %5924 = vmatprep.subr.bf16.mxu0 0
  %5925 = vmatpush1.bf16.msra.mxu0 %v5360
  %5926 = vmatprep.subr.bf16.mxu0 0
  %5927 = vmatpush1.bf16.msra.mxu0 %v5361
  %5928 = vmatprep.mubr.bf16.mxu0 %v4425
  %5929 = vmatmul.mubr.bf16.gmra.mrb[0].mxu0 %v4424
  %v5930 = vpop.f32.mrb[0].mxu0
  %v5931 = vadd.f32 %v5866, %v5930
  %v5932 = vpop.f32.mrb[0].mxu0
  %v5933 = vpop.f32.mrb[0].mxu0
  %v5934 = vadd.f32 %v5869, %v5933
  %v5935 = vpop.f32.mrb[0].mxu0
  %5936 = vmatprep.mubr.bf16.mxu0 %v4441
  %5937 = vmatmul.mubr.bf16.gmra.mrb[0].mxu0 %v4440
  %v5938 = vpop.f32.mrb[0].mxu0
  %v5939 = vadd.f32 %v5874, %v5938
  %v5940 = vpop.f32.mrb[0].mxu0
  %v5941 = vpop.f32.mrb[0].mxu0
  %v5942 = vadd.f32 %v5877, %v5941
  %v5943 = vpop.f32.mrb[0].mxu0
  %5944 = vmatprep.mubr.bf16.mxu0 %v4457
  %5945 = vmatmul.mubr.bf16.gmra.mrb[0].mxu0 %v4456
  %v5946 = vpop.f32.mrb[0].mxu0
  %v5947 = vadd.f32 %v5882, %v5946
  %v5948 = vpop.f32.mrb[0].mxu0
  %v5949 = vpop.f32.mrb[0].mxu0
  %v5950 = vadd.f32 %v5885, %v5949
  %v5951 = vpop.f32.mrb[0].mxu0
  %5952 = vmatprep.mubr.bf16.mxu0 %v4473
  %5953 = vmatmul.mubr.bf16.gmra.mrb[0].mxu0 %v4472
  %v5954 = vpop.f32.mrb[0].mxu0
  %v5955 = vadd.f32 %v5890, %v5954
  %v5956 = vpop.f32.mrb[0].mxu0
  %v5957 = vpop.f32.mrb[0].mxu0
  %v5958 = vadd.f32 %v5893, %v5957
  %v5959 = vpop.f32.mrb[0].mxu0
  %5960 = vdwg.mxu0
  %5961 = vmatprep.subr.bf16.mxu0 0
  %5962 = vmatpush1.bf16.msra.mxu0 %v5362
  %5963 = vmatprep.subr.bf16.mxu0 0
  %5964 = vmatpush1.bf16.msra.mxu0 %v5363
  %5965 = vmatprep.subr.bf16.mxu0 0
  %5966 = vmatpush1.bf16.msra.mxu0 %v5364
  %5967 = vmatprep.subr.bf16.mxu0 0
  %5968 = vmatpush1.bf16.msra.mxu0 %v5365
  %5969 = vmatprep.subr.bf16.mxu0 0
  %5970 = vmatpush1.bf16.msra.mxu0 %v5366
  %5971 = vmatprep.subr.bf16.mxu0 0
  %5972 = vmatpush1.bf16.msra.mxu0 %v5367
  %5973 = vmatprep.subr.bf16.mxu0 0
  %5974 = vmatpush1.bf16.msra.mxu0 %v5368
  %5975 = vmatprep.subr.bf16.mxu0 0
  %5976 = vmatpush1.bf16.msra.mxu0 %v5369
  %5977 = vmatprep.subr.bf16.mxu0 0
  %5978 = vmatpush1.bf16.msra.mxu0 %v5370
  %5979 = vmatprep.subr.bf16.mxu0 0
  %5980 = vmatpush1.bf16.msra.mxu0 %v5371
  %5981 = vmatprep.subr.bf16.mxu0 0
  %5982 = vmatpush1.bf16.msra.mxu0 %v5372
  %5983 = vmatprep.subr.bf16.mxu0 0
  %5984 = vmatpush1.bf16.msra.mxu0 %v5373
  %5985 = vmatprep.subr.bf16.mxu0 0
  %5986 = vmatpush1.bf16.msra.mxu0 %v5374
  %5987 = vmatprep.subr.bf16.mxu0 0
  %5988 = vmatpush1.bf16.msra.mxu0 %v5375
  %5989 = vmatprep.subr.bf16.mxu0 0
  %5990 = vmatpush1.bf16.msra.mxu0 %v5376
  %5991 = vmatprep.subr.bf16.mxu0 0
  %5992 = vmatpush1.bf16.msra.mxu0 %v5377
  %5993 = vmatprep.mubr.bf16.mxu0 %v4427
  %5994 = vmatmul.mubr.bf16.gmra.mrb[0].mxu0 %v4426
  %v5995 = vpop.f32.mrb[0].mxu0
  %v5996 = vadd.f32 %v5931, %v5995
  %v5997 = vpop.f32.mrb[0].mxu0
  %v5998 = vpop.f32.mrb[0].mxu0
  %v5999 = vadd.f32 %v5934, %v5998
  %v6000 = vpop.f32.mrb[0].mxu0
  %6001 = vmatprep.mubr.bf16.mxu0 %v4443
  %6002 = vmatmul.mubr.bf16.gmra.mrb[0].mxu0 %v4442
  %v6003 = vpop.f32.mrb[0].mxu0
  %v6004 = vadd.f32 %v5939, %v6003
  %v6005 = vpop.f32.mrb[0].mxu0
  %v6006 = vpop.f32.mrb[0].mxu0
  %v6007 = vadd.f32 %v5942, %v6006
  %v6008 = vpop.f32.mrb[0].mxu0
  %6009 = vmatprep.mubr.bf16.mxu0 %v4459
  %6010 = vmatmul.mubr.bf16.gmra.mrb[0].mxu0 %v4458
  %v6011 = vpop.f32.mrb[0].mxu0
  %v6012 = vadd.f32 %v5947, %v6011
  %v6013 = vpop.f32.mrb[0].mxu0
  %v6014 = vpop.f32.mrb[0].mxu0
  %v6015 = vadd.f32 %v5950, %v6014
  %v6016 = vpop.f32.mrb[0].mxu0
  %6017 = vmatprep.mubr.bf16.mxu0 %v4475
  %6018 = vmatmul.mubr.bf16.gmra.mrb[0].mxu0 %v4474
  %v6019 = vpop.f32.mrb[0].mxu0
  %v6020 = vadd.f32 %v5955, %v6019
  %v6021 = vpop.f32.mrb[0].mxu0
  %v6022 = vpop.f32.mrb[0].mxu0
  %v6023 = vadd.f32 %v5958, %v6022
  %v6024 = vpop.f32.mrb[0].mxu0
  %6025 = vdwg.mxu0
  %v6026 = vadd.f32 %v3397, %v5996
  %v6027 = vadd.f32 %v3398, %v5999
  %v6028 = vadd.f32 %v3399, %v6004
  %v6029 = vadd.f32 %v3400, %v6007
  %v6030 = vadd.f32 %v3401, %v6012
  %v6031 = vadd.f32 %v3402, %v6015
  %v6032 = vadd.f32 %v3403, %v6020
  %v6033 = vadd.f32 %v3404, %v6023
  %v6034 = vld [vmem:[%s3136 + $0x24] sm:$0x1]
  %v6035 = vld [vmem:[%s3136 + $0x25] sm:$0x1]
  %v6036 = vsel %vm250, %v6026, 0.0
  %6037 = vadd.xlane.f32.xlu0 %v6036
  %v6038 = vpop.xlane.xlu0 %6037
  %v6039 = vsel %vm250, %v6027, 0.0
  %6040 = vadd.xlane.f32.xlu0 %v6039
  %v6041 = vpop.xlane.xlu0 %6040
  %v6042 = vsel %vm250, %v6028, 0.0
  %6043 = vadd.xlane.f32.xlu0 %v6042
  %v6044 = vpop.xlane.xlu0 %6043
  %v6045 = vsel %vm250, %v6029, 0.0
  %6046 = vadd.xlane.f32.xlu0 %v6045
  %v6047 = vpop.xlane.xlu0 %6046
  %v6048 = vsel %vm250, %v6030, 0.0
  %6049 = vadd.xlane.f32.xlu0 %v6048
  %v6050 = vpop.xlane.xlu0 %6049
  %v6051 = vsel %vm250, %v6031, 0.0
  %6052 = vadd.xlane.f32.xlu0 %v6051
  %v6053 = vpop.xlane.xlu0 %6052
  %v6054 = vsel %vm250, %v6032, 0.0
  %6055 = vadd.xlane.f32.xlu0 %v6054
  %v6056 = vpop.xlane.xlu0 %6055
  %v6057 = vsel %vm250, %v6033, 0.0
  %6058 = vadd.xlane.f32.xlu0 %v6057
  %v6059 = vpop.xlane.xlu0 %6058
  %v6060 = vmul.f32 %v6038, %v275
  %v6061 = vmul.f32 %v6041, %v275
  %v6062 = vmul.f32 %v6044, %v275
  %v6063 = vmul.f32 %v6047, %v275
  %v6064 = vmul.f32 %v6050, %v275
  %v6065 = vmul.f32 %v6053, %v275
  %v6066 = vmul.f32 %v6056, %v275
  %v6067 = vmul.f32 %v6059, %v275
  %v6068 = vsub.f32 %v6026, %v6060
  %v6069 = vsub.f32 %v6027, %v6061
  %v6070 = vsub.f32 %v6028, %v6062
  %v6071 = vsub.f32 %v6029, %v6063
  %v6072 = vsub.f32 %v6030, %v6064
  %v6073 = vsub.f32 %v6031, %v6065
  %v6074 = vsub.f32 %v6032, %v6066
  %v6075 = vsub.f32 %v6033, %v6067
  %v6076 = vmul.f32 %v6068, %v6068
  %v6077 = vmul.f32 %v6069, %v6069
  %v6078 = vmul.f32 %v6070, %v6070
  %v6079 = vmul.f32 %v6071, %v6071
  %v6080 = vmul.f32 %v6072, %v6072
  %v6081 = vmul.f32 %v6073, %v6073
  %v6082 = vmul.f32 %v6074, %v6074
  %v6083 = vmul.f32 %v6075, %v6075
  %v6084 = vsel %vm250, %v6076, 0.0
  %6085 = vadd.xlane.f32.xlu0 %v6084
  %v6086 = vpop.xlane.xlu0 %6085
  %v6087 = vsel %vm250, %v6077, 0.0
  %6088 = vadd.xlane.f32.xlu0 %v6087
  %v6089 = vpop.xlane.xlu0 %6088
  %v6090 = vsel %vm250, %v6078, 0.0
  %6091 = vadd.xlane.f32.xlu0 %v6090
  %v6092 = vpop.xlane.xlu0 %6091
  %v6093 = vsel %vm250, %v6079, 0.0
  %6094 = vadd.xlane.f32.xlu0 %v6093
  %v6095 = vpop.xlane.xlu0 %6094
  %v6096 = vsel %vm250, %v6080, 0.0
  %6097 = vadd.xlane.f32.xlu0 %v6096
  %v6098 = vpop.xlane.xlu0 %6097
  %v6099 = vsel %vm250, %v6081, 0.0
  %6100 = vadd.xlane.f32.xlu0 %v6099
  %v6101 = vpop.xlane.xlu0 %6100
  %v6102 = vsel %vm250, %v6082, 0.0
  %6103 = vadd.xlane.f32.xlu0 %v6102
  %v6104 = vpop.xlane.xlu0 %6103
  %v6105 = vsel %vm250, %v6083, 0.0
  %6106 = vadd.xlane.f32.xlu0 %v6105
  %v6107 = vpop.xlane.xlu0 %6106
  %v6108 = vmul.f32 %v6086, %v275
  %v6109 = vmul.f32 %v6089, %v275
  %v6110 = vmul.f32 %v6092, %v275
  %v6111 = vmul.f32 %v6095, %v275
  %v6112 = vmul.f32 %v6098, %v275
  %v6113 = vmul.f32 %v6101, %v275
  %v6114 = vmul.f32 %v6104, %v275
  %v6115 = vmul.f32 %v6107, %v275
  %v6116 = vadd.f32 %v6108, 1e-05
  %v6117 = vadd.f32 %v6109, 1e-05
  %v6118 = vadd.f32 %v6110, 1e-05
  %v6119 = vadd.f32 %v6111, 1e-05
  %v6120 = vadd.f32 %v6112, 1e-05
  %v6121 = vadd.f32 %v6113, 1e-05
  %v6122 = vadd.f32 %v6114, 1e-05
  %v6123 = vadd.f32 %v6115, 1e-05
  %v6124 = vrsqrt.pop %v6116
  %v6125 = vrsqrt.pop %v6117
  %v6126 = vrsqrt.pop %v6118
  %v6127 = vrsqrt.pop %v6119
  %v6128 = vrsqrt.pop %v6120
  %v6129 = vrsqrt.pop %v6121
  %v6130 = vrsqrt.pop %v6122
  %v6131 = vrsqrt.pop %v6123
  %v6132 = vmul.f32 %v6068, %v6124
  %v6133 = vmul.f32 %v6069, %v6125
  %v6134 = vmul.f32 %v6070, %v6126
  %v6135 = vmul.f32 %v6071, %v6127
  %v6136 = vmul.f32 %v6072, %v6128
  %v6137 = vmul.f32 %v6073, %v6129
  %v6138 = vmul.f32 %v6074, %v6130
  %v6139 = vmul.f32 %v6075, %v6131
  %v6140 = vlaneseq
  %v6141 = vshrl.u32 %v6140, 7
  %v6142 = vsub.s32 0, %v6141
  %v6143 = vrot.slane %v6034, %v6142
  %v6144 = vmul.f32 %v6132, %v6143
  %v6145 = vmul.f32 %v6133, %v6143
  %v6146 = vmul.f32 %v6134, %v6143
  %v6147 = vmul.f32 %v6135, %v6143
  %v6148 = vmul.f32 %v6136, %v6143
  %v6149 = vmul.f32 %v6137, %v6143
  %v6150 = vmul.f32 %v6138, %v6143
  %v6151 = vmul.f32 %v6139, %v6143
  %v6152 = vlaneseq
  %v6153 = vshrl.u32 %v6152, 7
  %v6154 = vsub.s32 0, %v6153
  %v6155 = vrot.slane %v6035, %v6154
  %v6156 = vadd.f32 %v6144, %v6155
  %v6157 = vadd.f32 %v6145, %v6155
  %v6158 = vadd.f32 %v6146, %v6155
  %v6159 = vadd.f32 %v6147, %v6155
  %v6160 = vadd.f32 %v6148, %v6155
  %v6161 = vadd.f32 %v6149, %v6155
  %v6162 = vadd.f32 %v6150, %v6155
  %v6163 = vadd.f32 %v6151, %v6155
  %s6164 = scalar_lea.vmem %s5, 80
  %v6165 = vld [vmem:[%s6164] sm:$0xff]
  %v6166 = vld [vmem:[%s6164 + $0x8] sm:$0xff]
  %v6167 = vld [vmem:[%s6164 + $0x10] sm:$0xff]
  %v6168 = vld [vmem:[%s6164 + $0x18] sm:$0xff]
  %v6169 = vld [vmem:[%s6164 + $0x20] sm:$0x1]
  %v6170 = vlaneseq
  %v6171 = vshrl.u32 %v6170, 7
  %v6172 = vsub.s32 0, %v6171
  %v6173 = vrot.slane %v6169, %v6172
  %v6175 = vsel %vm250, %v6156, 0
  %v6178 = vsel %vm250, %v6157, 0
  %v6181 = vsel %vm250, %v6158, 0
  %v6184 = vsel %vm250, %v6159, 0
  %v6187 = vsel %vm250, %v6160, 0
  %v6190 = vsel %vm250, %v6161, 0
  %v6193 = vsel %vm250, %v6162, 0
  %v6196 = vsel %vm250, %v6163, 0
  %6198 = vmatprep.subr.mxu0 0.0
  %6199 = vmatpush1.msra.mxu0 %v6165
  %6200 = vmatprep.subr.mxu0 0.0
  %6201 = vmatpush1.msra.mxu0 %v6166
  %6202 = vmatprep.subr.mxu0 0.0
  %6203 = vmatpush1.msra.mxu0 %v6167
  %6204 = vmatprep.subr.mxu0 0.0
  %6205 = vmatpush1.msra.mxu0 %v6168
  %6206 = vmatprep.subr.mxu0 0.0
  %6207 = vmatpush1.msra.mxu0 0.0
  %6208 = vmatprep.subr.mxu0 0.0
  %6209 = vmatpush1.msra.mxu0 0.0
  %6210 = vmatprep.subr.mxu0 0.0
  %6211 = vmatpush1.msra.mxu0 0.0
  %6212 = vmatprep.subr.mxu0 0.0
  %6213 = vmatpush1.msra.mxu0 0.0
  %6214 = vmatprep.subr.mxu0 0.0
  %6215 = vmatpush1.msra.mxu0 0.0
  %6216 = vmatprep.subr.mxu0 0.0
  %6217 = vmatpush1.msra.mxu0 0.0
  %6218 = vmatprep.subr.mxu0 0.0
  %6219 = vmatpush1.msra.mxu0 0.0
  %6220 = vmatprep.subr.mxu0 0.0
  %6221 = vmatpush1.msra.mxu0 0.0
  %6222 = vmatprep.subr.mxu0 0.0
  %6223 = vmatpush1.msra.mxu0 0.0
  %6224 = vmatprep.subr.mxu0 0.0
  %6225 = vmatpush1.msra.mxu0 0.0
  %6226 = vmatprep.subr.mxu0 0.0
  %6227 = vmatpush1.msra.mxu0 0.0
  %6228 = vmatprep.subr.mxu0 0.0
  %6229 = vmatpush1.msra.mxu0 0.0
  %6230 = vmatprep.subr.mxu0 0.0
  %6231 = vmatpush1.msra.mxu0 0.0
  %6232 = vmatprep.subr.mxu0 0.0
  %6233 = vmatpush1.msra.mxu0 0.0
  %6234 = vmatprep.subr.mxu0 0.0
  %6235 = vmatpush1.msra.mxu0 0.0
  %6236 = vmatprep.subr.mxu0 0.0
  %6237 = vmatpush1.msra.mxu0 0.0
  %6238 = vmatprep.subr.mxu0 0.0
  %6239 = vmatpush1.msra.mxu0 0.0
  %6240 = vmatprep.subr.mxu0 0.0
  %6241 = vmatpush1.msra.mxu0 0.0
  %6242 = vmatprep.subr.mxu0 0.0
  %6243 = vmatpush1.msra.mxu0 0.0
  %6244 = vmatprep.subr.mxu0 0.0
  %6245 = vmatpush1.msra.mxu0 0.0
  %6246 = vmatprep.subr.mxu0 0.0
  %6247 = vmatpush1.msra.mxu0 0.0
  %6248 = vmatprep.subr.mxu0 0.0
  %6249 = vmatpush1.msra.mxu0 0.0
  %6250 = vmatprep.subr.mxu0 0.0
  %6251 = vmatpush1.msra.mxu0 0.0
  %6252 = vmatprep.subr.mxu0 0.0
  %6253 = vmatpush1.msra.mxu0 0.0
  %6254 = vmatprep.subr.mxu0 0.0
  %6255 = vmatpush1.msra.mxu0 0.0
  %6256 = vmatprep.subr.mxu0 0.0
  %6257 = vmatpush1.msra.mxu0 0.0
  %6258 = vmatprep.subr.mxu0 0.0
  %6259 = vmatpush1.msra.mxu0 0.0
  %6260 = vmatprep.subr.mxu0 0.0
  %6261 = vmatpush1.msra.mxu0 0.0
  %6262 = vmatprep.mubr.f32.mxu0 0.0
  %6263 = vmatmul.mubr.f32.gmra.mrb[0].mxu0 %v6175
  %v6264 = vpop.f32.mrb[0].mxu0
  %v6265 = vadd.f32 %v6173, %v6264
  %v6266 = vpop.f32.mrb[0].mxu0
  %6267 = vmatprep.mubr.f32.mxu0 0.0
  %6268 = vmatmul.mubr.f32.gmra.mrb[0].mxu0 %v6178
  %v6269 = vpop.f32.mrb[0].mxu0
  %v6270 = vadd.f32 %v6173, %v6269
  %v6271 = vpop.f32.mrb[0].mxu0
  %6272 = vmatprep.mubr.f32.mxu0 0.0
  %6273 = vmatmul.mubr.f32.gmra.mrb[0].mxu0 %v6181
  %v6274 = vpop.f32.mrb[0].mxu0
  %v6275 = vadd.f32 %v6173, %v6274
  %v6276 = vpop.f32.mrb[0].mxu0
  %6277 = vmatprep.mubr.f32.mxu0 0.0
  %6278 = vmatmul.mubr.f32.gmra.mrb[0].mxu0 %v6184
  %v6279 = vpop.f32.mrb[0].mxu0
  %v6280 = vadd.f32 %v6173, %v6279
  %v6281 = vpop.f32.mrb[0].mxu0
  %6282 = vmatprep.mubr.f32.mxu0 0.0
  %6283 = vmatmul.mubr.f32.gmra.mrb[0].mxu0 %v6187
  %v6284 = vpop.f32.mrb[0].mxu0
  %v6285 = vadd.f32 %v6173, %v6284
  %v6286 = vpop.f32.mrb[0].mxu0
  %6287 = vmatprep.mubr.f32.mxu0 0.0
  %6288 = vmatmul.mubr.f32.gmra.mrb[0].mxu0 %v6190
  %v6289 = vpop.f32.mrb[0].mxu0
  %v6290 = vadd.f32 %v6173, %v6289
  %v6291 = vpop.f32.mrb[0].mxu0
  %6292 = vmatprep.mubr.f32.mxu0 0.0
  %6293 = vmatmul.mubr.f32.gmra.mrb[0].mxu0 %v6193
  %v6294 = vpop.f32.mrb[0].mxu0
  %v6295 = vadd.f32 %v6173, %v6294
  %v6296 = vpop.f32.mrb[0].mxu0
  %6297 = vmatprep.mubr.f32.mxu0 0.0
  %6298 = vmatmul.mubr.f32.gmra.mrb[0].mxu0 %v6196
  %v6299 = vpop.f32.mrb[0].mxu0
  %v6300 = vadd.f32 %v6173, %v6299
  %v6301 = vpop.f32.mrb[0].mxu0
  %6302 = vdwg.mxu0
  %vm6303 = vcmask 31744
  %v6304 = vsel %vm6303, %v6265, -inf
  %6305 = vmax.xlane.f32.xlu0 %v6304
  %v6306 = vpop.xlane.xlu0 %6305
  %v6307 = vsel %vm6303, %v6270, -inf
  %6308 = vmax.xlane.f32.xlu0 %v6307
  %v6309 = vpop.xlane.xlu0 %6308
  %v6310 = vsel %vm6303, %v6275, -inf
  %6311 = vmax.xlane.f32.xlu0 %v6310
  %v6312 = vpop.xlane.xlu0 %6311
  %v6313 = vsel %vm6303, %v6280, -inf
  %6314 = vmax.xlane.f32.xlu0 %v6313
  %v6315 = vpop.xlane.xlu0 %6314
  %v6316 = vsel %vm6303, %v6285, -inf
  %6317 = vmax.xlane.f32.xlu0 %v6316
  %v6318 = vpop.xlane.xlu0 %6317
  %v6319 = vsel %vm6303, %v6290, -inf
  %6320 = vmax.xlane.f32.xlu0 %v6319
  %v6321 = vpop.xlane.xlu0 %6320
  %v6322 = vsel %vm6303, %v6295, -inf
  %6323 = vmax.xlane.f32.xlu0 %v6322
  %v6324 = vpop.xlane.xlu0 %6323
  %v6325 = vsel %vm6303, %v6300, -inf
  %6326 = vmax.xlane.f32.xlu0 %v6325
  %v6327 = vpop.xlane.xlu0 %6326
  %v6328 = vsub.f32 %v6265, %v6306
  %v6329 = vsub.f32 %v6270, %v6309
  %v6330 = vsub.f32 %v6275, %v6312
  %v6331 = vsub.f32 %v6280, %v6315
  %v6332 = vsub.f32 %v6285, %v6318
  %v6333 = vsub.f32 %v6290, %v6321
  %v6334 = vsub.f32 %v6295, %v6324
  %v6335 = vsub.f32 %v6300, %v6327
  %v6336 = vmul.f32 %v6328, 1.442695
  %v6337 = vpow.pop %v6336
  %v6338 = vmul.f32 %v6329, 1.442695
  %v6339 = vpow.pop %v6338
  %v6340 = vmul.f32 %v6330, 1.442695
  %v6341 = vpow.pop %v6340
  %v6342 = vmul.f32 %v6331, 1.442695
  %v6343 = vpow.pop %v6342
  %v6344 = vmul.f32 %v6332, 1.442695
  %v6345 = vpow.pop %v6344
  %v6346 = vmul.f32 %v6333, 1.442695
  %v6347 = vpow.pop %v6346
  %v6348 = vmul.f32 %v6334, 1.442695
  %v6349 = vpow.pop %v6348
  %v6350 = vmul.f32 %v6335, 1.442695
  %v6351 = vpow.pop %v6350
  %6360 = vrot.lane.b32.xlu0 %v6265, 124
  %v6361 = vpop.permute.xlu0 %6360
  %6362 = vrot.lane.b32.xlu0 %v6270, 124
  %v6363 = vpop.permute.xlu0 %6362
  %6364 = vrot.lane.b32.xlu0 %v6275, 124
  %v6365 = vpop.permute.xlu0 %6364
  %6366 = vrot.lane.b32.xlu0 %v6280, 124
  %v6367 = vpop.permute.xlu0 %6366
  %6368 = vrot.lane.b32.xlu0 %v6285, 124
  %v6369 = vpop.permute.xlu0 %6368
  %6370 = vrot.lane.b32.xlu0 %v6290, 124
  %v6371 = vpop.permute.xlu0 %6370
  %6372 = vrot.lane.b32.xlu0 %v6295, 124
  %v6373 = vpop.permute.xlu0 %6372
  %6374 = vrot.lane.b32.xlu0 %v6300, 124
  %v6375 = vpop.permute.xlu0 %6374
  %v6384 = vmul.f32 %v6337, %v6361
  %v6385 = vmul.f32 %v6339, %v6363
  %v6386 = vmul.f32 %v6341, %v6365
  %v6387 = vmul.f32 %v6343, %v6367
  %v6388 = vmul.f32 %v6345, %v6369
  %v6389 = vmul.f32 %v6347, %v6371
  %v6390 = vmul.f32 %v6349, %v6373
  %v6391 = vmul.f32 %v6351, %v6375
  %v6392 = vsel %vm6303, %v6384, 0.0
  %6393 = vadd.xlane.f32.xlu0 %v6392
  %v6394 = vpop.xlane.xlu0 %6393
  %v6395 = vsel %vm6303, %v6385, 0.0
  %6396 = vadd.xlane.f32.xlu0 %v6395
  %v6397 = vpop.xlane.xlu0 %6396
  %v6398 = vsel %vm6303, %v6386, 0.0
  %6399 = vadd.xlane.f32.xlu0 %v6398
  %v6400 = vpop.xlane.xlu0 %6399
  %v6401 = vsel %vm6303, %v6387, 0.0
  %6402 = vadd.xlane.f32.xlu0 %v6401
  %v6403 = vpop.xlane.xlu0 %6402
  %v6404 = vsel %vm6303, %v6388, 0.0
  %6405 = vadd.xlane.f32.xlu0 %v6404
  %v6406 = vpop.xlane.xlu0 %6405
  %v6407 = vsel %vm6303, %v6389, 0.0
  %6408 = vadd.xlane.f32.xlu0 %v6407
  %v6409 = vpop.xlane.xlu0 %6408
  %v6410 = vsel %vm6303, %v6390, 0.0
  %6411 = vadd.xlane.f32.xlu0 %v6410
  %v6412 = vpop.xlane.xlu0 %6411
  %v6413 = vsel %vm6303, %v6391, 0.0
  %6414 = vadd.xlane.f32.xlu0 %v6413
  %v6415 = vpop.xlane.xlu0 %6414
  %v6416 = vsel %vm6303, %v6337, 0.0
  %6417 = vadd.xlane.f32.xlu0 %v6416
  %v6418 = vpop.xlane.xlu0 %6417
  %v6419 = vsel %vm6303, %v6339, 0.0
  %6420 = vadd.xlane.f32.xlu0 %v6419
  %v6421 = vpop.xlane.xlu0 %6420
  %v6422 = vsel %vm6303, %v6341, 0.0
  %6423 = vadd.xlane.f32.xlu0 %v6422
  %v6424 = vpop.xlane.xlu0 %6423
  %v6425 = vsel %vm6303, %v6343, 0.0
  %6426 = vadd.xlane.f32.xlu0 %v6425
  %v6427 = vpop.xlane.xlu0 %6426
  %v6428 = vsel %vm6303, %v6345, 0.0
  %6429 = vadd.xlane.f32.xlu0 %v6428
  %v6430 = vpop.xlane.xlu0 %6429
  %v6431 = vsel %vm6303, %v6347, 0.0
  %6432 = vadd.xlane.f32.xlu0 %v6431
  %v6433 = vpop.xlane.xlu0 %6432
  %v6434 = vsel %vm6303, %v6349, 0.0
  %6435 = vadd.xlane.f32.xlu0 %v6434
  %v6436 = vpop.xlane.xlu0 %6435
  %v6437 = vsel %vm6303, %v6351, 0.0
  %6438 = vadd.xlane.f32.xlu0 %v6437
  %v6439 = vpop.xlane.xlu0 %6438
  %v6440 = vrcp.pop %v6418
  %v6441 = vrcp.pop %v6421
  %v6442 = vrcp.pop %v6424
  %v6443 = vrcp.pop %v6427
  %v6444 = vrcp.pop %v6430
  %v6445 = vrcp.pop %v6433
  %v6446 = vrcp.pop %v6436
  %v6447 = vrcp.pop %v6439
  %v6448 = vmul.f32 %v6394, %v6440
  %v6449 = vmul.f32 %v6397, %v6441
  %v6450 = vmul.f32 %v6400, %v6442
  %v6451 = vmul.f32 %v6403, %v6443
  %v6452 = vmul.f32 %v6406, %v6444
  %v6453 = vmul.f32 %v6409, %v6445
  %v6454 = vmul.f32 %v6412, %v6446
  %v6455 = vmul.f32 %v6415, %v6447
  %v6456 = vxor.u32 %v6448, 2147483648
  %v6457 = vxor.u32 %v6449, 2147483648
  %v6458 = vxor.u32 %v6450, 2147483648
  %v6459 = vxor.u32 %v6451, 2147483648
  %v6460 = vxor.u32 %v6452, 2147483648
  %v6461 = vxor.u32 %v6453, 2147483648
  %v6462 = vxor.u32 %v6454, 2147483648
  %v6463 = vxor.u32 %v6455, 2147483648
  %v6464 = vmul.f32 %v6456, 1.442695
  %v6465 = vpow.pop %v6464
  %v6466 = vmul.f32 %v6457, 1.442695
  %v6467 = vpow.pop %v6466
  %v6468 = vmul.f32 %v6458, 1.442695
  %v6469 = vpow.pop %v6468
  %v6470 = vmul.f32 %v6459, 1.442695
  %v6471 = vpow.pop %v6470
  %v6472 = vmul.f32 %v6460, 1.442695
  %v6473 = vpow.pop %v6472
  %v6474 = vmul.f32 %v6461, 1.442695
  %v6475 = vpow.pop %v6474
  %v6476 = vmul.f32 %v6462, 1.442695
  %v6477 = vpow.pop %v6476
  %v6478 = vmul.f32 %v6463, 1.442695
  %v6479 = vpow.pop %v6478
  %v6480 = vadd.f32 %v6465, 1.0
  %v6481 = vadd.f32 %v6467, 1.0
  %v6482 = vadd.f32 %v6469, 1.0
  %v6483 = vadd.f32 %v6471, 1.0
  %v6484 = vadd.f32 %v6473, 1.0
  %v6485 = vadd.f32 %v6475, 1.0
  %v6486 = vadd.f32 %v6477, 1.0
  %v6487 = vadd.f32 %v6479, 1.0
  %v6488 = vrcp.pop %v6480
  %v6489 = vmul.f32 1.0, %v6488
  %v6490 = vrcp.pop %v6481
  %v6491 = vmul.f32 1.0, %v6490
  %v6492 = vrcp.pop %v6482
  %v6493 = vmul.f32 1.0, %v6492
  %v6494 = vrcp.pop %v6483
  %v6495 = vmul.f32 1.0, %v6494
  %v6496 = vrcp.pop %v6484
  %v6497 = vmul.f32 1.0, %v6496
  %v6498 = vrcp.pop %v6485
  %v6499 = vmul.f32 1.0, %v6498
  %v6500 = vrcp.pop %v6486
  %v6501 = vmul.f32 1.0, %v6500
  %v6502 = vrcp.pop %v6487
  %v6503 = vmul.f32 1.0, %v6502
  %6504 = vst [vmem:[%s6] sm:$0xff] %v6489
  %6505 = vst [vmem:[%s6 + $0x8] sm:$0xff] %v6491
  %6506 = vst [vmem:[%s6 + $0x10] sm:$0xff] %v6493
  %6507 = vst [vmem:[%s6 + $0x18] sm:$0xff] %v6495
  %6508 = vst [vmem:[%s6 + $0x20] sm:$0xff] %v6497
  %6509 = vst [vmem:[%s6 + $0x28] sm:$0xff] %v6499
  %6510 = vst [vmem:[%s6 + $0x30] sm:$0xff] %v6501
  %6511 = vst [vmem:[%s6 + $0x38] sm:$0xff] %v6503
  // Predicated region
  $region26: #{forward.1} parent=0 // pred_check
    _
  $region27: #{forward.1} parent=0 // pred_check_branch
    %6513 = sbr.rel (0) target = $region29
  $region28: #{forward.1} parent=0 // pred_region
    _
  $region29: #{forward.1} parent=0 // pred_fallthru
    _
  // Predicated region
  $region30: #{forward.1} parent=0 // pred_check
    _
  $region31: #{forward.1} parent=0 // pred_check_branch
    %6515 = sbr.rel (0) target = $region33
  $region32: #{forward.1} parent=0 // pred_region
    _
  $region33: #{forward.1} parent=0 // pred_fallthru
    _

</llo_original>
